<compile_context>
chip_gen: v7x
topology: tpu7x:2x2x1
jax: 0.10.0
libtpu: 0.0.40
codegen_flags: <defaults>
</compile_context>

<pallas_src>
import math

import jax
import jax.numpy as jnp
from jax import lax
from jax.experimental import pallas as pl
from jax.experimental.pallas import tpu as pltpu

PRIMITIVES = [
    "none", "max_pool_3x3", "avg_pool_3x3", "skip_connect",
    "sep_conv_3x3", "sep_conv_5x5", "dil_conv_3x3", "dil_conv_5x5",
]
BN_EPS = 1e-5
PAD = 128                                    # per-row lane halo (>= 4*W + 4, aligned)
_NEG = float(jnp.finfo(jnp.float32).min)     # max-pool pad value (finite, no -inf math)


# ----------------------------------------------------------------------------
# DecayScheduler (pure python, ported verbatim semantics)
# ----------------------------------------------------------------------------
class DecayScheduler(object):
    def __init__(self, base_lr=1.0, last_iter=-1, T_max=50, T_start=0, T_stop=50,
                 decay_type="cosine"):
        self.base_lr = base_lr
        self.T_max = T_max
        self.T_start = T_start
        self.T_stop = T_stop
        self.cnt = 0
        self.decay_type = decay_type
        self.decay_rate = 1.0

    def step(self, epoch):
        if epoch >= self.T_start:
            if self.decay_type == "cosine":
                self.decay_rate = (self.base_lr *
                                   (1 + math.cos(math.pi * epoch / (self.T_max - self.T_start))) / 2.0
                                   if epoch <= self.T_stop else self.decay_rate)
            elif self.decay_type == "slow_cosine":
                self.decay_rate = (self.base_lr *
                                   math.cos((math.pi / 2) * epoch / (self.T_max - self.T_start))
                                   if epoch <= self.T_stop else self.decay_rate)
            elif self.decay_type == "linear":
                self.decay_rate = (self.base_lr * (self.T_max - epoch) / (self.T_max - self.T_start)
                                   if epoch <= self.T_stop else self.decay_rate)
            else:
                self.decay_rate = self.base_lr
        else:
            self.decay_rate = self.base_lr


beta_decay_scheduler = DecayScheduler(base_lr=1, T_max=50, T_start=0, T_stop=50,
                                      decay_type="linear")


# ----------------------------------------------------------------------------
# Fused MixedOp Pallas kernel
# ----------------------------------------------------------------------------
def _build_mixed_op_kernel(N, C, H, W):
    R = C * N                     # rows: batch folded into the sublane axis
    HW = H * W                    # lanes per image
    inv_total = 1.0 / float(N * H * W)

    def kernel(mixw_ref, xslab_ref, hw_ref, chan_ref,
               dw31_ref, pw31_ref, dw32_ref, pw32_ref,
               dw51_ref, pw51_ref, dw52_ref, pw52_ref,
               dwd3_ref, pwd3_ref, dwd5_ref, pwd5_ref,
               o_ref, rbuf_ref, s3buf_ref, s5buf_ref):
        # Hoisted integer index planes (full (R, HW) shape so all masks are native
        # full-shape compares; no i1 sublane-broadcast needed).  hw is supplied by
        # the host (2 KB) to avoid relying on vector integer div/mod lowering.
        hrow = jnp.broadcast_to(hw_ref[0:1, :], (R, HW))
        wcol = jnp.broadcast_to(hw_ref[1:2, :], (R, HW))
        chan = chan_ref[...]                       # (R, R) channel-aggregation matrix

        def offsets(K, dil):
            p = dil * (K - 1) // 2
            return [(a * dil - p, b * dil - p) for a in range(K) for b in range(K)]

        def tap(slab_ref, dy, dx):
            s = PAD + dy * W + dx                  # static lane offset
            return slab_ref[:, s:s + HW]           # (R, HW)

        def dx_mask(dx):
            # horizontal wrap mask only (vertical shifts fall into the zero halo)
            if dx == 0:
                return None
            return (wcol >= -dx) if dx < 0 else (wcol < W - dx)

        def full_mask(dy, dx):
            conds = []
            if dy < 0:
                conds.append(hrow >= -dy)
            if dy > 0:
                conds.append(hrow < H - dy)
            m = dx_mask(dx)
            if m is not None:
                conds.append(m)
            if not conds:
                return None
            ok = conds[0]
            for c in conds[1:]:
                ok = jnp.logical_and(ok, c)
            return ok

        def batchnorm(z):
            # Single-pass BN (affine=False, batch stats).  chan @ z sums the N rows
            # belonging to the same channel (MXU); lane reduce finishes the stat.
            cs1 = jnp.dot(chan, z, preferred_element_type=jnp.float32)
            cs2 = jnp.dot(chan, z * z, preferred_element_type=jnp.float32)
            mean = jnp.sum(cs1, axis=1, keepdims=True) * inv_total      # (R, 1)
            ex2 = jnp.sum(cs2, axis=1, keepdims=True) * inv_total
            var = ex2 - mean * mean
            return (z - mean) * lax.rsqrt(var + BN_EPS)

        def dwconv(slab_ref, dwe_ref, K, dil):
            offs = offsets(K, dil)
            # per-branch masks only (bounded live ranges); one compare per distinct dx
            masks = {d: dx_mask(d) for d in sorted({b for (_, b) in offs})}
            acc = None
            for k, (dy, dx) in enumerate(offs):
                t = tap(slab_ref, dy, dx)
                m = masks[dx]
                if m is not None:
                    t = jnp.where(m, t, 0.0)
                term = t * dwe_ref[:, k:k + 1]
                acc = term if acc is None else acc + term
            return acc

        def conv_branch(slab_ref, dwe_ref, pwe_ref, K, dil):
            y = dwconv(slab_ref, dwe_ref, K, dil)
            z = jnp.dot(pwe_ref[...], y, preferred_element_type=jnp.float32)  # MXU 1x1
            return batchnorm(z)

        def pools():
            # max_pool_3x3 (pads behave as -inf) and avg_pool_3x3
            # (count_include_pad=False), each followed by BatchNorm(affine=False).
            mx = sm = cnt = None
            for (dy, dx) in offsets(3, 1):
                t = tap(xslab_ref, dy, dx)
                ok = full_mask(dy, dx)
                if ok is None:                     # center tap, always valid
                    mx_c, sm_c = t, t
                    cnt_c = jnp.full((R, HW), 1.0, jnp.float32)
                else:
                    mx_c = jnp.where(ok, t, _NEG)
                    sm_c = jnp.where(ok, t, 0.0)
                    cnt_c = jnp.where(ok, 1.0, 0.0)
                mx = mx_c if mx is None else jnp.maximum(mx, mx_c)
                sm = sm_c if sm is None else sm + sm_c
                cnt = cnt_c if cnt is None else cnt + cnt_c
            avg = sm * pl.reciprocal(cnt, approx=True)
            return batchnorm(mx), batchnorm(avg)

        # ---- identity + auxiliary skip (merged weight = w[skip] + decay_rate) ----
        x_center = xslab_ref[:, PAD:PAD + HW]
        res = mixw_ref[2] * x_center

        # ---- pooling ops ---------------------------------------------------------
        mx_bn, avg_bn = pools()
        res = res + mixw_ref[0] * mx_bn + mixw_ref[1] * avg_bn

        # ---- ReLU(x) slab shared by every conv branch's first dw stage ------------
        rbuf_ref[...] = jnp.maximum(xslab_ref[...], 0.0)   # halo stays zero

        # ---- dilated separable convs (one dw+pw+BN stage each) --------------------
        res = res + mixw_ref[5] * conv_branch(rbuf_ref, dwd3_ref, pwd3_ref, 3, 2)
        res = res + mixw_ref[6] * conv_branch(rbuf_ref, dwd5_ref, pwd5_ref, 5, 2)

        # ---- separable convs, stage 1 (read ReLU(x) from rbuf) --------------------
        s31 = conv_branch(rbuf_ref, dw31_ref, pw31_ref, 3, 1)
        s51 = conv_branch(rbuf_ref, dw51_ref, pw51_ref, 5, 1)

        # ---- separable convs, stage 2 — dedicated slabs, no WAR on rbuf -----------
        halo = jnp.zeros((R, PAD), jnp.float32)
        s3buf_ref[:, :PAD] = halo
        s3buf_ref[:, PAD + HW:] = halo
        s3buf_ref[:, PAD:PAD + HW] = jnp.maximum(s31, 0.0)
        s5buf_ref[:, :PAD] = halo
        s5buf_ref[:, PAD + HW:] = halo
        s5buf_ref[:, PAD:PAD + HW] = jnp.maximum(s51, 0.0)

        res = res + mixw_ref[3] * conv_branch(s3buf_ref, dw32_ref, pw32_ref, 3, 1)
        res = res + mixw_ref[4] * conv_branch(s5buf_ref, dw52_ref, pw52_ref, 5, 1)

        o_ref[...] = res

    return kernel


def mixed_op_forward(x, weights, params, decay_rate):
    """MixedOp.forward: res = sum_i w_i * op_i(x) + Identity(x) * decay_rate."""
    N, C, H, W = x.shape
    R, HW = C * N, H * W
    assert 4 * W + 4 <= PAD, "lane halo too small for dil_conv_5x5"
    slab_w = HW + 2 * PAD

    # (C*N, HW) channel-major rows (row = c*N + n), zero halo on the lane axis
    x_cm = jnp.transpose(x, (1, 0, 2, 3)).reshape(R, HW).astype(jnp.float32)
    xslab = jnp.pad(x_cm, ((0, 0), (PAD, PAD)))

    # per-lane (h, w) indices inside one image (data independent, 2 KB)
    idx = jnp.arange(HW, dtype=jnp.int32)
    hw = jnp.stack([idx // W, idx % W], axis=0)

    # channel-aggregation matrix: chanM[c*N+n, c'*N+n'] = (c == c')
    chanM = jnp.kron(jnp.eye(C, dtype=jnp.float32), jnp.ones((N, N), jnp.float32))
    eyeN = jnp.eye(N, dtype=jnp.float32)

    def dwe(w):   # (C,1,K,K) -> (C*N, K*K): per-row depthwise taps
        return jnp.repeat(w.reshape(C, -1).astype(jnp.float32), N, axis=0)

    def pwe(w):   # (C,C,1,1) -> (C*N, C*N) = kron(W, I_N) for the folded layout
        return jnp.kron(w.reshape(C, C).astype(jnp.float32), eyeN)

    # Mixing weights: 'none' dropped, skip_connect merged with the auxiliary
    # Identity.  Order: [max, avg, skip+aux, sep3, sep5, dil3, dil5].
    mixw = jnp.stack([
        weights[1], weights[2], weights[3] + decay_rate,
        weights[4], weights[5], weights[6], weights[7],
    ]).astype(jnp.float32)

    args = (
        mixw, xslab, hw, chanM,
        dwe(params["sep3"]["dw1"]), pwe(params["sep3"]["pw1"]),
        dwe(params["sep3"]["dw2"]), pwe(params["sep3"]["pw2"]),
        dwe(params["sep5"]["dw1"]), pwe(params["sep5"]["pw1"]),
        dwe(params["sep5"]["dw2"]), pwe(params["sep5"]["pw2"]),
        dwe(params["dil3"]["dw"]), pwe(params["dil3"]["pw"]),
        dwe(params["dil5"]["dw"]), pwe(params["dil5"]["pw"]),
    )

    in_specs = (
        [pl.BlockSpec(memory_space=pltpu.MemorySpace.SMEM)] +
        [pl.BlockSpec(memory_space=pltpu.MemorySpace.VMEM)] * (len(args) - 1)
    )

    # Right-sized VMEM request (review: never hardcode 64 MiB; v7x physical = 64 MiB)
    f32b = 4
    in_bytes = (7 * f32b + R * slab_w * f32b + 2 * HW * 4 + R * R * f32b +
                f32b * (2 * R * 9 + 2 * R * 25 + R * 9 + R * 25 + 6 * R * R))
    out_bytes = R * HW * f32b
    scratch_bytes = 3 * R * slab_w * f32b
    need = in_bytes + out_bytes + scratch_bytes
    vmem_limit = int(min(32 * 1024 * 1024, max(4 * 1024 * 1024, 4 * need)))

    # Advisory cost estimate
    n_taps = 2 * 9 + 2 * 25 + 9 + 25
    flops = int((2 * n_taps + 2 * 2 * 9) * R * HW          # dw taps + pools
                + (6 + 16) * 2 * R * R * HW                 # pointwise + BN-stat MXU
                + (8 * 6 + 20) * R * HW)                    # BN elementwise + mix
    transcendentals = int(8 * R + R * HW)
    bytes_accessed = int(in_bytes + out_bytes)

    kernel = _build_mixed_op_kernel(N, C, H, W)
    out_cm = pl.pallas_call(
        kernel,
        out_shape=jax.ShapeDtypeStruct((R, HW), jnp.float32),
        in_specs=in_specs,
        out_specs=pl.BlockSpec(memory_space=pltpu.MemorySpace.VMEM),
        scratch_shapes=[
            pltpu.VMEM((R, slab_w), jnp.float32),   # ReLU(x) slab
            pltpu.VMEM((R, slab_w), jnp.float32),   # sep3 stage-2 input slab
            pltpu.VMEM((R, slab_w), jnp.float32),   # sep5 stage-2 input slab
        ],
        compiler_params=pltpu.CompilerParams(vmem_limit_bytes=vmem_limit),
        cost_estimate=pl.CostEstimate(flops=flops, transcendentals=transcendentals,
                                      bytes_accessed=bytes_accessed),
    )(*args)
    return jnp.transpose(out_cm.reshape(C, N, H, W), (1, 0, 2, 3))


# ----------------------------------------------------------------------------
# Pure-JAX reference (for correctness check only)
# ----------------------------------------------------------------------------
def _ref_bn(x):
    mean = jnp.mean(x, axis=(0, 2, 3), keepdims=True)
    var = jnp.mean((x - mean) ** 2, axis=(0, 2, 3), keepdims=True)
    return (x - mean) / jnp.sqrt(var + BN_EPS)


def _ref_dwconv(x, w, padding, dilation):
    C = x.shape[1]
    return lax.conv_general_dilated(
        x, w, window_strides=(1, 1), padding=[(padding, padding)] * 2,
        rhs_dilation=(dilation, dilation), feature_group_count=C,
        dimension_numbers=("NCHW", "OIHW", "NCHW"), precision=lax.Precision.HIGHEST)


def _ref_pwconv(x, w):
    return lax.conv_general_dilated(
        x, w, window_strides=(1, 1), padding=[(0, 0)] * 2,
        dimension_numbers=("NCHW", "OIHW", "NCHW"), precision=lax.Precision.HIGHEST)


def _ref_sepconv(x, p, pad):
    y = _ref_bn(_ref_pwconv(_ref_dwconv(jax.nn.relu(x), p["dw1"], pad, 1), p["pw1"]))
    return _ref_bn(_ref_pwconv(_ref_dwconv(jax.nn.relu(y), p["dw2"], pad, 1), p["pw2"]))


def _ref_dilconv(x, p, pad, dil):
    return _ref_bn(_ref_pwconv(_ref_dwconv(jax.nn.relu(x), p["dw"], pad, dil), p["pw"]))


def _ref_maxpool(x):
    return lax.reduce_window(x, -jnp.inf, lax.max, (1, 1, 3, 3), (1, 1, 1, 1),
                             [(0, 0), (0, 0), (1, 1), (1, 1)])


def _ref_avgpool(x):
    dims, strides, pad = (1, 1, 3, 3), (1, 1, 1, 1), [(0, 0), (0, 0), (1, 1), (1, 1)]
    s = lax.reduce_window(x, 0.0, lax.add, dims, strides, pad)
    cnt = lax.reduce_window(jnp.ones_like(x), 0.0, lax.add, dims, strides, pad)
    return s / cnt


def mixed_op_reference(x, weights, params, decay_rate):
    outs = [
        jnp.zeros_like(x),
        _ref_bn(_ref_maxpool(x)),
        _ref_bn(_ref_avgpool(x)),
        x,
        _ref_sepconv(x, params["sep3"], 1),
        _ref_sepconv(x, params["sep5"], 2),
        _ref_dilconv(x, params["dil3"], 2, 2),
        _ref_dilconv(x, params["dil5"], 4, 2),
    ]
    res = sum(w * o for w, o in zip(weights, outs))
    return res + x * decay_rate


# ----------------------------------------------------------------------------
# Deterministic parameter init (shapes from MixedOp / OPS __init__, affine=False)
# ----------------------------------------------------------------------------
def init_params(key, C):
    ks = jax.random.split(key, 12)

    def dw(k, K):
        return jax.random.normal(k, (C, 1, K, K), jnp.float32) * math.sqrt(2.0 / (K * K))

    def pw(k):
        return jax.random.normal(k, (C, C, 1, 1), jnp.float32) * math.sqrt(2.0 / C)

    return {
        "sep3": {"dw1": dw(ks[0], 3), "pw1": pw(ks[1]), "dw2": dw(ks[2], 3), "pw2": pw(ks[3])},
        "sep5": {"dw1": dw(ks[4], 5), "pw1": pw(ks[5]), "dw2": dw(ks[6], 5), "pw2": pw(ks[7])},
        "dil3": {"dw": dw(ks[8], 3), "pw": pw(ks[9])},
        "dil5": {"dw": dw(ks[10], 5), "pw": pw(ks[11])},
    }


if __name__ == "__main__":
    key = jax.random.PRNGKey(0)
    kx, ka, kp = jax.random.split(key, 3)

    N, C, H, W = 2, 4, 16, 16
    x = jax.random.normal(kx, (N, C, H, W), jnp.float32)
    alphas = jax.random.normal(ka, (len(PRIMITIVES),), jnp.float32)
    weights = jax.nn.softmax(alphas)          # architecture mixing weights
    params = init_params(kp, C)

    beta_decay_scheduler.step(10)             # linear decay -> decay_rate = 0.8
    decay_rate = float(beta_decay_scheduler.decay_rate)

    fwd = jax.jit(mixed_op_forward)
    out = fwd(x, weights, params, decay_rate)
    out = jax.block_until_ready(out)

    ref = mixed_op_reference(x, weights, params, decay_rate)
    err = float(jnp.max(jnp.abs(out - ref)))

    assert out.shape == (N, C, H, W)
    assert bool(jnp.all(jnp.isfinite(out)))
    # MXU f32 matmul + approx avg-pool reciprocal; typical error ~1e-5, leave margin
    assert err < 5e-3, f"kernel vs reference mismatch: max abs err = {err}"

    print("KERNEL_OK")
</pallas_src>

<mosaic_0001>
module attributes {stable_mosaic.version = 11 : i64} {
  func.func @kernel(%arg0: memref<7xf32, #tpu.memory_space<smem>>, %arg1: memref<8x512xf32, #tpu.memory_space<vmem>>, %arg2: memref<2x256xi32, #tpu.memory_space<vmem>>, %arg3: memref<8x8xf32, #tpu.memory_space<vmem>>, %arg4: memref<8x9xf32, #tpu.memory_space<vmem>>, %arg5: memref<8x8xf32, #tpu.memory_space<vmem>>, %arg6: memref<8x9xf32, #tpu.memory_space<vmem>>, %arg7: memref<8x8xf32, #tpu.memory_space<vmem>>, %arg8: memref<8x25xf32, #tpu.memory_space<vmem>>, %arg9: memref<8x8xf32, #tpu.memory_space<vmem>>, %arg10: memref<8x25xf32, #tpu.memory_space<vmem>>, %arg11: memref<8x8xf32, #tpu.memory_space<vmem>>, %arg12: memref<8x9xf32, #tpu.memory_space<vmem>>, %arg13: memref<8x8xf32, #tpu.memory_space<vmem>>, %arg14: memref<8x25xf32, #tpu.memory_space<vmem>>, %arg15: memref<8x8xf32, #tpu.memory_space<vmem>>, %arg16: memref<8x256xf32, #tpu.memory_space<vmem>>, %arg17: memref<8x512xf32, #tpu.memory_space<vmem>>, %arg18: memref<8x512xf32, #tpu.memory_space<vmem>>, %arg19: memref<8x512xf32, #tpu.memory_space<vmem>>) attributes {dimension_semantics = [], scalar_prefetch = 0 : i64, scratch_operands = 3 : i64, tpu.core_type = #tpu.core_type<tc>} {
    %c0 = arith.constant 0 : index
    %c0_0 = arith.constant 0 : index
    %0 = vector.load %arg2[%c0, %c0_0] : memref<2x256xi32, #tpu.memory_space<vmem>>, vector<1x256xi32>
    %1 = vector.shape_cast %0 : vector<1x256xi32> to vector<1x256xi32>
    %2 = vector.broadcast %1 : vector<1x256xi32> to vector<8x256xi32>
    %c1 = arith.constant 1 : index
    %c0_1 = arith.constant 0 : index
    %3 = vector.load %arg2[%c1, %c0_1] : memref<2x256xi32, #tpu.memory_space<vmem>>, vector<1x256xi32>
    %4 = vector.shape_cast %3 : vector<1x256xi32> to vector<1x256xi32>
    %5 = vector.broadcast %4 : vector<1x256xi32> to vector<8x256xi32>
    %c0_2 = arith.constant 0 : index
    %c0_3 = arith.constant 0 : index
    %6 = vector.load %arg3[%c0_2, %c0_3] : memref<8x8xf32, #tpu.memory_space<vmem>>, vector<8x8xf32>
    %c0_4 = arith.constant 0 : index
    %c128 = arith.constant 128 : index
    %7 = vector.load %arg1[%c0_4, %c128] : memref<8x512xf32, #tpu.memory_space<vmem>>, vector<8x256xf32>
    %c2 = arith.constant 2 : index
    %8 = memref.load %arg0[%c2] : memref<7xf32, #tpu.memory_space<smem>>
    %9 = vector.broadcast %8 : f32 to vector<8x256xf32>
    %10 = arith.mulf %9, %7 : vector<8x256xf32>
    %c0_5 = arith.constant 0 : index
    %c111 = arith.constant 111 : index
    %11 = vector.load %arg1[%c0_5, %c111] : memref<8x512xf32, #tpu.memory_space<vmem>>, vector<8x256xf32>
    %c1_i32 = arith.constant 1 : i32
    %12 = vector.broadcast %c1_i32 : i32 to vector<8x256xi32>
    %13 = arith.cmpi sge, %2, %12 : vector<8x256xi32>
    %c1_i32_6 = arith.constant 1 : i32
    %14 = vector.broadcast %c1_i32_6 : i32 to vector<8x256xi32>
    %15 = arith.cmpi sge, %5, %14 : vector<8x256xi32>
    %16 = arith.andi %13, %15 : vector<8x256xi1>
    %cst = arith.constant -3.40282347E+38 : f32
    %17 = vector.broadcast %cst : f32 to vector<8x256xf32>
    %18 = arith.select %16, %11, %17 : vector<8x256xi1>, vector<8x256xf32>
    %cst_7 = arith.constant 0.000000e+00 : f32
    %19 = vector.broadcast %cst_7 : f32 to vector<8x256xf32>
    %20 = arith.select %16, %11, %19 : vector<8x256xi1>, vector<8x256xf32>
    %cst_8 = arith.constant 1.000000e+00 : f32
    %cst_9 = arith.constant 0.000000e+00 : f32
    %21 = vector.broadcast %cst_8 : f32 to vector<8x256xf32>
    %22 = vector.broadcast %cst_9 : f32 to vector<8x256xf32>
    %23 = arith.select %16, %21, %22 : vector<8x256xi1>, vector<8x256xf32>
    %c0_10 = arith.constant 0 : index
    %c112 = arith.constant 112 : index
    %24 = vector.load %arg1[%c0_10, %c112] : memref<8x512xf32, #tpu.memory_space<vmem>>, vector<8x256xf32>
    %c1_i32_11 = arith.constant 1 : i32
    %25 = vector.broadcast %c1_i32_11 : i32 to vector<8x256xi32>
    %26 = arith.cmpi sge, %2, %25 : vector<8x256xi32>
    %cst_12 = arith.constant -3.40282347E+38 : f32
    %27 = vector.broadcast %cst_12 : f32 to vector<8x256xf32>
    %28 = arith.select %26, %24, %27 : vector<8x256xi1>, vector<8x256xf32>
    %cst_13 = arith.constant 0.000000e+00 : f32
    %29 = vector.broadcast %cst_13 : f32 to vector<8x256xf32>
    %30 = arith.select %26, %24, %29 : vector<8x256xi1>, vector<8x256xf32>
    %cst_14 = arith.constant 1.000000e+00 : f32
    %cst_15 = arith.constant 0.000000e+00 : f32
    %31 = vector.broadcast %cst_14 : f32 to vector<8x256xf32>
    %32 = vector.broadcast %cst_15 : f32 to vector<8x256xf32>
    %33 = arith.select %26, %31, %32 : vector<8x256xi1>, vector<8x256xf32>
    %34 = arith.maximumf %18, %28 : vector<8x256xf32>
    %35 = arith.addf %20, %30 : vector<8x256xf32>
    %36 = arith.addf %23, %33 : vector<8x256xf32>
    %c0_16 = arith.constant 0 : index
    %c113 = arith.constant 113 : index
    %37 = vector.load %arg1[%c0_16, %c113] : memref<8x512xf32, #tpu.memory_space<vmem>>, vector<8x256xf32>
    %c1_i32_17 = arith.constant 1 : i32
    %38 = vector.broadcast %c1_i32_17 : i32 to vector<8x256xi32>
    %39 = arith.cmpi sge, %2, %38 : vector<8x256xi32>
    %c15_i32 = arith.constant 15 : i32
    %40 = vector.broadcast %c15_i32 : i32 to vector<8x256xi32>
    %41 = arith.cmpi slt, %5, %40 : vector<8x256xi32>
    %42 = arith.andi %39, %41 : vector<8x256xi1>
    %cst_18 = arith.constant -3.40282347E+38 : f32
    %43 = vector.broadcast %cst_18 : f32 to vector<8x256xf32>
    %44 = arith.select %42, %37, %43 : vector<8x256xi1>, vector<8x256xf32>
    %cst_19 = arith.constant 0.000000e+00 : f32
    %45 = vector.broadcast %cst_19 : f32 to vector<8x256xf32>
    %46 = arith.select %42, %37, %45 : vector<8x256xi1>, vector<8x256xf32>
    %cst_20 = arith.constant 1.000000e+00 : f32
    %cst_21 = arith.constant 0.000000e+00 : f32
    %47 = vector.broadcast %cst_20 : f32 to vector<8x256xf32>
    %48 = vector.broadcast %cst_21 : f32 to vector<8x256xf32>
    %49 = arith.select %42, %47, %48 : vector<8x256xi1>, vector<8x256xf32>
    %50 = arith.maximumf %34, %44 : vector<8x256xf32>
    %51 = arith.addf %35, %46 : vector<8x256xf32>
    %52 = arith.addf %36, %49 : vector<8x256xf32>
    %c0_22 = arith.constant 0 : index
    %c127 = arith.constant 127 : index
    %53 = vector.load %arg1[%c0_22, %c127] : memref<8x512xf32, #tpu.memory_space<vmem>>, vector<8x256xf32>
    %c1_i32_23 = arith.constant 1 : i32
    %54 = vector.broadcast %c1_i32_23 : i32 to vector<8x256xi32>
    %55 = arith.cmpi sge, %5, %54 : vector<8x256xi32>
    %cst_24 = arith.constant -3.40282347E+38 : f32
    %56 = vector.broadcast %cst_24 : f32 to vector<8x256xf32>
    %57 = arith.select %55, %53, %56 : vector<8x256xi1>, vector<8x256xf32>
    %cst_25 = arith.constant 0.000000e+00 : f32
    %58 = vector.broadcast %cst_25 : f32 to vector<8x256xf32>
    %59 = arith.select %55, %53, %58 : vector<8x256xi1>, vector<8x256xf32>
    %cst_26 = arith.constant 1.000000e+00 : f32
    %cst_27 = arith.constant 0.000000e+00 : f32
    %60 = vector.broadcast %cst_26 : f32 to vector<8x256xf32>
    %61 = vector.broadcast %cst_27 : f32 to vector<8x256xf32>
    %62 = arith.select %55, %60, %61 : vector<8x256xi1>, vector<8x256xf32>
    %63 = arith.maximumf %50, %57 : vector<8x256xf32>
    %64 = arith.addf %51, %59 : vector<8x256xf32>
    %65 = arith.addf %52, %62 : vector<8x256xf32>
    %c0_28 = arith.constant 0 : index
    %c128_29 = arith.constant 128 : index
    %66 = vector.load %arg1[%c0_28, %c128_29] : memref<8x512xf32, #tpu.memory_space<vmem>>, vector<8x256xf32>
    %cst_30 = arith.constant 1.000000e+00 : f32
    %67 = vector.broadcast %cst_30 : f32 to vector<8x256xf32>
    %68 = arith.maximumf %63, %66 : vector<8x256xf32>
    %69 = arith.addf %64, %66 : vector<8x256xf32>
    %70 = arith.addf %65, %67 : vector<8x256xf32>
    %c0_31 = arith.constant 0 : index
    %c129 = arith.constant 129 : index
    %71 = vector.load %arg1[%c0_31, %c129] : memref<8x512xf32, #tpu.memory_space<vmem>>, vector<8x256xf32>
    %c15_i32_32 = arith.constant 15 : i32
    %72 = vector.broadcast %c15_i32_32 : i32 to vector<8x256xi32>
    %73 = arith.cmpi slt, %5, %72 : vector<8x256xi32>
    %cst_33 = arith.constant -3.40282347E+38 : f32
    %74 = vector.broadcast %cst_33 : f32 to vector<8x256xf32>
    %75 = arith.select %73, %71, %74 : vector<8x256xi1>, vector<8x256xf32>
    %cst_34 = arith.constant 0.000000e+00 : f32
    %76 = vector.broadcast %cst_34 : f32 to vector<8x256xf32>
    %77 = arith.select %73, %71, %76 : vector<8x256xi1>, vector<8x256xf32>
    %cst_35 = arith.constant 1.000000e+00 : f32
    %cst_36 = arith.constant 0.000000e+00 : f32
    %78 = vector.broadcast %cst_35 : f32 to vector<8x256xf32>
    %79 = vector.broadcast %cst_36 : f32 to vector<8x256xf32>
    %80 = arith.select %73, %78, %79 : vector<8x256xi1>, vector<8x256xf32>
    %81 = arith.maximumf %68, %75 : vector<8x256xf32>
    %82 = arith.addf %69, %77 : vector<8x256xf32>
    %83 = arith.addf %70, %80 : vector<8x256xf32>
    %c0_37 = arith.constant 0 : index
    %c143 = arith.constant 143 : index
    %84 = vector.load %arg1[%c0_37, %c143] : memref<8x512xf32, #tpu.memory_space<vmem>>, vector<8x256xf32>
    %c15_i32_38 = arith.constant 15 : i32
    %85 = vector.broadcast %c15_i32_38 : i32 to vector<8x256xi32>
    %86 = arith.cmpi slt, %2, %85 : vector<8x256xi32>
    %c1_i32_39 = arith.constant 1 : i32
    %87 = vector.broadcast %c1_i32_39 : i32 to vector<8x256xi32>
    %88 = arith.cmpi sge, %5, %87 : vector<8x256xi32>
    %89 = arith.andi %86, %88 : vector<8x256xi1>
    %cst_40 = arith.constant -3.40282347E+38 : f32
    %90 = vector.broadcast %cst_40 : f32 to vector<8x256xf32>
    %91 = arith.select %89, %84, %90 : vector<8x256xi1>, vector<8x256xf32>
    %cst_41 = arith.constant 0.000000e+00 : f32
    %92 = vector.broadcast %cst_41 : f32 to vector<8x256xf32>
    %93 = arith.select %89, %84, %92 : vector<8x256xi1>, vector<8x256xf32>
    %cst_42 = arith.constant 1.000000e+00 : f32
    %cst_43 = arith.constant 0.000000e+00 : f32
    %94 = vector.broadcast %cst_42 : f32 to vector<8x256xf32>
    %95 = vector.broadcast %cst_43 : f32 to vector<8x256xf32>
    %96 = arith.select %89, %94, %95 : vector<8x256xi1>, vector<8x256xf32>
    %97 = arith.maximumf %81, %91 : vector<8x256xf32>
    %98 = arith.addf %82, %93 : vector<8x256xf32>
    %99 = arith.addf %83, %96 : vector<8x256xf32>
    %c0_44 = arith.constant 0 : index
    %c144 = arith.constant 144 : index
    %100 = vector.load %arg1[%c0_44, %c144] : memref<8x512xf32, #tpu.memory_space<vmem>>, vector<8x256xf32>
    %c15_i32_45 = arith.constant 15 : i32
    %101 = vector.broadcast %c15_i32_45 : i32 to vector<8x256xi32>
    %102 = arith.cmpi slt, %2, %101 : vector<8x256xi32>
    %cst_46 = arith.constant -3.40282347E+38 : f32
    %103 = vector.broadcast %cst_46 : f32 to vector<8x256xf32>
    %104 = arith.select %102, %100, %103 : vector<8x256xi1>, vector<8x256xf32>
    %cst_47 = arith.constant 0.000000e+00 : f32
    %105 = vector.broadcast %cst_47 : f32 to vector<8x256xf32>
    %106 = arith.select %102, %100, %105 : vector<8x256xi1>, vector<8x256xf32>
    %cst_48 = arith.constant 1.000000e+00 : f32
    %cst_49 = arith.constant 0.000000e+00 : f32
    %107 = vector.broadcast %cst_48 : f32 to vector<8x256xf32>
    %108 = vector.broadcast %cst_49 : f32 to vector<8x256xf32>
    %109 = arith.select %102, %107, %108 : vector<8x256xi1>, vector<8x256xf32>
    %110 = arith.maximumf %97, %104 : vector<8x256xf32>
    %111 = arith.addf %98, %106 : vector<8x256xf32>
    %112 = arith.addf %99, %109 : vector<8x256xf32>
    %c0_50 = arith.constant 0 : index
    %c145 = arith.constant 145 : index
    %113 = vector.load %arg1[%c0_50, %c145] : memref<8x512xf32, #tpu.memory_space<vmem>>, vector<8x256xf32>
    %c15_i32_51 = arith.constant 15 : i32
    %114 = vector.broadcast %c15_i32_51 : i32 to vector<8x256xi32>
    %115 = arith.cmpi slt, %2, %114 : vector<8x256xi32>
    %c15_i32_52 = arith.constant 15 : i32
    %116 = vector.broadcast %c15_i32_52 : i32 to vector<8x256xi32>
    %117 = arith.cmpi slt, %5, %116 : vector<8x256xi32>
    %118 = arith.andi %115, %117 : vector<8x256xi1>
    %cst_53 = arith.constant -3.40282347E+38 : f32
    %119 = vector.broadcast %cst_53 : f32 to vector<8x256xf32>
    %120 = arith.select %118, %113, %119 : vector<8x256xi1>, vector<8x256xf32>
    %cst_54 = arith.constant 0.000000e+00 : f32
    %121 = vector.broadcast %cst_54 : f32 to vector<8x256xf32>
    %122 = arith.select %118, %113, %121 : vector<8x256xi1>, vector<8x256xf32>
    %cst_55 = arith.constant 1.000000e+00 : f32
    %cst_56 = arith.constant 0.000000e+00 : f32
    %123 = vector.broadcast %cst_55 : f32 to vector<8x256xf32>
    %124 = vector.broadcast %cst_56 : f32 to vector<8x256xf32>
    %125 = arith.select %118, %123, %124 : vector<8x256xi1>, vector<8x256xf32>
    %126 = arith.maximumf %110, %120 : vector<8x256xf32>
    %127 = arith.addf %111, %122 : vector<8x256xf32>
    %128 = arith.addf %112, %125 : vector<8x256xf32>
    %129 = tpu.reciprocal %128 {approx = true} : vector<8x256xf32> -> vector<8x256xf32>
    %130 = arith.mulf %127, %129 : vector<8x256xf32>
    %cst_57 = arith.constant dense<0.000000e+00> : vector<8x256xf32>
    %131 = tpu.matmul %6, %126, %cst_57 {dimension_numbers = #tpu.dot_dimension_numbers<[1], [0], [0], [1], [0, 0, 1, 1], [], []>} : vector<8x8xf32>, vector<8x256xf32>, vector<8x256xf32> -> vector<8x256xf32>
    %132 = arith.mulf %126, %126 : vector<8x256xf32>
    %cst_58 = arith.constant dense<0.000000e+00> : vector<8x256xf32>
    %133 = tpu.matmul %6, %132, %cst_58 {dimension_numbers = #tpu.dot_dimension_numbers<[1], [0], [0], [1], [0, 0, 1, 1], [], []>} : vector<8x8xf32>, vector<8x256xf32>, vector<8x256xf32> -> vector<8x256xf32>
    %cst_59 = arith.constant dense<0.000000e+00> : vector<8xf32>
    %134 = vector.multi_reduction <add>, %131, %cst_59 [1] : vector<8x256xf32> to vector<8xf32>
    %135 = vector.shape_cast %134 : vector<8xf32> to vector<8x1xf32>
    %cst_60 = arith.constant 0.001953125 : f32
    %136 = vector.broadcast %cst_60 : f32 to vector<8x1xf32>
    %137 = arith.mulf %135, %136 : vector<8x1xf32>
    %cst_61 = arith.constant dense<0.000000e+00> : vector<8xf32>
    %138 = vector.multi_reduction <add>, %133, %cst_61 [1] : vector<8x256xf32> to vector<8xf32>
    %139 = vector.shape_cast %138 : vector<8xf32> to vector<8x1xf32>
    %cst_62 = arith.constant 0.001953125 : f32
    %140 = vector.broadcast %cst_62 : f32 to vector<8x1xf32>
    %141 = arith.mulf %139, %140 : vector<8x1xf32>
    %142 = arith.mulf %137, %137 : vector<8x1xf32>
    %143 = arith.subf %141, %142 : vector<8x1xf32>
    %144 = vector.broadcast %137 : vector<8x1xf32> to vector<8x256xf32>
    %145 = arith.subf %126, %144 : vector<8x256xf32>
    %cst_63 = arith.constant 9.99999974E-6 : f32
    %146 = vector.broadcast %cst_63 : f32 to vector<8x1xf32>
    %147 = arith.addf %143, %146 : vector<8x1xf32>
    %148 = math.rsqrt %147 : vector<8x1xf32>
    %149 = vector.broadcast %148 : vector<8x1xf32> to vector<8x256xf32>
    %150 = arith.mulf %145, %149 : vector<8x256xf32>
    %cst_64 = arith.constant dense<0.000000e+00> : vector<8x256xf32>
    %151 = tpu.matmul %6, %130, %cst_64 {dimension_numbers = #tpu.dot_dimension_numbers<[1], [0], [0], [1], [0, 0, 1, 1], [], []>} : vector<8x8xf32>, vector<8x256xf32>, vector<8x256xf32> -> vector<8x256xf32>
    %152 = arith.mulf %130, %130 : vector<8x256xf32>
    %cst_65 = arith.constant dense<0.000000e+00> : vector<8x256xf32>
    %153 = tpu.matmul %6, %152, %cst_65 {dimension_numbers = #tpu.dot_dimension_numbers<[1], [0], [0], [1], [0, 0, 1, 1], [], []>} : vector<8x8xf32>, vector<8x256xf32>, vector<8x256xf32> -> vector<8x256xf32>
    %cst_66 = arith.constant dense<0.000000e+00> : vector<8xf32>
    %154 = vector.multi_reduction <add>, %151, %cst_66 [1] : vector<8x256xf32> to vector<8xf32>
    %155 = vector.shape_cast %154 : vector<8xf32> to vector<8x1xf32>
    %cst_67 = arith.constant 0.001953125 : f32
    %156 = vector.broadcast %cst_67 : f32 to vector<8x1xf32>
    %157 = arith.mulf %155, %156 : vector<8x1xf32>
    %cst_68 = arith.constant dense<0.000000e+00> : vector<8xf32>
    %158 = vector.multi_reduction <add>, %153, %cst_68 [1] : vector<8x256xf32> to vector<8xf32>
    %159 = vector.shape_cast %158 : vector<8xf32> to vector<8x1xf32>
    %cst_69 = arith.constant 0.001953125 : f32
    %160 = vector.broadcast %cst_69 : f32 to vector<8x1xf32>
    %161 = arith.mulf %159, %160 : vector<8x1xf32>
    %162 = arith.mulf %157, %157 : vector<8x1xf32>
    %163 = arith.subf %161, %162 : vector<8x1xf32>
    %164 = vector.broadcast %157 : vector<8x1xf32> to vector<8x256xf32>
    %165 = arith.subf %130, %164 : vector<8x256xf32>
    %cst_70 = arith.constant 9.99999974E-6 : f32
    %166 = vector.broadcast %cst_70 : f32 to vector<8x1xf32>
    %167 = arith.addf %163, %166 : vector<8x1xf32>
    %168 = math.rsqrt %167 : vector<8x1xf32>
    %169 = vector.broadcast %168 : vector<8x1xf32> to vector<8x256xf32>
    %170 = arith.mulf %165, %169 : vector<8x256xf32>
    %c0_71 = arith.constant 0 : index
    %171 = memref.load %arg0[%c0_71] : memref<7xf32, #tpu.memory_space<smem>>
    %172 = vector.broadcast %171 : f32 to vector<8x256xf32>
    %173 = arith.mulf %172, %150 : vector<8x256xf32>
    %174 = arith.addf %10, %173 : vector<8x256xf32>
    %c1_72 = arith.constant 1 : index
    %175 = memref.load %arg0[%c1_72] : memref<7xf32, #tpu.memory_space<smem>>
    %176 = vector.broadcast %175 : f32 to vector<8x256xf32>
    %177 = arith.mulf %176, %170 : vector<8x256xf32>
    %178 = arith.addf %174, %177 : vector<8x256xf32>
    %c0_73 = arith.constant 0 : index
    %c0_74 = arith.constant 0 : index
    %179 = vector.load %arg1[%c0_73, %c0_74] : memref<8x512xf32, #tpu.memory_space<vmem>>, vector<8x512xf32>
    %cst_75 = arith.constant 0.000000e+00 : f32
    %180 = vector.broadcast %cst_75 : f32 to vector<8x512xf32>
    %181 = arith.maximumf %179, %180 : vector<8x512xf32>
    %c0_76 = arith.constant 0 : index
    %c0_77 = arith.constant 0 : index
    %182 = vector.load %arg17[%c0_76, %c0_77] : memref<8x512xf32, #tpu.memory_space<vmem>>, vector<8x512xf32>
    tpu.vector_store %arg17[%c0_76, %c0_77], %181 {strides = array<i32>} : memref<8x512xf32, #tpu.memory_space<vmem>>, vector<8x512xf32>,
    %c5 = arith.constant 5 : index
    %183 = memref.load %arg0[%c5] : memref<7xf32, #tpu.memory_space<smem>>
    %c2_i32 = arith.constant 2 : i32
    %184 = vector.broadcast %c2_i32 : i32 to vector<8x256xi32>
    %185 = arith.cmpi sge, %5, %184 : vector<8x256xi32>
    %c14_i32 = arith.constant 14 : i32
    %186 = vector.broadcast %c14_i32 : i32 to vector<8x256xi32>
    %187 = arith.cmpi slt, %5, %186 : vector<8x256xi32>
    %c0_78 = arith.constant 0 : index
    %c94 = arith.constant 94 : index
    %188 = vector.load %arg17[%c0_78, %c94] : memref<8x512xf32, #tpu.memory_space<vmem>>, vector<8x256xf32>
    %cst_79 = arith.constant 0.000000e+00 : f32
    %189 = vector.broadcast %cst_79 : f32 to vector<8x256xf32>
    %190 = arith.select %185, %188, %189 : vector<8x256xi1>, vector<8x256xf32>
    %c0_80 = arith.constant 0 : index
    %c0_81 = arith.constant 0 : index
    %191 = vector.load %arg12[%c0_80, %c0_81] : memref<8x9xf32, #tpu.memory_space<vmem>>, vector<8x1xf32>
    %192 = vector.broadcast %191 : vector<8x1xf32> to vector<8x256xf32>
    %193 = arith.mulf %190, %192 : vector<8x256xf32>
    %c0_82 = arith.constant 0 : index
    %c96 = arith.constant 96 : index
    %194 = vector.load %arg17[%c0_82, %c96] : memref<8x512xf32, #tpu.memory_space<vmem>>, vector<8x256xf32>
    %c0_83 = arith.constant 0 : index
    %c1_84 = arith.constant 1 : index
    %195 = vector.load %arg12[%c0_83, %c1_84] : memref<8x9xf32, #tpu.memory_space<vmem>>, vector<8x1xf32>
    %196 = vector.broadcast %195 : vector<8x1xf32> to vector<8x256xf32>
    %197 = arith.mulf %194, %196 : vector<8x256xf32>
    %198 = arith.addf %193, %197 : vector<8x256xf32>
    %c0_85 = arith.constant 0 : index
    %c98 = arith.constant 98 : index
    %199 = vector.load %arg17[%c0_85, %c98] : memref<8x512xf32, #tpu.memory_space<vmem>>, vector<8x256xf32>
    %cst_86 = arith.constant 0.000000e+00 : f32
    %200 = vector.broadcast %cst_86 : f32 to vector<8x256xf32>
    %201 = arith.select %187, %199, %200 : vector<8x256xi1>, vector<8x256xf32>
    %c0_87 = arith.constant 0 : index
    %c2_88 = arith.constant 2 : index
    %202 = vector.load %arg12[%c0_87, %c2_88] : memref<8x9xf32, #tpu.memory_space<vmem>>, vector<8x1xf32>
    %203 = vector.broadcast %202 : vector<8x1xf32> to vector<8x256xf32>
    %204 = arith.mulf %201, %203 : vector<8x256xf32>
    %205 = arith.addf %198, %204 : vector<8x256xf32>
    %c0_89 = arith.constant 0 : index
    %c126 = arith.constant 126 : index
    %206 = vector.load %arg17[%c0_89, %c126] : memref<8x512xf32, #tpu.memory_space<vmem>>, vector<8x256xf32>
    %cst_90 = arith.constant 0.000000e+00 : f32
    %207 = vector.broadcast %cst_90 : f32 to vector<8x256xf32>
    %208 = arith.select %185, %206, %207 : vector<8x256xi1>, vector<8x256xf32>
    %c0_91 = arith.constant 0 : index
    %c3 = arith.constant 3 : index
    %209 = vector.load %arg12[%c0_91, %c3] : memref<8x9xf32, #tpu.memory_space<vmem>>, vector<8x1xf32>
    %210 = vector.broadcast %209 : vector<8x1xf32> to vector<8x256xf32>
    %211 = arith.mulf %208, %210 : vector<8x256xf32>
    %212 = arith.addf %205, %211 : vector<8x256xf32>
    %c0_92 = arith.constant 0 : index
    %c128_93 = arith.constant 128 : index
    %213 = vector.load %arg17[%c0_92, %c128_93] : memref<8x512xf32, #tpu.memory_space<vmem>>, vector<8x256xf32>
    %c0_94 = arith.constant 0 : index
    %c4 = arith.constant 4 : index
    %214 = vector.load %arg12[%c0_94, %c4] : memref<8x9xf32, #tpu.memory_space<vmem>>, vector<8x1xf32>
    %215 = vector.broadcast %214 : vector<8x1xf32> to vector<8x256xf32>
    %216 = arith.mulf %213, %215 : vector<8x256xf32>
    %217 = arith.addf %212, %216 : vector<8x256xf32>
    %c0_95 = arith.constant 0 : index
    %c130 = arith.constant 130 : index
    %218 = vector.load %arg17[%c0_95, %c130] : memref<8x512xf32, #tpu.memory_space<vmem>>, vector<8x256xf32>
    %cst_96 = arith.constant 0.000000e+00 : f32
    %219 = vector.broadcast %cst_96 : f32 to vector<8x256xf32>
    %220 = arith.select %187, %218, %219 : vector<8x256xi1>, vector<8x256xf32>
    %c0_97 = arith.constant 0 : index
    %c5_98 = arith.constant 5 : index
    %221 = vector.load %arg12[%c0_97, %c5_98] : memref<8x9xf32, #tpu.memory_space<vmem>>, vector<8x1xf32>
    %222 = vector.broadcast %221 : vector<8x1xf32> to vector<8x256xf32>
    %223 = arith.mulf %220, %222 : vector<8x256xf32>
    %224 = arith.addf %217, %223 : vector<8x256xf32>
    %c0_99 = arith.constant 0 : index
    %c158 = arith.constant 158 : index
    %225 = vector.load %arg17[%c0_99, %c158] : memref<8x512xf32, #tpu.memory_space<vmem>>, vector<8x256xf32>
    %cst_100 = arith.constant 0.000000e+00 : f32
    %226 = vector.broadcast %cst_100 : f32 to vector<8x256xf32>
    %227 = arith.select %185, %225, %226 : vector<8x256xi1>, vector<8x256xf32>
    %c0_101 = arith.constant 0 : index
    %c6 = arith.constant 6 : index
    %228 = vector.load %arg12[%c0_101, %c6] : memref<8x9xf32, #tpu.memory_space<vmem>>, vector<8x1xf32>
    %229 = vector.broadcast %228 : vector<8x1xf32> to vector<8x256xf32>
    %230 = arith.mulf %227, %229 : vector<8x256xf32>
    %231 = arith.addf %224, %230 : vector<8x256xf32>
    %c0_102 = arith.constant 0 : index
    %c160 = arith.constant 160 : index
    %232 = vector.load %arg17[%c0_102, %c160] : memref<8x512xf32, #tpu.memory_space<vmem>>, vector<8x256xf32>
    %c0_103 = arith.constant 0 : index
    %c7 = arith.constant 7 : index
    %233 = vector.load %arg12[%c0_103, %c7] : memref<8x9xf32, #tpu.memory_space<vmem>>, vector<8x1xf32>
    %234 = vector.broadcast %233 : vector<8x1xf32> to vector<8x256xf32>
    %235 = arith.mulf %232, %234 : vector<8x256xf32>
    %236 = arith.addf %231, %235 : vector<8x256xf32>
    %c0_104 = arith.constant 0 : index
    %c162 = arith.constant 162 : index
    %237 = vector.load %arg17[%c0_104, %c162] : memref<8x512xf32, #tpu.memory_space<vmem>>, vector<8x256xf32>
    %cst_105 = arith.constant 0.000000e+00 : f32
    %238 = vector.broadcast %cst_105 : f32 to vector<8x256xf32>
    %239 = arith.select %187, %237, %238 : vector<8x256xi1>, vector<8x256xf32>
    %c0_106 = arith.constant 0 : index
    %c8 = arith.constant 8 : index
    %240 = vector.load %arg12[%c0_106, %c8] : memref<8x9xf32, #tpu.memory_space<vmem>>, vector<8x1xf32>
    %241 = vector.broadcast %240 : vector<8x1xf32> to vector<8x256xf32>
    %242 = arith.mulf %239, %241 : vector<8x256xf32>
    %243 = arith.addf %236, %242 : vector<8x256xf32>
    %c0_107 = arith.constant 0 : index
    %c0_108 = arith.constant 0 : index
    %244 = vector.load %arg13[%c0_107, %c0_108] : memref<8x8xf32, #tpu.memory_space<vmem>>, vector<8x8xf32>
    %cst_109 = arith.constant dense<0.000000e+00> : vector<8x256xf32>
    %245 = tpu.matmul %244, %243, %cst_109 {dimension_numbers = #tpu.dot_dimension_numbers<[1], [0], [0], [1], [0, 0, 1, 1], [], []>} : vector<8x8xf32>, vector<8x256xf32>, vector<8x256xf32> -> vector<8x256xf32>
    %cst_110 = arith.constant dense<0.000000e+00> : vector<8x256xf32>
    %246 = tpu.matmul %6, %245, %cst_110 {dimension_numbers = #tpu.dot_dimension_numbers<[1], [0], [0], [1], [0, 0, 1, 1], [], []>} : vector<8x8xf32>, vector<8x256xf32>, vector<8x256xf32> -> vector<8x256xf32>
    %247 = arith.mulf %245, %245 : vector<8x256xf32>
    %cst_111 = arith.constant dense<0.000000e+00> : vector<8x256xf32>
    %248 = tpu.matmul %6, %247, %cst_111 {dimension_numbers = #tpu.dot_dimension_numbers<[1], [0], [0], [1], [0, 0, 1, 1], [], []>} : vector<8x8xf32>, vector<8x256xf32>, vector<8x256xf32> -> vector<8x256xf32>
    %cst_112 = arith.constant dense<0.000000e+00> : vector<8xf32>
    %249 = vector.multi_reduction <add>, %246, %cst_112 [1] : vector<8x256xf32> to vector<8xf32>
    %250 = vector.shape_cast %249 : vector<8xf32> to vector<8x1xf32>
    %cst_113 = arith.constant 0.001953125 : f32
    %251 = vector.broadcast %cst_113 : f32 to vector<8x1xf32>
    %252 = arith.mulf %250, %251 : vector<8x1xf32>
    %cst_114 = arith.constant dense<0.000000e+00> : vector<8xf32>
    %253 = vector.multi_reduction <add>, %248, %cst_114 [1] : vector<8x256xf32> to vector<8xf32>
    %254 = vector.shape_cast %253 : vector<8xf32> to vector<8x1xf32>
    %cst_115 = arith.constant 0.001953125 : f32
    %255 = vector.broadcast %cst_115 : f32 to vector<8x1xf32>
    %256 = arith.mulf %254, %255 : vector<8x1xf32>
    %257 = arith.mulf %252, %252 : vector<8x1xf32>
    %258 = arith.subf %256, %257 : vector<8x1xf32>
    %259 = vector.broadcast %252 : vector<8x1xf32> to vector<8x256xf32>
    %260 = arith.subf %245, %259 : vector<8x256xf32>
    %cst_116 = arith.constant 9.99999974E-6 : f32
    %261 = vector.broadcast %cst_116 : f32 to vector<8x1xf32>
    %262 = arith.addf %258, %261 : vector<8x1xf32>
    %263 = math.rsqrt %262 : vector<8x1xf32>
    %264 = vector.broadcast %263 : vector<8x1xf32> to vector<8x256xf32>
    %265 = arith.mulf %260, %264 : vector<8x256xf32>
    %266 = vector.broadcast %183 : f32 to vector<8x256xf32>
    %267 = arith.mulf %266, %265 : vector<8x256xf32>
    %268 = arith.addf %178, %267 : vector<8x256xf32>
    %c6_117 = arith.constant 6 : index
    %269 = memref.load %arg0[%c6_117] : memref<7xf32, #tpu.memory_space<smem>>
    %c4_i32 = arith.constant 4 : i32
    %270 = vector.broadcast %c4_i32 : i32 to vector<8x256xi32>
    %271 = arith.cmpi sge, %5, %270 : vector<8x256xi32>
    %c2_i32_118 = arith.constant 2 : i32
    %272 = vector.broadcast %c2_i32_118 : i32 to vector<8x256xi32>
    %273 = arith.cmpi sge, %5, %272 : vector<8x256xi32>
    %c14_i32_119 = arith.constant 14 : i32
    %274 = vector.broadcast %c14_i32_119 : i32 to vector<8x256xi32>
    %275 = arith.cmpi slt, %5, %274 : vector<8x256xi32>
    %c12_i32 = arith.constant 12 : i32
    %276 = vector.broadcast %c12_i32 : i32 to vector<8x256xi32>
    %277 = arith.cmpi slt, %5, %276 : vector<8x256xi32>
    %c0_120 = arith.constant 0 : index
    %c60 = arith.constant 60 : index
    %278 = vector.load %arg17[%c0_120, %c60] : memref<8x512xf32, #tpu.memory_space<vmem>>, vector<8x256xf32>
    %cst_121 = arith.constant 0.000000e+00 : f32
    %279 = vector.broadcast %cst_121 : f32 to vector<8x256xf32>
    %280 = arith.select %271, %278, %279 : vector<8x256xi1>, vector<8x256xf32>
    %c0_122 = arith.constant 0 : index
    %c0_123 = arith.constant 0 : index
    %281 = vector.load %arg14[%c0_122, %c0_123] : memref<8x25xf32, #tpu.memory_space<vmem>>, vector<8x1xf32>
    %282 = vector.broadcast %281 : vector<8x1xf32> to vector<8x256xf32>
    %283 = arith.mulf %280, %282 : vector<8x256xf32>
    %c0_124 = arith.constant 0 : index
    %c62 = arith.constant 62 : index
    %284 = vector.load %arg17[%c0_124, %c62] : memref<8x512xf32, #tpu.memory_space<vmem>>, vector<8x256xf32>
    %cst_125 = arith.constant 0.000000e+00 : f32
    %285 = vector.broadcast %cst_125 : f32 to vector<8x256xf32>
    %286 = arith.select %273, %284, %285 : vector<8x256xi1>, vector<8x256xf32>
    %c0_126 = arith.constant 0 : index
    %c1_127 = arith.constant 1 : index
    %287 = vector.load %arg14[%c0_126, %c1_127] : memref<8x25xf32, #tpu.memory_space<vmem>>, vector<8x1xf32>
    %288 = vector.broadcast %287 : vector<8x1xf32> to vector<8x256xf32>
    %289 = arith.mulf %286, %288 : vector<8x256xf32>
    %290 = arith.addf %283, %289 : vector<8x256xf32>
    %c0_128 = arith.constant 0 : index
    %c64 = arith.constant 64 : index
    %291 = vector.load %arg17[%c0_128, %c64] : memref<8x512xf32, #tpu.memory_space<vmem>>, vector<8x256xf32>
    %c0_129 = arith.constant 0 : index
    %c2_130 = arith.constant 2 : index
    %292 = vector.load %arg14[%c0_129, %c2_130] : memref<8x25xf32, #tpu.memory_space<vmem>>, vector<8x1xf32>
    %293 = vector.broadcast %292 : vector<8x1xf32> to vector<8x256xf32>
    %294 = arith.mulf %291, %293 : vector<8x256xf32>
    %295 = arith.addf %290, %294 : vector<8x256xf32>
    %c0_131 = arith.constant 0 : index
    %c66 = arith.constant 66 : index
    %296 = vector.load %arg17[%c0_131, %c66] : memref<8x512xf32, #tpu.memory_space<vmem>>, vector<8x256xf32>
    %cst_132 = arith.constant 0.000000e+00 : f32
    %297 = vector.broadcast %cst_132 : f32 to vector<8x256xf32>
    %298 = arith.select %275, %296, %297 : vector<8x256xi1>, vector<8x256xf32>
    %c0_133 = arith.constant 0 : index
    %c3_134 = arith.constant 3 : index
    %299 = vector.load %arg14[%c0_133, %c3_134] : memref<8x25xf32, #tpu.memory_space<vmem>>, vector<8x1xf32>
    %300 = vector.broadcast %299 : vector<8x1xf32> to vector<8x256xf32>
    %301 = arith.mulf %298, %300 : vector<8x256xf32>
    %302 = arith.addf %295, %301 : vector<8x256xf32>
    %c0_135 = arith.constant 0 : index
    %c68 = arith.constant 68 : index
    %303 = vector.load %arg17[%c0_135, %c68] : memref<8x512xf32, #tpu.memory_space<vmem>>, vector<8x256xf32>
    %cst_136 = arith.constant 0.000000e+00 : f32
    %304 = vector.broadcast %cst_136 : f32 to vector<8x256xf32>
    %305 = arith.select %277, %303, %304 : vector<8x256xi1>, vector<8x256xf32>
    %c0_137 = arith.constant 0 : index
    %c4_138 = arith.constant 4 : index
    %306 = vector.load %arg14[%c0_137, %c4_138] : memref<8x25xf32, #tpu.memory_space<vmem>>, vector<8x1xf32>
    %307 = vector.broadcast %306 : vector<8x1xf32> to vector<8x256xf32>
    %308 = arith.mulf %305, %307 : vector<8x256xf32>
    %309 = arith.addf %302, %308 : vector<8x256xf32>
    %c0_139 = arith.constant 0 : index
    %c92 = arith.constant 92 : index
    %310 = vector.load %arg17[%c0_139, %c92] : memref<8x512xf32, #tpu.memory_space<vmem>>, vector<8x256xf32>
    %cst_140 = arith.constant 0.000000e+00 : f32
    %311 = vector.broadcast %cst_140 : f32 to vector<8x256xf32>
    %312 = arith.select %271, %310, %311 : vector<8x256xi1>, vector<8x256xf32>
    %c0_141 = arith.constant 0 : index
    %c5_142 = arith.constant 5 : index
    %313 = vector.load %arg14[%c0_141, %c5_142] : memref<8x25xf32, #tpu.memory_space<vmem>>, vector<8x1xf32>
    %314 = vector.broadcast %313 : vector<8x1xf32> to vector<8x256xf32>
    %315 = arith.mulf %312, %314 : vector<8x256xf32>
    %316 = arith.addf %309, %315 : vector<8x256xf32>
    %c0_143 = arith.constant 0 : index
    %c94_144 = arith.constant 94 : index
    %317 = vector.load %arg17[%c0_143, %c94_144] : memref<8x512xf32, #tpu.memory_space<vmem>>, vector<8x256xf32>
    %cst_145 = arith.constant 0.000000e+00 : f32
    %318 = vector.broadcast %cst_145 : f32 to vector<8x256xf32>
    %319 = arith.select %273, %317, %318 : vector<8x256xi1>, vector<8x256xf32>
    %c0_146 = arith.constant 0 : index
    %c6_147 = arith.constant 6 : index
    %320 = vector.load %arg14[%c0_146, %c6_147] : memref<8x25xf32, #tpu.memory_space<vmem>>, vector<8x1xf32>
    %321 = vector.broadcast %320 : vector<8x1xf32> to vector<8x256xf32>
    %322 = arith.mulf %319, %321 : vector<8x256xf32>
    %323 = arith.addf %316, %322 : vector<8x256xf32>
    %c0_148 = arith.constant 0 : index
    %c96_149 = arith.constant 96 : index
    %324 = vector.load %arg17[%c0_148, %c96_149] : memref<8x512xf32, #tpu.memory_space<vmem>>, vector<8x256xf32>
    %c0_150 = arith.constant 0 : index
    %c7_151 = arith.constant 7 : index
    %325 = vector.load %arg14[%c0_150, %c7_151] : memref<8x25xf32, #tpu.memory_space<vmem>>, vector<8x1xf32>
    %326 = vector.broadcast %325 : vector<8x1xf32> to vector<8x256xf32>
    %327 = arith.mulf %324, %326 : vector<8x256xf32>
    %328 = arith.addf %323, %327 : vector<8x256xf32>
    %c0_152 = arith.constant 0 : index
    %c98_153 = arith.constant 98 : index
    %329 = vector.load %arg17[%c0_152, %c98_153] : memref<8x512xf32, #tpu.memory_space<vmem>>, vector<8x256xf32>
    %cst_154 = arith.constant 0.000000e+00 : f32
    %330 = vector.broadcast %cst_154 : f32 to vector<8x256xf32>
    %331 = arith.select %275, %329, %330 : vector<8x256xi1>, vector<8x256xf32>
    %c0_155 = arith.constant 0 : index
    %c8_156 = arith.constant 8 : index
    %332 = vector.load %arg14[%c0_155, %c8_156] : memref<8x25xf32, #tpu.memory_space<vmem>>, vector<8x1xf32>
    %333 = vector.broadcast %332 : vector<8x1xf32> to vector<8x256xf32>
    %334 = arith.mulf %331, %333 : vector<8x256xf32>
    %335 = arith.addf %328, %334 : vector<8x256xf32>
    %c0_157 = arith.constant 0 : index
    %c100 = arith.constant 100 : index
    %336 = vector.load %arg17[%c0_157, %c100] : memref<8x512xf32, #tpu.memory_space<vmem>>, vector<8x256xf32>
    %cst_158 = arith.constant 0.000000e+00 : f32
    %337 = vector.broadcast %cst_158 : f32 to vector<8x256xf32>
    %338 = arith.select %277, %336, %337 : vector<8x256xi1>, vector<8x256xf32>
    %c0_159 = arith.constant 0 : index
    %c9 = arith.constant 9 : index
    %339 = vector.load %arg14[%c0_159, %c9] : memref<8x25xf32, #tpu.memory_space<vmem>>, vector<8x1xf32>
    %340 = vector.broadcast %339 : vector<8x1xf32> to vector<8x256xf32>
    %341 = arith.mulf %338, %340 : vector<8x256xf32>
    %342 = arith.addf %335, %341 : vector<8x256xf32>
    %c0_160 = arith.constant 0 : index
    %c124 = arith.constant 124 : index
    %343 = vector.load %arg17[%c0_160, %c124] : memref<8x512xf32, #tpu.memory_space<vmem>>, vector<8x256xf32>
    %cst_161 = arith.constant 0.000000e+00 : f32
    %344 = vector.broadcast %cst_161 : f32 to vector<8x256xf32>
    %345 = arith.select %271, %343, %344 : vector<8x256xi1>, vector<8x256xf32>
    %c0_162 = arith.constant 0 : index
    %c10 = arith.constant 10 : index
    %346 = vector.load %arg14[%c0_162, %c10] : memref<8x25xf32, #tpu.memory_space<vmem>>, vector<8x1xf32>
    %347 = vector.broadcast %346 : vector<8x1xf32> to vector<8x256xf32>
    %348 = arith.mulf %345, %347 : vector<8x256xf32>
    %349 = arith.addf %342, %348 : vector<8x256xf32>
    %c0_163 = arith.constant 0 : index
    %c126_164 = arith.constant 126 : index
    %350 = vector.load %arg17[%c0_163, %c126_164] : memref<8x512xf32, #tpu.memory_space<vmem>>, vector<8x256xf32>
    %cst_165 = arith.constant 0.000000e+00 : f32
    %351 = vector.broadcast %cst_165 : f32 to vector<8x256xf32>
    %352 = arith.select %273, %350, %351 : vector<8x256xi1>, vector<8x256xf32>
    %c0_166 = arith.constant 0 : index
    %c11 = arith.constant 11 : index
    %353 = vector.load %arg14[%c0_166, %c11] : memref<8x25xf32, #tpu.memory_space<vmem>>, vector<8x1xf32>
    %354 = vector.broadcast %353 : vector<8x1xf32> to vector<8x256xf32>
    %355 = arith.mulf %352, %354 : vector<8x256xf32>
    %356 = arith.addf %349, %355 : vector<8x256xf32>
    %c0_167 = arith.constant 0 : index
    %c128_168 = arith.constant 128 : index
    %357 = vector.load %arg17[%c0_167, %c128_168] : memref<8x512xf32, #tpu.memory_space<vmem>>, vector<8x256xf32>
    %c0_169 = arith.constant 0 : index
    %c12 = arith.constant 12 : index
    %358 = vector.load %arg14[%c0_169, %c12] : memref<8x25xf32, #tpu.memory_space<vmem>>, vector<8x1xf32>
    %359 = vector.broadcast %358 : vector<8x1xf32> to vector<8x256xf32>
    %360 = arith.mulf %357, %359 : vector<8x256xf32>
    %361 = arith.addf %356, %360 : vector<8x256xf32>
    %c0_170 = arith.constant 0 : index
    %c130_171 = arith.constant 130 : index
    %362 = vector.load %arg17[%c0_170, %c130_171] : memref<8x512xf32, #tpu.memory_space<vmem>>, vector<8x256xf32>
    %cst_172 = arith.constant 0.000000e+00 : f32
    %363 = vector.broadcast %cst_172 : f32 to vector<8x256xf32>
    %364 = arith.select %275, %362, %363 : vector<8x256xi1>, vector<8x256xf32>
    %c0_173 = arith.constant 0 : index
    %c13 = arith.constant 13 : index
    %365 = vector.load %arg14[%c0_173, %c13] : memref<8x25xf32, #tpu.memory_space<vmem>>, vector<8x1xf32>
    %366 = vector.broadcast %365 : vector<8x1xf32> to vector<8x256xf32>
    %367 = arith.mulf %364, %366 : vector<8x256xf32>
    %368 = arith.addf %361, %367 : vector<8x256xf32>
    %c0_174 = arith.constant 0 : index
    %c132 = arith.constant 132 : index
    %369 = vector.load %arg17[%c0_174, %c132] : memref<8x512xf32, #tpu.memory_space<vmem>>, vector<8x256xf32>
    %cst_175 = arith.constant 0.000000e+00 : f32
    %370 = vector.broadcast %cst_175 : f32 to vector<8x256xf32>
    %371 = arith.select %277, %369, %370 : vector<8x256xi1>, vector<8x256xf32>
    %c0_176 = arith.constant 0 : index
    %c14 = arith.constant 14 : index
    %372 = vector.load %arg14[%c0_176, %c14] : memref<8x25xf32, #tpu.memory_space<vmem>>, vector<8x1xf32>
    %373 = vector.broadcast %372 : vector<8x1xf32> to vector<8x256xf32>
    %374 = arith.mulf %371, %373 : vector<8x256xf32>
    %375 = arith.addf %368, %374 : vector<8x256xf32>
    %c0_177 = arith.constant 0 : index
    %c156 = arith.constant 156 : index
    %376 = vector.load %arg17[%c0_177, %c156] : memref<8x512xf32, #tpu.memory_space<vmem>>, vector<8x256xf32>
    %cst_178 = arith.constant 0.000000e+00 : f32
    %377 = vector.broadcast %cst_178 : f32 to vector<8x256xf32>
    %378 = arith.select %271, %376, %377 : vector<8x256xi1>, vector<8x256xf32>
    %c0_179 = arith.constant 0 : index
    %c15 = arith.constant 15 : index
    %379 = vector.load %arg14[%c0_179, %c15] : memref<8x25xf32, #tpu.memory_space<vmem>>, vector<8x1xf32>
    %380 = vector.broadcast %379 : vector<8x1xf32> to vector<8x256xf32>
    %381 = arith.mulf %378, %380 : vector<8x256xf32>
    %382 = arith.addf %375, %381 : vector<8x256xf32>
    %c0_180 = arith.constant 0 : index
    %c158_181 = arith.constant 158 : index
    %383 = vector.load %arg17[%c0_180, %c158_181] : memref<8x512xf32, #tpu.memory_space<vmem>>, vector<8x256xf32>
    %cst_182 = arith.constant 0.000000e+00 : f32
    %384 = vector.broadcast %cst_182 : f32 to vector<8x256xf32>
    %385 = arith.select %273, %383, %384 : vector<8x256xi1>, vector<8x256xf32>
    %c0_183 = arith.constant 0 : index
    %c16 = arith.constant 16 : index
    %386 = vector.load %arg14[%c0_183, %c16] : memref<8x25xf32, #tpu.memory_space<vmem>>, vector<8x1xf32>
    %387 = vector.broadcast %386 : vector<8x1xf32> to vector<8x256xf32>
    %388 = arith.mulf %385, %387 : vector<8x256xf32>
    %389 = arith.addf %382, %388 : vector<8x256xf32>
    %c0_184 = arith.constant 0 : index
    %c160_185 = arith.constant 160 : index
    %390 = vector.load %arg17[%c0_184, %c160_185] : memref<8x512xf32, #tpu.memory_space<vmem>>, vector<8x256xf32>
    %c0_186 = arith.constant 0 : index
    %c17 = arith.constant 17 : index
    %391 = vector.load %arg14[%c0_186, %c17] : memref<8x25xf32, #tpu.memory_space<vmem>>, vector<8x1xf32>
    %392 = vector.broadcast %391 : vector<8x1xf32> to vector<8x256xf32>
    %393 = arith.mulf %390, %392 : vector<8x256xf32>
    %394 = arith.addf %389, %393 : vector<8x256xf32>
    %c0_187 = arith.constant 0 : index
    %c162_188 = arith.constant 162 : index
    %395 = vector.load %arg17[%c0_187, %c162_188] : memref<8x512xf32, #tpu.memory_space<vmem>>, vector<8x256xf32>
    %cst_189 = arith.constant 0.000000e+00 : f32
    %396 = vector.broadcast %cst_189 : f32 to vector<8x256xf32>
    %397 = arith.select %275, %395, %396 : vector<8x256xi1>, vector<8x256xf32>
    %c0_190 = arith.constant 0 : index
    %c18 = arith.constant 18 : index
    %398 = vector.load %arg14[%c0_190, %c18] : memref<8x25xf32, #tpu.memory_space<vmem>>, vector<8x1xf32>
    %399 = vector.broadcast %398 : vector<8x1xf32> to vector<8x256xf32>
    %400 = arith.mulf %397, %399 : vector<8x256xf32>
    %401 = arith.addf %394, %400 : vector<8x256xf32>
    %c0_191 = arith.constant 0 : index
    %c164 = arith.constant 164 : index
    %402 = vector.load %arg17[%c0_191, %c164] : memref<8x512xf32, #tpu.memory_space<vmem>>, vector<8x256xf32>
    %cst_192 = arith.constant 0.000000e+00 : f32
    %403 = vector.broadcast %cst_192 : f32 to vector<8x256xf32>
    %404 = arith.select %277, %402, %403 : vector<8x256xi1>, vector<8x256xf32>
    %c0_193 = arith.constant 0 : index
    %c19 = arith.constant 19 : index
    %405 = vector.load %arg14[%c0_193, %c19] : memref<8x25xf32, #tpu.memory_space<vmem>>, vector<8x1xf32>
    %406 = vector.broadcast %405 : vector<8x1xf32> to vector<8x256xf32>
    %407 = arith.mulf %404, %406 : vector<8x256xf32>
    %408 = arith.addf %401, %407 : vector<8x256xf32>
    %c0_194 = arith.constant 0 : index
    %c188 = arith.constant 188 : index
    %409 = vector.load %arg17[%c0_194, %c188] : memref<8x512xf32, #tpu.memory_space<vmem>>, vector<8x256xf32>
    %cst_195 = arith.constant 0.000000e+00 : f32
    %410 = vector.broadcast %cst_195 : f32 to vector<8x256xf32>
    %411 = arith.select %271, %409, %410 : vector<8x256xi1>, vector<8x256xf32>
    %c0_196 = arith.constant 0 : index
    %c20 = arith.constant 20 : index
    %412 = vector.load %arg14[%c0_196, %c20] : memref<8x25xf32, #tpu.memory_space<vmem>>, vector<8x1xf32>
    %413 = vector.broadcast %412 : vector<8x1xf32> to vector<8x256xf32>
    %414 = arith.mulf %411, %413 : vector<8x256xf32>
    %415 = arith.addf %408, %414 : vector<8x256xf32>
    %c0_197 = arith.constant 0 : index
    %c190 = arith.constant 190 : index
    %416 = vector.load %arg17[%c0_197, %c190] : memref<8x512xf32, #tpu.memory_space<vmem>>, vector<8x256xf32>
    %cst_198 = arith.constant 0.000000e+00 : f32
    %417 = vector.broadcast %cst_198 : f32 to vector<8x256xf32>
    %418 = arith.select %273, %416, %417 : vector<8x256xi1>, vector<8x256xf32>
    %c0_199 = arith.constant 0 : index
    %c21 = arith.constant 21 : index
    %419 = vector.load %arg14[%c0_199, %c21] : memref<8x25xf32, #tpu.memory_space<vmem>>, vector<8x1xf32>
    %420 = vector.broadcast %419 : vector<8x1xf32> to vector<8x256xf32>
    %421 = arith.mulf %418, %420 : vector<8x256xf32>
    %422 = arith.addf %415, %421 : vector<8x256xf32>
    %c0_200 = arith.constant 0 : index
    %c192 = arith.constant 192 : index
    %423 = vector.load %arg17[%c0_200, %c192] : memref<8x512xf32, #tpu.memory_space<vmem>>, vector<8x256xf32>
    %c0_201 = arith.constant 0 : index
    %c22 = arith.constant 22 : index
    %424 = vector.load %arg14[%c0_201, %c22] : memref<8x25xf32, #tpu.memory_space<vmem>>, vector<8x1xf32>
    %425 = vector.broadcast %424 : vector<8x1xf32> to vector<8x256xf32>
    %426 = arith.mulf %423, %425 : vector<8x256xf32>
    %427 = arith.addf %422, %426 : vector<8x256xf32>
    %c0_202 = arith.constant 0 : index
    %c194 = arith.constant 194 : index
    %428 = vector.load %arg17[%c0_202, %c194] : memref<8x512xf32, #tpu.memory_space<vmem>>, vector<8x256xf32>
    %cst_203 = arith.constant 0.000000e+00 : f32
    %429 = vector.broadcast %cst_203 : f32 to vector<8x256xf32>
    %430 = arith.select %275, %428, %429 : vector<8x256xi1>, vector<8x256xf32>
    %c0_204 = arith.constant 0 : index
    %c23 = arith.constant 23 : index
    %431 = vector.load %arg14[%c0_204, %c23] : memref<8x25xf32, #tpu.memory_space<vmem>>, vector<8x1xf32>
    %432 = vector.broadcast %431 : vector<8x1xf32> to vector<8x256xf32>
    %433 = arith.mulf %430, %432 : vector<8x256xf32>
    %434 = arith.addf %427, %433 : vector<8x256xf32>
    %c0_205 = arith.constant 0 : index
    %c196 = arith.constant 196 : index
    %435 = vector.load %arg17[%c0_205, %c196] : memref<8x512xf32, #tpu.memory_space<vmem>>, vector<8x256xf32>
    %cst_206 = arith.constant 0.000000e+00 : f32
    %436 = vector.broadcast %cst_206 : f32 to vector<8x256xf32>
    %437 = arith.select %277, %435, %436 : vector<8x256xi1>, vector<8x256xf32>
    %c0_207 = arith.constant 0 : index
    %c24 = arith.constant 24 : index
    %438 = vector.load %arg14[%c0_207, %c24] : memref<8x25xf32, #tpu.memory_space<vmem>>, vector<8x1xf32>
    %439 = vector.broadcast %438 : vector<8x1xf32> to vector<8x256xf32>
    %440 = arith.mulf %437, %439 : vector<8x256xf32>
    %441 = arith.addf %434, %440 : vector<8x256xf32>
    %c0_208 = arith.constant 0 : index
    %c0_209 = arith.constant 0 : index
    %442 = vector.load %arg15[%c0_208, %c0_209] : memref<8x8xf32, #tpu.memory_space<vmem>>, vector<8x8xf32>
    %cst_210 = arith.constant dense<0.000000e+00> : vector<8x256xf32>
    %443 = tpu.matmul %442, %441, %cst_210 {dimension_numbers = #tpu.dot_dimension_numbers<[1], [0], [0], [1], [0, 0, 1, 1], [], []>} : vector<8x8xf32>, vector<8x256xf32>, vector<8x256xf32> -> vector<8x256xf32>
    %cst_211 = arith.constant dense<0.000000e+00> : vector<8x256xf32>
    %444 = tpu.matmul %6, %443, %cst_211 {dimension_numbers = #tpu.dot_dimension_numbers<[1], [0], [0], [1], [0, 0, 1, 1], [], []>} : vector<8x8xf32>, vector<8x256xf32>, vector<8x256xf32> -> vector<8x256xf32>
    %445 = arith.mulf %443, %443 : vector<8x256xf32>
    %cst_212 = arith.constant dense<0.000000e+00> : vector<8x256xf32>
    %446 = tpu.matmul %6, %445, %cst_212 {dimension_numbers = #tpu.dot_dimension_numbers<[1], [0], [0], [1], [0, 0, 1, 1], [], []>} : vector<8x8xf32>, vector<8x256xf32>, vector<8x256xf32> -> vector<8x256xf32>
    %cst_213 = arith.constant dense<0.000000e+00> : vector<8xf32>
    %447 = vector.multi_reduction <add>, %444, %cst_213 [1] : vector<8x256xf32> to vector<8xf32>
    %448 = vector.shape_cast %447 : vector<8xf32> to vector<8x1xf32>
    %cst_214 = arith.constant 0.001953125 : f32
    %449 = vector.broadcast %cst_214 : f32 to vector<8x1xf32>
    %450 = arith.mulf %448, %449 : vector<8x1xf32>
    %cst_215 = arith.constant dense<0.000000e+00> : vector<8xf32>
    %451 = vector.multi_reduction <add>, %446, %cst_215 [1] : vector<8x256xf32> to vector<8xf32>
    %452 = vector.shape_cast %451 : vector<8xf32> to vector<8x1xf32>
    %cst_216 = arith.constant 0.001953125 : f32
    %453 = vector.broadcast %cst_216 : f32 to vector<8x1xf32>
    %454 = arith.mulf %452, %453 : vector<8x1xf32>
    %455 = arith.mulf %450, %450 : vector<8x1xf32>
    %456 = arith.subf %454, %455 : vector<8x1xf32>
    %457 = vector.broadcast %450 : vector<8x1xf32> to vector<8x256xf32>
    %458 = arith.subf %443, %457 : vector<8x256xf32>
    %cst_217 = arith.constant 9.99999974E-6 : f32
    %459 = vector.broadcast %cst_217 : f32 to vector<8x1xf32>
    %460 = arith.addf %456, %459 : vector<8x1xf32>
    %461 = math.rsqrt %460 : vector<8x1xf32>
    %462 = vector.broadcast %461 : vector<8x1xf32> to vector<8x256xf32>
    %463 = arith.mulf %458, %462 : vector<8x256xf32>
    %464 = vector.broadcast %269 : f32 to vector<8x256xf32>
    %465 = arith.mulf %464, %463 : vector<8x256xf32>
    %466 = arith.addf %268, %465 : vector<8x256xf32>
    %c1_i32_218 = arith.constant 1 : i32
    %467 = vector.broadcast %c1_i32_218 : i32 to vector<8x256xi32>
    %468 = arith.cmpi sge, %5, %467 : vector<8x256xi32>
    %c15_i32_219 = arith.constant 15 : i32
    %469 = vector.broadcast %c15_i32_219 : i32 to vector<8x256xi32>
    %470 = arith.cmpi slt, %5, %469 : vector<8x256xi32>
    %c0_220 = arith.constant 0 : index
    %c111_221 = arith.constant 111 : index
    %471 = vector.load %arg17[%c0_220, %c111_221] : memref<8x512xf32, #tpu.memory_space<vmem>>, vector<8x256xf32>
    %cst_222 = arith.constant 0.000000e+00 : f32
    %472 = vector.broadcast %cst_222 : f32 to vector<8x256xf32>
    %473 = arith.select %468, %471, %472 : vector<8x256xi1>, vector<8x256xf32>
    %c0_223 = arith.constant 0 : index
    %c0_224 = arith.constant 0 : index
    %474 = vector.load %arg4[%c0_223, %c0_224] : memref<8x9xf32, #tpu.memory_space<vmem>>, vector<8x1xf32>
    %475 = vector.broadcast %474 : vector<8x1xf32> to vector<8x256xf32>
    %476 = arith.mulf %473, %475 : vector<8x256xf32>
    %c0_225 = arith.constant 0 : index
    %c112_226 = arith.constant 112 : index
    %477 = vector.load %arg17[%c0_225, %c112_226] : memref<8x512xf32, #tpu.memory_space<vmem>>, vector<8x256xf32>
    %c0_227 = arith.constant 0 : index
    %c1_228 = arith.constant 1 : index
    %478 = vector.load %arg4[%c0_227, %c1_228] : memref<8x9xf32, #tpu.memory_space<vmem>>, vector<8x1xf32>
    %479 = vector.broadcast %478 : vector<8x1xf32> to vector<8x256xf32>
    %480 = arith.mulf %477, %479 : vector<8x256xf32>
    %481 = arith.addf %476, %480 : vector<8x256xf32>
    %c0_229 = arith.constant 0 : index
    %c113_230 = arith.constant 113 : index
    %482 = vector.load %arg17[%c0_229, %c113_230] : memref<8x512xf32, #tpu.memory_space<vmem>>, vector<8x256xf32>
    %cst_231 = arith.constant 0.000000e+00 : f32
    %483 = vector.broadcast %cst_231 : f32 to vector<8x256xf32>
    %484 = arith.select %470, %482, %483 : vector<8x256xi1>, vector<8x256xf32>
    %c0_232 = arith.constant 0 : index
    %c2_233 = arith.constant 2 : index
    %485 = vector.load %arg4[%c0_232, %c2_233] : memref<8x9xf32, #tpu.memory_space<vmem>>, vector<8x1xf32>
    %486 = vector.broadcast %485 : vector<8x1xf32> to vector<8x256xf32>
    %487 = arith.mulf %484, %486 : vector<8x256xf32>
    %488 = arith.addf %481, %487 : vector<8x256xf32>
    %c0_234 = arith.constant 0 : index
    %c127_235 = arith.constant 127 : index
    %489 = vector.load %arg17[%c0_234, %c127_235] : memref<8x512xf32, #tpu.memory_space<vmem>>, vector<8x256xf32>
    %cst_236 = arith.constant 0.000000e+00 : f32
    %490 = vector.broadcast %cst_236 : f32 to vector<8x256xf32>
    %491 = arith.select %468, %489, %490 : vector<8x256xi1>, vector<8x256xf32>
    %c0_237 = arith.constant 0 : index
    %c3_238 = arith.constant 3 : index
    %492 = vector.load %arg4[%c0_237, %c3_238] : memref<8x9xf32, #tpu.memory_space<vmem>>, vector<8x1xf32>
    %493 = vector.broadcast %492 : vector<8x1xf32> to vector<8x256xf32>
    %494 = arith.mulf %491, %493 : vector<8x256xf32>
    %495 = arith.addf %488, %494 : vector<8x256xf32>
    %c0_239 = arith.constant 0 : index
    %c128_240 = arith.constant 128 : index
    %496 = vector.load %arg17[%c0_239, %c128_240] : memref<8x512xf32, #tpu.memory_space<vmem>>, vector<8x256xf32>
    %c0_241 = arith.constant 0 : index
    %c4_242 = arith.constant 4 : index
    %497 = vector.load %arg4[%c0_241, %c4_242] : memref<8x9xf32, #tpu.memory_space<vmem>>, vector<8x1xf32>
    %498 = vector.broadcast %497 : vector<8x1xf32> to vector<8x256xf32>
    %499 = arith.mulf %496, %498 : vector<8x256xf32>
    %500 = arith.addf %495, %499 : vector<8x256xf32>
    %c0_243 = arith.constant 0 : index
    %c129_244 = arith.constant 129 : index
    %501 = vector.load %arg17[%c0_243, %c129_244] : memref<8x512xf32, #tpu.memory_space<vmem>>, vector<8x256xf32>
    %cst_245 = arith.constant 0.000000e+00 : f32
    %502 = vector.broadcast %cst_245 : f32 to vector<8x256xf32>
    %503 = arith.select %470, %501, %502 : vector<8x256xi1>, vector<8x256xf32>
    %c0_246 = arith.constant 0 : index
    %c5_247 = arith.constant 5 : index
    %504 = vector.load %arg4[%c0_246, %c5_247] : memref<8x9xf32, #tpu.memory_space<vmem>>, vector<8x1xf32>
    %505 = vector.broadcast %504 : vector<8x1xf32> to vector<8x256xf32>
    %506 = arith.mulf %503, %505 : vector<8x256xf32>
    %507 = arith.addf %500, %506 : vector<8x256xf32>
    %c0_248 = arith.constant 0 : index
    %c143_249 = arith.constant 143 : index
    %508 = vector.load %arg17[%c0_248, %c143_249] : memref<8x512xf32, #tpu.memory_space<vmem>>, vector<8x256xf32>
    %cst_250 = arith.constant 0.000000e+00 : f32
    %509 = vector.broadcast %cst_250 : f32 to vector<8x256xf32>
    %510 = arith.select %468, %508, %509 : vector<8x256xi1>, vector<8x256xf32>
    %c0_251 = arith.constant 0 : index
    %c6_252 = arith.constant 6 : index
    %511 = vector.load %arg4[%c0_251, %c6_252] : memref<8x9xf32, #tpu.memory_space<vmem>>, vector<8x1xf32>
    %512 = vector.broadcast %511 : vector<8x1xf32> to vector<8x256xf32>
    %513 = arith.mulf %510, %512 : vector<8x256xf32>
    %514 = arith.addf %507, %513 : vector<8x256xf32>
    %c0_253 = arith.constant 0 : index
    %c144_254 = arith.constant 144 : index
    %515 = vector.load %arg17[%c0_253, %c144_254] : memref<8x512xf32, #tpu.memory_space<vmem>>, vector<8x256xf32>
    %c0_255 = arith.constant 0 : index
    %c7_256 = arith.constant 7 : index
    %516 = vector.load %arg4[%c0_255, %c7_256] : memref<8x9xf32, #tpu.memory_space<vmem>>, vector<8x1xf32>
    %517 = vector.broadcast %516 : vector<8x1xf32> to vector<8x256xf32>
    %518 = arith.mulf %515, %517 : vector<8x256xf32>
    %519 = arith.addf %514, %518 : vector<8x256xf32>
    %c0_257 = arith.constant 0 : index
    %c145_258 = arith.constant 145 : index
    %520 = vector.load %arg17[%c0_257, %c145_258] : memref<8x512xf32, #tpu.memory_space<vmem>>, vector<8x256xf32>
    %cst_259 = arith.constant 0.000000e+00 : f32
    %521 = vector.broadcast %cst_259 : f32 to vector<8x256xf32>
    %522 = arith.select %470, %520, %521 : vector<8x256xi1>, vector<8x256xf32>
    %c0_260 = arith.constant 0 : index
    %c8_261 = arith.constant 8 : index
    %523 = vector.load %arg4[%c0_260, %c8_261] : memref<8x9xf32, #tpu.memory_space<vmem>>, vector<8x1xf32>
    %524 = vector.broadcast %523 : vector<8x1xf32> to vector<8x256xf32>
    %525 = arith.mulf %522, %524 : vector<8x256xf32>
    %526 = arith.addf %519, %525 : vector<8x256xf32>
    %c0_262 = arith.constant 0 : index
    %c0_263 = arith.constant 0 : index
    %527 = vector.load %arg5[%c0_262, %c0_263] : memref<8x8xf32, #tpu.memory_space<vmem>>, vector<8x8xf32>
    %cst_264 = arith.constant dense<0.000000e+00> : vector<8x256xf32>
    %528 = tpu.matmul %527, %526, %cst_264 {dimension_numbers = #tpu.dot_dimension_numbers<[1], [0], [0], [1], [0, 0, 1, 1], [], []>} : vector<8x8xf32>, vector<8x256xf32>, vector<8x256xf32> -> vector<8x256xf32>
    %cst_265 = arith.constant dense<0.000000e+00> : vector<8x256xf32>
    %529 = tpu.matmul %6, %528, %cst_265 {dimension_numbers = #tpu.dot_dimension_numbers<[1], [0], [0], [1], [0, 0, 1, 1], [], []>} : vector<8x8xf32>, vector<8x256xf32>, vector<8x256xf32> -> vector<8x256xf32>
    %530 = arith.mulf %528, %528 : vector<8x256xf32>
    %cst_266 = arith.constant dense<0.000000e+00> : vector<8x256xf32>
    %531 = tpu.matmul %6, %530, %cst_266 {dimension_numbers = #tpu.dot_dimension_numbers<[1], [0], [0], [1], [0, 0, 1, 1], [], []>} : vector<8x8xf32>, vector<8x256xf32>, vector<8x256xf32> -> vector<8x256xf32>
    %cst_267 = arith.constant dense<0.000000e+00> : vector<8xf32>
    %532 = vector.multi_reduction <add>, %529, %cst_267 [1] : vector<8x256xf32> to vector<8xf32>
    %533 = vector.shape_cast %532 : vector<8xf32> to vector<8x1xf32>
    %cst_268 = arith.constant 0.001953125 : f32
    %534 = vector.broadcast %cst_268 : f32 to vector<8x1xf32>
    %535 = arith.mulf %533, %534 : vector<8x1xf32>
    %cst_269 = arith.constant dense<0.000000e+00> : vector<8xf32>
    %536 = vector.multi_reduction <add>, %531, %cst_269 [1] : vector<8x256xf32> to vector<8xf32>
    %537 = vector.shape_cast %536 : vector<8xf32> to vector<8x1xf32>
    %cst_270 = arith.constant 0.001953125 : f32
    %538 = vector.broadcast %cst_270 : f32 to vector<8x1xf32>
    %539 = arith.mulf %537, %538 : vector<8x1xf32>
    %540 = arith.mulf %535, %535 : vector<8x1xf32>
    %541 = arith.subf %539, %540 : vector<8x1xf32>
    %542 = vector.broadcast %535 : vector<8x1xf32> to vector<8x256xf32>
    %543 = arith.subf %528, %542 : vector<8x256xf32>
    %cst_271 = arith.constant 9.99999974E-6 : f32
    %544 = vector.broadcast %cst_271 : f32 to vector<8x1xf32>
    %545 = arith.addf %541, %544 : vector<8x1xf32>
    %546 = math.rsqrt %545 : vector<8x1xf32>
    %547 = vector.broadcast %546 : vector<8x1xf32> to vector<8x256xf32>
    %548 = arith.mulf %543, %547 : vector<8x256xf32>
    %c2_i32_272 = arith.constant 2 : i32
    %549 = vector.broadcast %c2_i32_272 : i32 to vector<8x256xi32>
    %550 = arith.cmpi sge, %5, %549 : vector<8x256xi32>
    %c1_i32_273 = arith.constant 1 : i32
    %551 = vector.broadcast %c1_i32_273 : i32 to vector<8x256xi32>
    %552 = arith.cmpi sge, %5, %551 : vector<8x256xi32>
    %c15_i32_274 = arith.constant 15 : i32
    %553 = vector.broadcast %c15_i32_274 : i32 to vector<8x256xi32>
    %554 = arith.cmpi slt, %5, %553 : vector<8x256xi32>
    %c14_i32_275 = arith.constant 14 : i32
    %555 = vector.broadcast %c14_i32_275 : i32 to vector<8x256xi32>
    %556 = arith.cmpi slt, %5, %555 : vector<8x256xi32>
    %c0_276 = arith.constant 0 : index
    %c94_277 = arith.constant 94 : index
    %557 = vector.load %arg17[%c0_276, %c94_277] : memref<8x512xf32, #tpu.memory_space<vmem>>, vector<8x256xf32>
    %cst_278 = arith.constant 0.000000e+00 : f32
    %558 = vector.broadcast %cst_278 : f32 to vector<8x256xf32>
    %559 = arith.select %550, %557, %558 : vector<8x256xi1>, vector<8x256xf32>
    %c0_279 = arith.constant 0 : index
    %c0_280 = arith.constant 0 : index
    %560 = vector.load %arg8[%c0_279, %c0_280] : memref<8x25xf32, #tpu.memory_space<vmem>>, vector<8x1xf32>
    %561 = vector.broadcast %560 : vector<8x1xf32> to vector<8x256xf32>
    %562 = arith.mulf %559, %561 : vector<8x256xf32>
    %c0_281 = arith.constant 0 : index
    %c95 = arith.constant 95 : index
    %563 = vector.load %arg17[%c0_281, %c95] : memref<8x512xf32, #tpu.memory_space<vmem>>, vector<8x256xf32>
    %cst_282 = arith.constant 0.000000e+00 : f32
    %564 = vector.broadcast %cst_282 : f32 to vector<8x256xf32>
    %565 = arith.select %552, %563, %564 : vector<8x256xi1>, vector<8x256xf32>
    %c0_283 = arith.constant 0 : index
    %c1_284 = arith.constant 1 : index
    %566 = vector.load %arg8[%c0_283, %c1_284] : memref<8x25xf32, #tpu.memory_space<vmem>>, vector<8x1xf32>
    %567 = vector.broadcast %566 : vector<8x1xf32> to vector<8x256xf32>
    %568 = arith.mulf %565, %567 : vector<8x256xf32>
    %569 = arith.addf %562, %568 : vector<8x256xf32>
    %c0_285 = arith.constant 0 : index
    %c96_286 = arith.constant 96 : index
    %570 = vector.load %arg17[%c0_285, %c96_286] : memref<8x512xf32, #tpu.memory_space<vmem>>, vector<8x256xf32>
    %c0_287 = arith.constant 0 : index
    %c2_288 = arith.constant 2 : index
    %571 = vector.load %arg8[%c0_287, %c2_288] : memref<8x25xf32, #tpu.memory_space<vmem>>, vector<8x1xf32>
    %572 = vector.broadcast %571 : vector<8x1xf32> to vector<8x256xf32>
    %573 = arith.mulf %570, %572 : vector<8x256xf32>
    %574 = arith.addf %569, %573 : vector<8x256xf32>
    %c0_289 = arith.constant 0 : index
    %c97 = arith.constant 97 : index
    %575 = vector.load %arg17[%c0_289, %c97] : memref<8x512xf32, #tpu.memory_space<vmem>>, vector<8x256xf32>
    %cst_290 = arith.constant 0.000000e+00 : f32
    %576 = vector.broadcast %cst_290 : f32 to vector<8x256xf32>
    %577 = arith.select %554, %575, %576 : vector<8x256xi1>, vector<8x256xf32>
    %c0_291 = arith.constant 0 : index
    %c3_292 = arith.constant 3 : index
    %578 = vector.load %arg8[%c0_291, %c3_292] : memref<8x25xf32, #tpu.memory_space<vmem>>, vector<8x1xf32>
    %579 = vector.broadcast %578 : vector<8x1xf32> to vector<8x256xf32>
    %580 = arith.mulf %577, %579 : vector<8x256xf32>
    %581 = arith.addf %574, %580 : vector<8x256xf32>
    %c0_293 = arith.constant 0 : index
    %c98_294 = arith.constant 98 : index
    %582 = vector.load %arg17[%c0_293, %c98_294] : memref<8x512xf32, #tpu.memory_space<vmem>>, vector<8x256xf32>
    %cst_295 = arith.constant 0.000000e+00 : f32
    %583 = vector.broadcast %cst_295 : f32 to vector<8x256xf32>
    %584 = arith.select %556, %582, %583 : vector<8x256xi1>, vector<8x256xf32>
    %c0_296 = arith.constant 0 : index
    %c4_297 = arith.constant 4 : index
    %585 = vector.load %arg8[%c0_296, %c4_297] : memref<8x25xf32, #tpu.memory_space<vmem>>, vector<8x1xf32>
    %586 = vector.broadcast %585 : vector<8x1xf32> to vector<8x256xf32>
    %587 = arith.mulf %584, %586 : vector<8x256xf32>
    %588 = arith.addf %581, %587 : vector<8x256xf32>
    %c0_298 = arith.constant 0 : index
    %c110 = arith.constant 110 : index
    %589 = vector.load %arg17[%c0_298, %c110] : memref<8x512xf32, #tpu.memory_space<vmem>>, vector<8x256xf32>
    %cst_299 = arith.constant 0.000000e+00 : f32
    %590 = vector.broadcast %cst_299 : f32 to vector<8x256xf32>
    %591 = arith.select %550, %589, %590 : vector<8x256xi1>, vector<8x256xf32>
    %c0_300 = arith.constant 0 : index
    %c5_301 = arith.constant 5 : index
    %592 = vector.load %arg8[%c0_300, %c5_301] : memref<8x25xf32, #tpu.memory_space<vmem>>, vector<8x1xf32>
    %593 = vector.broadcast %592 : vector<8x1xf32> to vector<8x256xf32>
    %594 = arith.mulf %591, %593 : vector<8x256xf32>
    %595 = arith.addf %588, %594 : vector<8x256xf32>
    %c0_302 = arith.constant 0 : index
    %c111_303 = arith.constant 111 : index
    %596 = vector.load %arg17[%c0_302, %c111_303] : memref<8x512xf32, #tpu.memory_space<vmem>>, vector<8x256xf32>
    %cst_304 = arith.constant 0.000000e+00 : f32
    %597 = vector.broadcast %cst_304 : f32 to vector<8x256xf32>
    %598 = arith.select %552, %596, %597 : vector<8x256xi1>, vector<8x256xf32>
    %c0_305 = arith.constant 0 : index
    %c6_306 = arith.constant 6 : index
    %599 = vector.load %arg8[%c0_305, %c6_306] : memref<8x25xf32, #tpu.memory_space<vmem>>, vector<8x1xf32>
    %600 = vector.broadcast %599 : vector<8x1xf32> to vector<8x256xf32>
    %601 = arith.mulf %598, %600 : vector<8x256xf32>
    %602 = arith.addf %595, %601 : vector<8x256xf32>
    %c0_307 = arith.constant 0 : index
    %c112_308 = arith.constant 112 : index
    %603 = vector.load %arg17[%c0_307, %c112_308] : memref<8x512xf32, #tpu.memory_space<vmem>>, vector<8x256xf32>
    %c0_309 = arith.constant 0 : index
    %c7_310 = arith.constant 7 : index
    %604 = vector.load %arg8[%c0_309, %c7_310] : memref<8x25xf32, #tpu.memory_space<vmem>>, vector<8x1xf32>
    %605 = vector.broadcast %604 : vector<8x1xf32> to vector<8x256xf32>
    %606 = arith.mulf %603, %605 : vector<8x256xf32>
    %607 = arith.addf %602, %606 : vector<8x256xf32>
    %c0_311 = arith.constant 0 : index
    %c113_312 = arith.constant 113 : index
    %608 = vector.load %arg17[%c0_311, %c113_312] : memref<8x512xf32, #tpu.memory_space<vmem>>, vector<8x256xf32>
    %cst_313 = arith.constant 0.000000e+00 : f32
    %609 = vector.broadcast %cst_313 : f32 to vector<8x256xf32>
    %610 = arith.select %554, %608, %609 : vector<8x256xi1>, vector<8x256xf32>
    %c0_314 = arith.constant 0 : index
    %c8_315 = arith.constant 8 : index
    %611 = vector.load %arg8[%c0_314, %c8_315] : memref<8x25xf32, #tpu.memory_space<vmem>>, vector<8x1xf32>
    %612 = vector.broadcast %611 : vector<8x1xf32> to vector<8x256xf32>
    %613 = arith.mulf %610, %612 : vector<8x256xf32>
    %614 = arith.addf %607, %613 : vector<8x256xf32>
    %c0_316 = arith.constant 0 : index
    %c114 = arith.constant 114 : index
    %615 = vector.load %arg17[%c0_316, %c114] : memref<8x512xf32, #tpu.memory_space<vmem>>, vector<8x256xf32>
    %cst_317 = arith.constant 0.000000e+00 : f32
    %616 = vector.broadcast %cst_317 : f32 to vector<8x256xf32>
    %617 = arith.select %556, %615, %616 : vector<8x256xi1>, vector<8x256xf32>
    %c0_318 = arith.constant 0 : index
    %c9_319 = arith.constant 9 : index
    %618 = vector.load %arg8[%c0_318, %c9_319] : memref<8x25xf32, #tpu.memory_space<vmem>>, vector<8x1xf32>
    %619 = vector.broadcast %618 : vector<8x1xf32> to vector<8x256xf32>
    %620 = arith.mulf %617, %619 : vector<8x256xf32>
    %621 = arith.addf %614, %620 : vector<8x256xf32>
    %c0_320 = arith.constant 0 : index
    %c126_321 = arith.constant 126 : index
    %622 = vector.load %arg17[%c0_320, %c126_321] : memref<8x512xf32, #tpu.memory_space<vmem>>, vector<8x256xf32>
    %cst_322 = arith.constant 0.000000e+00 : f32
    %623 = vector.broadcast %cst_322 : f32 to vector<8x256xf32>
    %624 = arith.select %550, %622, %623 : vector<8x256xi1>, vector<8x256xf32>
    %c0_323 = arith.constant 0 : index
    %c10_324 = arith.constant 10 : index
    %625 = vector.load %arg8[%c0_323, %c10_324] : memref<8x25xf32, #tpu.memory_space<vmem>>, vector<8x1xf32>
    %626 = vector.broadcast %625 : vector<8x1xf32> to vector<8x256xf32>
    %627 = arith.mulf %624, %626 : vector<8x256xf32>
    %628 = arith.addf %621, %627 : vector<8x256xf32>
    %c0_325 = arith.constant 0 : index
    %c127_326 = arith.constant 127 : index
    %629 = vector.load %arg17[%c0_325, %c127_326] : memref<8x512xf32, #tpu.memory_space<vmem>>, vector<8x256xf32>
    %cst_327 = arith.constant 0.000000e+00 : f32
    %630 = vector.broadcast %cst_327 : f32 to vector<8x256xf32>
    %631 = arith.select %552, %629, %630 : vector<8x256xi1>, vector<8x256xf32>
    %c0_328 = arith.constant 0 : index
    %c11_329 = arith.constant 11 : index
    %632 = vector.load %arg8[%c0_328, %c11_329] : memref<8x25xf32, #tpu.memory_space<vmem>>, vector<8x1xf32>
    %633 = vector.broadcast %632 : vector<8x1xf32> to vector<8x256xf32>
    %634 = arith.mulf %631, %633 : vector<8x256xf32>
    %635 = arith.addf %628, %634 : vector<8x256xf32>
    %c0_330 = arith.constant 0 : index
    %c128_331 = arith.constant 128 : index
    %636 = vector.load %arg17[%c0_330, %c128_331] : memref<8x512xf32, #tpu.memory_space<vmem>>, vector<8x256xf32>
    %c0_332 = arith.constant 0 : index
    %c12_333 = arith.constant 12 : index
    %637 = vector.load %arg8[%c0_332, %c12_333] : memref<8x25xf32, #tpu.memory_space<vmem>>, vector<8x1xf32>
    %638 = vector.broadcast %637 : vector<8x1xf32> to vector<8x256xf32>
    %639 = arith.mulf %636, %638 : vector<8x256xf32>
    %640 = arith.addf %635, %639 : vector<8x256xf32>
    %c0_334 = arith.constant 0 : index
    %c129_335 = arith.constant 129 : index
    %641 = vector.load %arg17[%c0_334, %c129_335] : memref<8x512xf32, #tpu.memory_space<vmem>>, vector<8x256xf32>
    %cst_336 = arith.constant 0.000000e+00 : f32
    %642 = vector.broadcast %cst_336 : f32 to vector<8x256xf32>
    %643 = arith.select %554, %641, %642 : vector<8x256xi1>, vector<8x256xf32>
    %c0_337 = arith.constant 0 : index
    %c13_338 = arith.constant 13 : index
    %644 = vector.load %arg8[%c0_337, %c13_338] : memref<8x25xf32, #tpu.memory_space<vmem>>, vector<8x1xf32>
    %645 = vector.broadcast %644 : vector<8x1xf32> to vector<8x256xf32>
    %646 = arith.mulf %643, %645 : vector<8x256xf32>
    %647 = arith.addf %640, %646 : vector<8x256xf32>
    %c0_339 = arith.constant 0 : index
    %c130_340 = arith.constant 130 : index
    %648 = vector.load %arg17[%c0_339, %c130_340] : memref<8x512xf32, #tpu.memory_space<vmem>>, vector<8x256xf32>
    %cst_341 = arith.constant 0.000000e+00 : f32
    %649 = vector.broadcast %cst_341 : f32 to vector<8x256xf32>
    %650 = arith.select %556, %648, %649 : vector<8x256xi1>, vector<8x256xf32>
    %c0_342 = arith.constant 0 : index
    %c14_343 = arith.constant 14 : index
    %651 = vector.load %arg8[%c0_342, %c14_343] : memref<8x25xf32, #tpu.memory_space<vmem>>, vector<8x1xf32>
    %652 = vector.broadcast %651 : vector<8x1xf32> to vector<8x256xf32>
    %653 = arith.mulf %650, %652 : vector<8x256xf32>
    %654 = arith.addf %647, %653 : vector<8x256xf32>
    %c0_344 = arith.constant 0 : index
    %c142 = arith.constant 142 : index
    %655 = vector.load %arg17[%c0_344, %c142] : memref<8x512xf32, #tpu.memory_space<vmem>>, vector<8x256xf32>
    %cst_345 = arith.constant 0.000000e+00 : f32
    %656 = vector.broadcast %cst_345 : f32 to vector<8x256xf32>
    %657 = arith.select %550, %655, %656 : vector<8x256xi1>, vector<8x256xf32>
    %c0_346 = arith.constant 0 : index
    %c15_347 = arith.constant 15 : index
    %658 = vector.load %arg8[%c0_346, %c15_347] : memref<8x25xf32, #tpu.memory_space<vmem>>, vector<8x1xf32>
    %659 = vector.broadcast %658 : vector<8x1xf32> to vector<8x256xf32>
    %660 = arith.mulf %657, %659 : vector<8x256xf32>
    %661 = arith.addf %654, %660 : vector<8x256xf32>
    %c0_348 = arith.constant 0 : index
    %c143_349 = arith.constant 143 : index
    %662 = vector.load %arg17[%c0_348, %c143_349] : memref<8x512xf32, #tpu.memory_space<vmem>>, vector<8x256xf32>
    %cst_350 = arith.constant 0.000000e+00 : f32
    %663 = vector.broadcast %cst_350 : f32 to vector<8x256xf32>
    %664 = arith.select %552, %662, %663 : vector<8x256xi1>, vector<8x256xf32>
    %c0_351 = arith.constant 0 : index
    %c16_352 = arith.constant 16 : index
    %665 = vector.load %arg8[%c0_351, %c16_352] : memref<8x25xf32, #tpu.memory_space<vmem>>, vector<8x1xf32>
    %666 = vector.broadcast %665 : vector<8x1xf32> to vector<8x256xf32>
    %667 = arith.mulf %664, %666 : vector<8x256xf32>
    %668 = arith.addf %661, %667 : vector<8x256xf32>
    %c0_353 = arith.constant 0 : index
    %c144_354 = arith.constant 144 : index
    %669 = vector.load %arg17[%c0_353, %c144_354] : memref<8x512xf32, #tpu.memory_space<vmem>>, vector<8x256xf32>
    %c0_355 = arith.constant 0 : index
    %c17_356 = arith.constant 17 : index
    %670 = vector.load %arg8[%c0_355, %c17_356] : memref<8x25xf32, #tpu.memory_space<vmem>>, vector<8x1xf32>
    %671 = vector.broadcast %670 : vector<8x1xf32> to vector<8x256xf32>
    %672 = arith.mulf %669, %671 : vector<8x256xf32>
    %673 = arith.addf %668, %672 : vector<8x256xf32>
    %c0_357 = arith.constant 0 : index
    %c145_358 = arith.constant 145 : index
    %674 = vector.load %arg17[%c0_357, %c145_358] : memref<8x512xf32, #tpu.memory_space<vmem>>, vector<8x256xf32>
    %cst_359 = arith.constant 0.000000e+00 : f32
    %675 = vector.broadcast %cst_359 : f32 to vector<8x256xf32>
    %676 = arith.select %554, %674, %675 : vector<8x256xi1>, vector<8x256xf32>
    %c0_360 = arith.constant 0 : index
    %c18_361 = arith.constant 18 : index
    %677 = vector.load %arg8[%c0_360, %c18_361] : memref<8x25xf32, #tpu.memory_space<vmem>>, vector<8x1xf32>
    %678 = vector.broadcast %677 : vector<8x1xf32> to vector<8x256xf32>
    %679 = arith.mulf %676, %678 : vector<8x256xf32>
    %680 = arith.addf %673, %679 : vector<8x256xf32>
    %c0_362 = arith.constant 0 : index
    %c146 = arith.constant 146 : index
    %681 = vector.load %arg17[%c0_362, %c146] : memref<8x512xf32, #tpu.memory_space<vmem>>, vector<8x256xf32>
    %cst_363 = arith.constant 0.000000e+00 : f32
    %682 = vector.broadcast %cst_363 : f32 to vector<8x256xf32>
    %683 = arith.select %556, %681, %682 : vector<8x256xi1>, vector<8x256xf32>
    %c0_364 = arith.constant 0 : index
    %c19_365 = arith.constant 19 : index
    %684 = vector.load %arg8[%c0_364, %c19_365] : memref<8x25xf32, #tpu.memory_space<vmem>>, vector<8x1xf32>
    %685 = vector.broadcast %684 : vector<8x1xf32> to vector<8x256xf32>
    %686 = arith.mulf %683, %685 : vector<8x256xf32>
    %687 = arith.addf %680, %686 : vector<8x256xf32>
    %c0_366 = arith.constant 0 : index
    %c158_367 = arith.constant 158 : index
    %688 = vector.load %arg17[%c0_366, %c158_367] : memref<8x512xf32, #tpu.memory_space<vmem>>, vector<8x256xf32>
    %cst_368 = arith.constant 0.000000e+00 : f32
    %689 = vector.broadcast %cst_368 : f32 to vector<8x256xf32>
    %690 = arith.select %550, %688, %689 : vector<8x256xi1>, vector<8x256xf32>
    %c0_369 = arith.constant 0 : index
    %c20_370 = arith.constant 20 : index
    %691 = vector.load %arg8[%c0_369, %c20_370] : memref<8x25xf32, #tpu.memory_space<vmem>>, vector<8x1xf32>
    %692 = vector.broadcast %691 : vector<8x1xf32> to vector<8x256xf32>
    %693 = arith.mulf %690, %692 : vector<8x256xf32>
    %694 = arith.addf %687, %693 : vector<8x256xf32>
    %c0_371 = arith.constant 0 : index
    %c159 = arith.constant 159 : index
    %695 = vector.load %arg17[%c0_371, %c159] : memref<8x512xf32, #tpu.memory_space<vmem>>, vector<8x256xf32>
    %cst_372 = arith.constant 0.000000e+00 : f32
    %696 = vector.broadcast %cst_372 : f32 to vector<8x256xf32>
    %697 = arith.select %552, %695, %696 : vector<8x256xi1>, vector<8x256xf32>
    %c0_373 = arith.constant 0 : index
    %c21_374 = arith.constant 21 : index
    %698 = vector.load %arg8[%c0_373, %c21_374] : memref<8x25xf32, #tpu.memory_space<vmem>>, vector<8x1xf32>
    %699 = vector.broadcast %698 : vector<8x1xf32> to vector<8x256xf32>
    %700 = arith.mulf %697, %699 : vector<8x256xf32>
    %701 = arith.addf %694, %700 : vector<8x256xf32>
    %c0_375 = arith.constant 0 : index
    %c160_376 = arith.constant 160 : index
    %702 = vector.load %arg17[%c0_375, %c160_376] : memref<8x512xf32, #tpu.memory_space<vmem>>, vector<8x256xf32>
    %c0_377 = arith.constant 0 : index
    %c22_378 = arith.constant 22 : index
    %703 = vector.load %arg8[%c0_377, %c22_378] : memref<8x25xf32, #tpu.memory_space<vmem>>, vector<8x1xf32>
    %704 = vector.broadcast %703 : vector<8x1xf32> to vector<8x256xf32>
    %705 = arith.mulf %702, %704 : vector<8x256xf32>
    %706 = arith.addf %701, %705 : vector<8x256xf32>
    %c0_379 = arith.constant 0 : index
    %c161 = arith.constant 161 : index
    %707 = vector.load %arg17[%c0_379, %c161] : memref<8x512xf32, #tpu.memory_space<vmem>>, vector<8x256xf32>
    %cst_380 = arith.constant 0.000000e+00 : f32
    %708 = vector.broadcast %cst_380 : f32 to vector<8x256xf32>
    %709 = arith.select %554, %707, %708 : vector<8x256xi1>, vector<8x256xf32>
    %c0_381 = arith.constant 0 : index
    %c23_382 = arith.constant 23 : index
    %710 = vector.load %arg8[%c0_381, %c23_382] : memref<8x25xf32, #tpu.memory_space<vmem>>, vector<8x1xf32>
    %711 = vector.broadcast %710 : vector<8x1xf32> to vector<8x256xf32>
    %712 = arith.mulf %709, %711 : vector<8x256xf32>
    %713 = arith.addf %706, %712 : vector<8x256xf32>
    %c0_383 = arith.constant 0 : index
    %c162_384 = arith.constant 162 : index
    %714 = vector.load %arg17[%c0_383, %c162_384] : memref<8x512xf32, #tpu.memory_space<vmem>>, vector<8x256xf32>
    %cst_385 = arith.constant 0.000000e+00 : f32
    %715 = vector.broadcast %cst_385 : f32 to vector<8x256xf32>
    %716 = arith.select %556, %714, %715 : vector<8x256xi1>, vector<8x256xf32>
    %c0_386 = arith.constant 0 : index
    %c24_387 = arith.constant 24 : index
    %717 = vector.load %arg8[%c0_386, %c24_387] : memref<8x25xf32, #tpu.memory_space<vmem>>, vector<8x1xf32>
    %718 = vector.broadcast %717 : vector<8x1xf32> to vector<8x256xf32>
    %719 = arith.mulf %716, %718 : vector<8x256xf32>
    %720 = arith.addf %713, %719 : vector<8x256xf32>
    %c0_388 = arith.constant 0 : index
    %c0_389 = arith.constant 0 : index
    %721 = vector.load %arg9[%c0_388, %c0_389] : memref<8x8xf32, #tpu.memory_space<vmem>>, vector<8x8xf32>
    %cst_390 = arith.constant dense<0.000000e+00> : vector<8x256xf32>
    %722 = tpu.matmul %721, %720, %cst_390 {dimension_numbers = #tpu.dot_dimension_numbers<[1], [0], [0], [1], [0, 0, 1, 1], [], []>} : vector<8x8xf32>, vector<8x256xf32>, vector<8x256xf32> -> vector<8x256xf32>
    %cst_391 = arith.constant dense<0.000000e+00> : vector<8x256xf32>
    %723 = tpu.matmul %6, %722, %cst_391 {dimension_numbers = #tpu.dot_dimension_numbers<[1], [0], [0], [1], [0, 0, 1, 1], [], []>} : vector<8x8xf32>, vector<8x256xf32>, vector<8x256xf32> -> vector<8x256xf32>
    %724 = arith.mulf %722, %722 : vector<8x256xf32>
    %cst_392 = arith.constant dense<0.000000e+00> : vector<8x256xf32>
    %725 = tpu.matmul %6, %724, %cst_392 {dimension_numbers = #tpu.dot_dimension_numbers<[1], [0], [0], [1], [0, 0, 1, 1], [], []>} : vector<8x8xf32>, vector<8x256xf32>, vector<8x256xf32> -> vector<8x256xf32>
    %cst_393 = arith.constant dense<0.000000e+00> : vector<8xf32>
    %726 = vector.multi_reduction <add>, %723, %cst_393 [1] : vector<8x256xf32> to vector<8xf32>
    %727 = vector.shape_cast %726 : vector<8xf32> to vector<8x1xf32>
    %cst_394 = arith.constant 0.001953125 : f32
    %728 = vector.broadcast %cst_394 : f32 to vector<8x1xf32>
    %729 = arith.mulf %727, %728 : vector<8x1xf32>
    %cst_395 = arith.constant dense<0.000000e+00> : vector<8xf32>
    %730 = vector.multi_reduction <add>, %725, %cst_395 [1] : vector<8x256xf32> to vector<8xf32>
    %731 = vector.shape_cast %730 : vector<8xf32> to vector<8x1xf32>
    %cst_396 = arith.constant 0.001953125 : f32
    %732 = vector.broadcast %cst_396 : f32 to vector<8x1xf32>
    %733 = arith.mulf %731, %732 : vector<8x1xf32>
    %734 = arith.mulf %729, %729 : vector<8x1xf32>
    %735 = arith.subf %733, %734 : vector<8x1xf32>
    %736 = vector.broadcast %729 : vector<8x1xf32> to vector<8x256xf32>
    %737 = arith.subf %722, %736 : vector<8x256xf32>
    %cst_397 = arith.constant 9.99999974E-6 : f32
    %738 = vector.broadcast %cst_397 : f32 to vector<8x1xf32>
    %739 = arith.addf %735, %738 : vector<8x1xf32>
    %740 = math.rsqrt %739 : vector<8x1xf32>
    %741 = vector.broadcast %740 : vector<8x1xf32> to vector<8x256xf32>
    %742 = arith.mulf %737, %741 : vector<8x256xf32>
    %cst_398 = arith.constant 0.000000e+00 : f32
    %743 = vector.broadcast %cst_398 : f32 to vector<8x128xf32>
    %c0_399 = arith.constant 0 : index
    %c0_400 = arith.constant 0 : index
    %744 = vector.load %arg18[%c0_399, %c0_400] : memref<8x512xf32, #tpu.memory_space<vmem>>, vector<8x128xf32>
    tpu.vector_store %arg18[%c0_399, %c0_400], %743 {strides = array<i32>} : memref<8x512xf32, #tpu.memory_space<vmem>>, vector<8x128xf32>,
    %c0_401 = arith.constant 0 : index
    %c384 = arith.constant 384 : index
    %745 = vector.load %arg18[%c0_401, %c384] : memref<8x512xf32, #tpu.memory_space<vmem>>, vector<8x128xf32>
    tpu.vector_store %arg18[%c0_401, %c384], %743 {strides = array<i32>} : memref<8x512xf32, #tpu.memory_space<vmem>>, vector<8x128xf32>,
    %cst_402 = arith.constant 0.000000e+00 : f32
    %746 = vector.broadcast %cst_402 : f32 to vector<8x256xf32>
    %747 = arith.maximumf %548, %746 : vector<8x256xf32>
    %c0_403 = arith.constant 0 : index
    %c128_404 = arith.constant 128 : index
    %748 = vector.load %arg18[%c0_403, %c128_404] : memref<8x512xf32, #tpu.memory_space<vmem>>, vector<8x256xf32>
    tpu.vector_store %arg18[%c0_403, %c128_404], %747 {strides = array<i32>} : memref<8x512xf32, #tpu.memory_space<vmem>>, vector<8x256xf32>,
    %c0_405 = arith.constant 0 : index
    %c0_406 = arith.constant 0 : index
    %749 = vector.load %arg19[%c0_405, %c0_406] : memref<8x512xf32, #tpu.memory_space<vmem>>, vector<8x128xf32>
    tpu.vector_store %arg19[%c0_405, %c0_406], %743 {strides = array<i32>} : memref<8x512xf32, #tpu.memory_space<vmem>>, vector<8x128xf32>,
    %c0_407 = arith.constant 0 : index
    %c384_408 = arith.constant 384 : index
    %750 = vector.load %arg19[%c0_407, %c384_408] : memref<8x512xf32, #tpu.memory_space<vmem>>, vector<8x128xf32>
    tpu.vector_store %arg19[%c0_407, %c384_408], %743 {strides = array<i32>} : memref<8x512xf32, #tpu.memory_space<vmem>>, vector<8x128xf32>,
    %cst_409 = arith.constant 0.000000e+00 : f32
    %751 = vector.broadcast %cst_409 : f32 to vector<8x256xf32>
    %752 = arith.maximumf %742, %751 : vector<8x256xf32>
    %c0_410 = arith.constant 0 : index
    %c128_411 = arith.constant 128 : index
    %753 = vector.load %arg19[%c0_410, %c128_411] : memref<8x512xf32, #tpu.memory_space<vmem>>, vector<8x256xf32>
    tpu.vector_store %arg19[%c0_410, %c128_411], %752 {strides = array<i32>} : memref<8x512xf32, #tpu.memory_space<vmem>>, vector<8x256xf32>,
    %c3_412 = arith.constant 3 : index
    %754 = memref.load %arg0[%c3_412] : memref<7xf32, #tpu.memory_space<smem>>
    %c1_i32_413 = arith.constant 1 : i32
    %755 = vector.broadcast %c1_i32_413 : i32 to vector<8x256xi32>
    %756 = arith.cmpi sge, %5, %755 : vector<8x256xi32>
    %c15_i32_414 = arith.constant 15 : i32
    %757 = vector.broadcast %c15_i32_414 : i32 to vector<8x256xi32>
    %758 = arith.cmpi slt, %5, %757 : vector<8x256xi32>
    %c0_415 = arith.constant 0 : index
    %c111_416 = arith.constant 111 : index
    %759 = vector.load %arg18[%c0_415, %c111_416] : memref<8x512xf32, #tpu.memory_space<vmem>>, vector<8x256xf32>
    %cst_417 = arith.constant 0.000000e+00 : f32
    %760 = vector.broadcast %cst_417 : f32 to vector<8x256xf32>
    %761 = arith.select %756, %759, %760 : vector<8x256xi1>, vector<8x256xf32>
    %c0_418 = arith.constant 0 : index
    %c0_419 = arith.constant 0 : index
    %762 = vector.load %arg6[%c0_418, %c0_419] : memref<8x9xf32, #tpu.memory_space<vmem>>, vector<8x1xf32>
    %763 = vector.broadcast %762 : vector<8x1xf32> to vector<8x256xf32>
    %764 = arith.mulf %761, %763 : vector<8x256xf32>
    %c0_420 = arith.constant 0 : index
    %c112_421 = arith.constant 112 : index
    %765 = vector.load %arg18[%c0_420, %c112_421] : memref<8x512xf32, #tpu.memory_space<vmem>>, vector<8x256xf32>
    %c0_422 = arith.constant 0 : index
    %c1_423 = arith.constant 1 : index
    %766 = vector.load %arg6[%c0_422, %c1_423] : memref<8x9xf32, #tpu.memory_space<vmem>>, vector<8x1xf32>
    %767 = vector.broadcast %766 : vector<8x1xf32> to vector<8x256xf32>
    %768 = arith.mulf %765, %767 : vector<8x256xf32>
    %769 = arith.addf %764, %768 : vector<8x256xf32>
    %c0_424 = arith.constant 0 : index
    %c113_425 = arith.constant 113 : index
    %770 = vector.load %arg18[%c0_424, %c113_425] : memref<8x512xf32, #tpu.memory_space<vmem>>, vector<8x256xf32>
    %cst_426 = arith.constant 0.000000e+00 : f32
    %771 = vector.broadcast %cst_426 : f32 to vector<8x256xf32>
    %772 = arith.select %758, %770, %771 : vector<8x256xi1>, vector<8x256xf32>
    %c0_427 = arith.constant 0 : index
    %c2_428 = arith.constant 2 : index
    %773 = vector.load %arg6[%c0_427, %c2_428] : memref<8x9xf32, #tpu.memory_space<vmem>>, vector<8x1xf32>
    %774 = vector.broadcast %773 : vector<8x1xf32> to vector<8x256xf32>
    %775 = arith.mulf %772, %774 : vector<8x256xf32>
    %776 = arith.addf %769, %775 : vector<8x256xf32>
    %c0_429 = arith.constant 0 : index
    %c127_430 = arith.constant 127 : index
    %777 = vector.load %arg18[%c0_429, %c127_430] : memref<8x512xf32, #tpu.memory_space<vmem>>, vector<8x256xf32>
    %cst_431 = arith.constant 0.000000e+00 : f32
    %778 = vector.broadcast %cst_431 : f32 to vector<8x256xf32>
    %779 = arith.select %756, %777, %778 : vector<8x256xi1>, vector<8x256xf32>
    %c0_432 = arith.constant 0 : index
    %c3_433 = arith.constant 3 : index
    %780 = vector.load %arg6[%c0_432, %c3_433] : memref<8x9xf32, #tpu.memory_space<vmem>>, vector<8x1xf32>
    %781 = vector.broadcast %780 : vector<8x1xf32> to vector<8x256xf32>
    %782 = arith.mulf %779, %781 : vector<8x256xf32>
    %783 = arith.addf %776, %782 : vector<8x256xf32>
    %c0_434 = arith.constant 0 : index
    %c128_435 = arith.constant 128 : index
    %784 = vector.load %arg18[%c0_434, %c128_435] : memref<8x512xf32, #tpu.memory_space<vmem>>, vector<8x256xf32>
    %c0_436 = arith.constant 0 : index
    %c4_437 = arith.constant 4 : index
    %785 = vector.load %arg6[%c0_436, %c4_437] : memref<8x9xf32, #tpu.memory_space<vmem>>, vector<8x1xf32>
    %786 = vector.broadcast %785 : vector<8x1xf32> to vector<8x256xf32>
    %787 = arith.mulf %784, %786 : vector<8x256xf32>
    %788 = arith.addf %783, %787 : vector<8x256xf32>
    %c0_438 = arith.constant 0 : index
    %c129_439 = arith.constant 129 : index
    %789 = vector.load %arg18[%c0_438, %c129_439] : memref<8x512xf32, #tpu.memory_space<vmem>>, vector<8x256xf32>
    %cst_440 = arith.constant 0.000000e+00 : f32
    %790 = vector.broadcast %cst_440 : f32 to vector<8x256xf32>
    %791 = arith.select %758, %789, %790 : vector<8x256xi1>, vector<8x256xf32>
    %c0_441 = arith.constant 0 : index
    %c5_442 = arith.constant 5 : index
    %792 = vector.load %arg6[%c0_441, %c5_442] : memref<8x9xf32, #tpu.memory_space<vmem>>, vector<8x1xf32>
    %793 = vector.broadcast %792 : vector<8x1xf32> to vector<8x256xf32>
    %794 = arith.mulf %791, %793 : vector<8x256xf32>
    %795 = arith.addf %788, %794 : vector<8x256xf32>
    %c0_443 = arith.constant 0 : index
    %c143_444 = arith.constant 143 : index
    %796 = vector.load %arg18[%c0_443, %c143_444] : memref<8x512xf32, #tpu.memory_space<vmem>>, vector<8x256xf32>
    %cst_445 = arith.constant 0.000000e+00 : f32
    %797 = vector.broadcast %cst_445 : f32 to vector<8x256xf32>
    %798 = arith.select %756, %796, %797 : vector<8x256xi1>, vector<8x256xf32>
    %c0_446 = arith.constant 0 : index
    %c6_447 = arith.constant 6 : index
    %799 = vector.load %arg6[%c0_446, %c6_447] : memref<8x9xf32, #tpu.memory_space<vmem>>, vector<8x1xf32>
    %800 = vector.broadcast %799 : vector<8x1xf32> to vector<8x256xf32>
    %801 = arith.mulf %798, %800 : vector<8x256xf32>
    %802 = arith.addf %795, %801 : vector<8x256xf32>
    %c0_448 = arith.constant 0 : index
    %c144_449 = arith.constant 144 : index
    %803 = vector.load %arg18[%c0_448, %c144_449] : memref<8x512xf32, #tpu.memory_space<vmem>>, vector<8x256xf32>
    %c0_450 = arith.constant 0 : index
    %c7_451 = arith.constant 7 : index
    %804 = vector.load %arg6[%c0_450, %c7_451] : memref<8x9xf32, #tpu.memory_space<vmem>>, vector<8x1xf32>
    %805 = vector.broadcast %804 : vector<8x1xf32> to vector<8x256xf32>
    %806 = arith.mulf %803, %805 : vector<8x256xf32>
    %807 = arith.addf %802, %806 : vector<8x256xf32>
    %c0_452 = arith.constant 0 : index
    %c145_453 = arith.constant 145 : index
    %808 = vector.load %arg18[%c0_452, %c145_453] : memref<8x512xf32, #tpu.memory_space<vmem>>, vector<8x256xf32>
    %cst_454 = arith.constant 0.000000e+00 : f32
    %809 = vector.broadcast %cst_454 : f32 to vector<8x256xf32>
    %810 = arith.select %758, %808, %809 : vector<8x256xi1>, vector<8x256xf32>
    %c0_455 = arith.constant 0 : index
    %c8_456 = arith.constant 8 : index
    %811 = vector.load %arg6[%c0_455, %c8_456] : memref<8x9xf32, #tpu.memory_space<vmem>>, vector<8x1xf32>
    %812 = vector.broadcast %811 : vector<8x1xf32> to vector<8x256xf32>
    %813 = arith.mulf %810, %812 : vector<8x256xf32>
    %814 = arith.addf %807, %813 : vector<8x256xf32>
    %c0_457 = arith.constant 0 : index
    %c0_458 = arith.constant 0 : index
    %815 = vector.load %arg7[%c0_457, %c0_458] : memref<8x8xf32, #tpu.memory_space<vmem>>, vector<8x8xf32>
    %cst_459 = arith.constant dense<0.000000e+00> : vector<8x256xf32>
    %816 = tpu.matmul %815, %814, %cst_459 {dimension_numbers = #tpu.dot_dimension_numbers<[1], [0], [0], [1], [0, 0, 1, 1], [], []>} : vector<8x8xf32>, vector<8x256xf32>, vector<8x256xf32> -> vector<8x256xf32>
    %cst_460 = arith.constant dense<0.000000e+00> : vector<8x256xf32>
    %817 = tpu.matmul %6, %816, %cst_460 {dimension_numbers = #tpu.dot_dimension_numbers<[1], [0], [0], [1], [0, 0, 1, 1], [], []>} : vector<8x8xf32>, vector<8x256xf32>, vector<8x256xf32> -> vector<8x256xf32>
    %818 = arith.mulf %816, %816 : vector<8x256xf32>
    %cst_461 = arith.constant dense<0.000000e+00> : vector<8x256xf32>
    %819 = tpu.matmul %6, %818, %cst_461 {dimension_numbers = #tpu.dot_dimension_numbers<[1], [0], [0], [1], [0, 0, 1, 1], [], []>} : vector<8x8xf32>, vector<8x256xf32>, vector<8x256xf32> -> vector<8x256xf32>
    %cst_462 = arith.constant dense<0.000000e+00> : vector<8xf32>
    %820 = vector.multi_reduction <add>, %817, %cst_462 [1] : vector<8x256xf32> to vector<8xf32>
    %821 = vector.shape_cast %820 : vector<8xf32> to vector<8x1xf32>
    %cst_463 = arith.constant 0.001953125 : f32
    %822 = vector.broadcast %cst_463 : f32 to vector<8x1xf32>
    %823 = arith.mulf %821, %822 : vector<8x1xf32>
    %cst_464 = arith.constant dense<0.000000e+00> : vector<8xf32>
    %824 = vector.multi_reduction <add>, %819, %cst_464 [1] : vector<8x256xf32> to vector<8xf32>
    %825 = vector.shape_cast %824 : vector<8xf32> to vector<8x1xf32>
    %cst_465 = arith.constant 0.001953125 : f32
    %826 = vector.broadcast %cst_465 : f32 to vector<8x1xf32>
    %827 = arith.mulf %825, %826 : vector<8x1xf32>
    %828 = arith.mulf %823, %823 : vector<8x1xf32>
    %829 = arith.subf %827, %828 : vector<8x1xf32>
    %830 = vector.broadcast %823 : vector<8x1xf32> to vector<8x256xf32>
    %831 = arith.subf %816, %830 : vector<8x256xf32>
    %cst_466 = arith.constant 9.99999974E-6 : f32
    %832 = vector.broadcast %cst_466 : f32 to vector<8x1xf32>
    %833 = arith.addf %829, %832 : vector<8x1xf32>
    %834 = math.rsqrt %833 : vector<8x1xf32>
    %835 = vector.broadcast %834 : vector<8x1xf32> to vector<8x256xf32>
    %836 = arith.mulf %831, %835 : vector<8x256xf32>
    %837 = vector.broadcast %754 : f32 to vector<8x256xf32>
    %838 = arith.mulf %837, %836 : vector<8x256xf32>
    %839 = arith.addf %466, %838 : vector<8x256xf32>
    %c4_467 = arith.constant 4 : index
    %840 = memref.load %arg0[%c4_467] : memref<7xf32, #tpu.memory_space<smem>>
    %c2_i32_468 = arith.constant 2 : i32
    %841 = vector.broadcast %c2_i32_468 : i32 to vector<8x256xi32>
    %842 = arith.cmpi sge, %5, %841 : vector<8x256xi32>
    %c1_i32_469 = arith.constant 1 : i32
    %843 = vector.broadcast %c1_i32_469 : i32 to vector<8x256xi32>
    %844 = arith.cmpi sge, %5, %843 : vector<8x256xi32>
    %c15_i32_470 = arith.constant 15 : i32
    %845 = vector.broadcast %c15_i32_470 : i32 to vector<8x256xi32>
    %846 = arith.cmpi slt, %5, %845 : vector<8x256xi32>
    %c14_i32_471 = arith.constant 14 : i32
    %847 = vector.broadcast %c14_i32_471 : i32 to vector<8x256xi32>
    %848 = arith.cmpi slt, %5, %847 : vector<8x256xi32>
    %c0_472 = arith.constant 0 : index
    %c94_473 = arith.constant 94 : index
    %849 = vector.load %arg19[%c0_472, %c94_473] : memref<8x512xf32, #tpu.memory_space<vmem>>, vector<8x256xf32>
    %cst_474 = arith.constant 0.000000e+00 : f32
    %850 = vector.broadcast %cst_474 : f32 to vector<8x256xf32>
    %851 = arith.select %842, %849, %850 : vector<8x256xi1>, vector<8x256xf32>
    %c0_475 = arith.constant 0 : index
    %c0_476 = arith.constant 0 : index
    %852 = vector.load %arg10[%c0_475, %c0_476] : memref<8x25xf32, #tpu.memory_space<vmem>>, vector<8x1xf32>
    %853 = vector.broadcast %852 : vector<8x1xf32> to vector<8x256xf32>
    %854 = arith.mulf %851, %853 : vector<8x256xf32>
    %c0_477 = arith.constant 0 : index
    %c95_478 = arith.constant 95 : index
    %855 = vector.load %arg19[%c0_477, %c95_478] : memref<8x512xf32, #tpu.memory_space<vmem>>, vector<8x256xf32>
    %cst_479 = arith.constant 0.000000e+00 : f32
    %856 = vector.broadcast %cst_479 : f32 to vector<8x256xf32>
    %857 = arith.select %844, %855, %856 : vector<8x256xi1>, vector<8x256xf32>
    %c0_480 = arith.constant 0 : index
    %c1_481 = arith.constant 1 : index
    %858 = vector.load %arg10[%c0_480, %c1_481] : memref<8x25xf32, #tpu.memory_space<vmem>>, vector<8x1xf32>
    %859 = vector.broadcast %858 : vector<8x1xf32> to vector<8x256xf32>
    %860 = arith.mulf %857, %859 : vector<8x256xf32>
    %861 = arith.addf %854, %860 : vector<8x256xf32>
    %c0_482 = arith.constant 0 : index
    %c96_483 = arith.constant 96 : index
    %862 = vector.load %arg19[%c0_482, %c96_483] : memref<8x512xf32, #tpu.memory_space<vmem>>, vector<8x256xf32>
    %c0_484 = arith.constant 0 : index
    %c2_485 = arith.constant 2 : index
    %863 = vector.load %arg10[%c0_484, %c2_485] : memref<8x25xf32, #tpu.memory_space<vmem>>, vector<8x1xf32>
    %864 = vector.broadcast %863 : vector<8x1xf32> to vector<8x256xf32>
    %865 = arith.mulf %862, %864 : vector<8x256xf32>
    %866 = arith.addf %861, %865 : vector<8x256xf32>
    %c0_486 = arith.constant 0 : index
    %c97_487 = arith.constant 97 : index
    %867 = vector.load %arg19[%c0_486, %c97_487] : memref<8x512xf32, #tpu.memory_space<vmem>>, vector<8x256xf32>
    %cst_488 = arith.constant 0.000000e+00 : f32
    %868 = vector.broadcast %cst_488 : f32 to vector<8x256xf32>
    %869 = arith.select %846, %867, %868 : vector<8x256xi1>, vector<8x256xf32>
    %c0_489 = arith.constant 0 : index
    %c3_490 = arith.constant 3 : index
    %870 = vector.load %arg10[%c0_489, %c3_490] : memref<8x25xf32, #tpu.memory_space<vmem>>, vector<8x1xf32>
    %871 = vector.broadcast %870 : vector<8x1xf32> to vector<8x256xf32>
    %872 = arith.mulf %869, %871 : vector<8x256xf32>
    %873 = arith.addf %866, %872 : vector<8x256xf32>
    %c0_491 = arith.constant 0 : index
    %c98_492 = arith.constant 98 : index
    %874 = vector.load %arg19[%c0_491, %c98_492] : memref<8x512xf32, #tpu.memory_space<vmem>>, vector<8x256xf32>
    %cst_493 = arith.constant 0.000000e+00 : f32
    %875 = vector.broadcast %cst_493 : f32 to vector<8x256xf32>
    %876 = arith.select %848, %874, %875 : vector<8x256xi1>, vector<8x256xf32>
    %c0_494 = arith.constant 0 : index
    %c4_495 = arith.constant 4 : index
    %877 = vector.load %arg10[%c0_494, %c4_495] : memref<8x25xf32, #tpu.memory_space<vmem>>, vector<8x1xf32>
    %878 = vector.broadcast %877 : vector<8x1xf32> to vector<8x256xf32>
    %879 = arith.mulf %876, %878 : vector<8x256xf32>
    %880 = arith.addf %873, %879 : vector<8x256xf32>
    %c0_496 = arith.constant 0 : index
    %c110_497 = arith.constant 110 : index
    %881 = vector.load %arg19[%c0_496, %c110_497] : memref<8x512xf32, #tpu.memory_space<vmem>>, vector<8x256xf32>
    %cst_498 = arith.constant 0.000000e+00 : f32
    %882 = vector.broadcast %cst_498 : f32 to vector<8x256xf32>
    %883 = arith.select %842, %881, %882 : vector<8x256xi1>, vector<8x256xf32>
    %c0_499 = arith.constant 0 : index
    %c5_500 = arith.constant 5 : index
    %884 = vector.load %arg10[%c0_499, %c5_500] : memref<8x25xf32, #tpu.memory_space<vmem>>, vector<8x1xf32>
    %885 = vector.broadcast %884 : vector<8x1xf32> to vector<8x256xf32>
    %886 = arith.mulf %883, %885 : vector<8x256xf32>
    %887 = arith.addf %880, %886 : vector<8x256xf32>
    %c0_501 = arith.constant 0 : index
    %c111_502 = arith.constant 111 : index
    %888 = vector.load %arg19[%c0_501, %c111_502] : memref<8x512xf32, #tpu.memory_space<vmem>>, vector<8x256xf32>
    %cst_503 = arith.constant 0.000000e+00 : f32
    %889 = vector.broadcast %cst_503 : f32 to vector<8x256xf32>
    %890 = arith.select %844, %888, %889 : vector<8x256xi1>, vector<8x256xf32>
    %c0_504 = arith.constant 0 : index
    %c6_505 = arith.constant 6 : index
    %891 = vector.load %arg10[%c0_504, %c6_505] : memref<8x25xf32, #tpu.memory_space<vmem>>, vector<8x1xf32>
    %892 = vector.broadcast %891 : vector<8x1xf32> to vector<8x256xf32>
    %893 = arith.mulf %890, %892 : vector<8x256xf32>
    %894 = arith.addf %887, %893 : vector<8x256xf32>
    %c0_506 = arith.constant 0 : index
    %c112_507 = arith.constant 112 : index
    %895 = vector.load %arg19[%c0_506, %c112_507] : memref<8x512xf32, #tpu.memory_space<vmem>>, vector<8x256xf32>
    %c0_508 = arith.constant 0 : index
    %c7_509 = arith.constant 7 : index
    %896 = vector.load %arg10[%c0_508, %c7_509] : memref<8x25xf32, #tpu.memory_space<vmem>>, vector<8x1xf32>
    %897 = vector.broadcast %896 : vector<8x1xf32> to vector<8x256xf32>
    %898 = arith.mulf %895, %897 : vector<8x256xf32>
    %899 = arith.addf %894, %898 : vector<8x256xf32>
    %c0_510 = arith.constant 0 : index
    %c113_511 = arith.constant 113 : index
    %900 = vector.load %arg19[%c0_510, %c113_511] : memref<8x512xf32, #tpu.memory_space<vmem>>, vector<8x256xf32>
    %cst_512 = arith.constant 0.000000e+00 : f32
    %901 = vector.broadcast %cst_512 : f32 to vector<8x256xf32>
    %902 = arith.select %846, %900, %901 : vector<8x256xi1>, vector<8x256xf32>
    %c0_513 = arith.constant 0 : index
    %c8_514 = arith.constant 8 : index
    %903 = vector.load %arg10[%c0_513, %c8_514] : memref<8x25xf32, #tpu.memory_space<vmem>>, vector<8x1xf32>
    %904 = vector.broadcast %903 : vector<8x1xf32> to vector<8x256xf32>
    %905 = arith.mulf %902, %904 : vector<8x256xf32>
    %906 = arith.addf %899, %905 : vector<8x256xf32>
    %c0_515 = arith.constant 0 : index
    %c114_516 = arith.constant 114 : index
    %907 = vector.load %arg19[%c0_515, %c114_516] : memref<8x512xf32, #tpu.memory_space<vmem>>, vector<8x256xf32>
    %cst_517 = arith.constant 0.000000e+00 : f32
    %908 = vector.broadcast %cst_517 : f32 to vector<8x256xf32>
    %909 = arith.select %848, %907, %908 : vector<8x256xi1>, vector<8x256xf32>
    %c0_518 = arith.constant 0 : index
    %c9_519 = arith.constant 9 : index
    %910 = vector.load %arg10[%c0_518, %c9_519] : memref<8x25xf32, #tpu.memory_space<vmem>>, vector<8x1xf32>
    %911 = vector.broadcast %910 : vector<8x1xf32> to vector<8x256xf32>
    %912 = arith.mulf %909, %911 : vector<8x256xf32>
    %913 = arith.addf %906, %912 : vector<8x256xf32>
    %c0_520 = arith.constant 0 : index
    %c126_521 = arith.constant 126 : index
    %914 = vector.load %arg19[%c0_520, %c126_521] : memref<8x512xf32, #tpu.memory_space<vmem>>, vector<8x256xf32>
    %cst_522 = arith.constant 0.000000e+00 : f32
    %915 = vector.broadcast %cst_522 : f32 to vector<8x256xf32>
    %916 = arith.select %842, %914, %915 : vector<8x256xi1>, vector<8x256xf32>
    %c0_523 = arith.constant 0 : index
    %c10_524 = arith.constant 10 : index
    %917 = vector.load %arg10[%c0_523, %c10_524] : memref<8x25xf32, #tpu.memory_space<vmem>>, vector<8x1xf32>
    %918 = vector.broadcast %917 : vector<8x1xf32> to vector<8x256xf32>
    %919 = arith.mulf %916, %918 : vector<8x256xf32>
    %920 = arith.addf %913, %919 : vector<8x256xf32>
    %c0_525 = arith.constant 0 : index
    %c127_526 = arith.constant 127 : index
    %921 = vector.load %arg19[%c0_525, %c127_526] : memref<8x512xf32, #tpu.memory_space<vmem>>, vector<8x256xf32>
    %cst_527 = arith.constant 0.000000e+00 : f32
    %922 = vector.broadcast %cst_527 : f32 to vector<8x256xf32>
    %923 = arith.select %844, %921, %922 : vector<8x256xi1>, vector<8x256xf32>
    %c0_528 = arith.constant 0 : index
    %c11_529 = arith.constant 11 : index
    %924 = vector.load %arg10[%c0_528, %c11_529] : memref<8x25xf32, #tpu.memory_space<vmem>>, vector<8x1xf32>
    %925 = vector.broadcast %924 : vector<8x1xf32> to vector<8x256xf32>
    %926 = arith.mulf %923, %925 : vector<8x256xf32>
    %927 = arith.addf %920, %926 : vector<8x256xf32>
    %c0_530 = arith.constant 0 : index
    %c128_531 = arith.constant 128 : index
    %928 = vector.load %arg19[%c0_530, %c128_531] : memref<8x512xf32, #tpu.memory_space<vmem>>, vector<8x256xf32>
    %c0_532 = arith.constant 0 : index
    %c12_533 = arith.constant 12 : index
    %929 = vector.load %arg10[%c0_532, %c12_533] : memref<8x25xf32, #tpu.memory_space<vmem>>, vector<8x1xf32>
    %930 = vector.broadcast %929 : vector<8x1xf32> to vector<8x256xf32>
    %931 = arith.mulf %928, %930 : vector<8x256xf32>
    %932 = arith.addf %927, %931 : vector<8x256xf32>
    %c0_534 = arith.constant 0 : index
    %c129_535 = arith.constant 129 : index
    %933 = vector.load %arg19[%c0_534, %c129_535] : memref<8x512xf32, #tpu.memory_space<vmem>>, vector<8x256xf32>
    %cst_536 = arith.constant 0.000000e+00 : f32
    %934 = vector.broadcast %cst_536 : f32 to vector<8x256xf32>
    %935 = arith.select %846, %933, %934 : vector<8x256xi1>, vector<8x256xf32>
    %c0_537 = arith.constant 0 : index
    %c13_538 = arith.constant 13 : index
    %936 = vector.load %arg10[%c0_537, %c13_538] : memref<8x25xf32, #tpu.memory_space<vmem>>, vector<8x1xf32>
    %937 = vector.broadcast %936 : vector<8x1xf32> to vector<8x256xf32>
    %938 = arith.mulf %935, %937 : vector<8x256xf32>
    %939 = arith.addf %932, %938 : vector<8x256xf32>
    %c0_539 = arith.constant 0 : index
    %c130_540 = arith.constant 130 : index
    %940 = vector.load %arg19[%c0_539, %c130_540] : memref<8x512xf32, #tpu.memory_space<vmem>>, vector<8x256xf32>
    %cst_541 = arith.constant 0.000000e+00 : f32
    %941 = vector.broadcast %cst_541 : f32 to vector<8x256xf32>
    %942 = arith.select %848, %940, %941 : vector<8x256xi1>, vector<8x256xf32>
    %c0_542 = arith.constant 0 : index
    %c14_543 = arith.constant 14 : index
    %943 = vector.load %arg10[%c0_542, %c14_543] : memref<8x25xf32, #tpu.memory_space<vmem>>, vector<8x1xf32>
    %944 = vector.broadcast %943 : vector<8x1xf32> to vector<8x256xf32>
    %945 = arith.mulf %942, %944 : vector<8x256xf32>
    %946 = arith.addf %939, %945 : vector<8x256xf32>
    %c0_544 = arith.constant 0 : index
    %c142_545 = arith.constant 142 : index
    %947 = vector.load %arg19[%c0_544, %c142_545] : memref<8x512xf32, #tpu.memory_space<vmem>>, vector<8x256xf32>
    %cst_546 = arith.constant 0.000000e+00 : f32
    %948 = vector.broadcast %cst_546 : f32 to vector<8x256xf32>
    %949 = arith.select %842, %947, %948 : vector<8x256xi1>, vector<8x256xf32>
    %c0_547 = arith.constant 0 : index
    %c15_548 = arith.constant 15 : index
    %950 = vector.load %arg10[%c0_547, %c15_548] : memref<8x25xf32, #tpu.memory_space<vmem>>, vector<8x1xf32>
    %951 = vector.broadcast %950 : vector<8x1xf32> to vector<8x256xf32>
    %952 = arith.mulf %949, %951 : vector<8x256xf32>
    %953 = arith.addf %946, %952 : vector<8x256xf32>
    %c0_549 = arith.constant 0 : index
    %c143_550 = arith.constant 143 : index
    %954 = vector.load %arg19[%c0_549, %c143_550] : memref<8x512xf32, #tpu.memory_space<vmem>>, vector<8x256xf32>
    %cst_551 = arith.constant 0.000000e+00 : f32
    %955 = vector.broadcast %cst_551 : f32 to vector<8x256xf32>
    %956 = arith.select %844, %954, %955 : vector<8x256xi1>, vector<8x256xf32>
    %c0_552 = arith.constant 0 : index
    %c16_553 = arith.constant 16 : index
    %957 = vector.load %arg10[%c0_552, %c16_553] : memref<8x25xf32, #tpu.memory_space<vmem>>, vector<8x1xf32>
    %958 = vector.broadcast %957 : vector<8x1xf32> to vector<8x256xf32>
    %959 = arith.mulf %956, %958 : vector<8x256xf32>
    %960 = arith.addf %953, %959 : vector<8x256xf32>
    %c0_554 = arith.constant 0 : index
    %c144_555 = arith.constant 144 : index
    %961 = vector.load %arg19[%c0_554, %c144_555] : memref<8x512xf32, #tpu.memory_space<vmem>>, vector<8x256xf32>
    %c0_556 = arith.constant 0 : index
    %c17_557 = arith.constant 17 : index
    %962 = vector.load %arg10[%c0_556, %c17_557] : memref<8x25xf32, #tpu.memory_space<vmem>>, vector<8x1xf32>
    %963 = vector.broadcast %962 : vector<8x1xf32> to vector<8x256xf32>
    %964 = arith.mulf %961, %963 : vector<8x256xf32>
    %965 = arith.addf %960, %964 : vector<8x256xf32>
    %c0_558 = arith.constant 0 : index
    %c145_559 = arith.constant 145 : index
    %966 = vector.load %arg19[%c0_558, %c145_559] : memref<8x512xf32, #tpu.memory_space<vmem>>, vector<8x256xf32>
    %cst_560 = arith.constant 0.000000e+00 : f32
    %967 = vector.broadcast %cst_560 : f32 to vector<8x256xf32>
    %968 = arith.select %846, %966, %967 : vector<8x256xi1>, vector<8x256xf32>
    %c0_561 = arith.constant 0 : index
    %c18_562 = arith.constant 18 : index
    %969 = vector.load %arg10[%c0_561, %c18_562] : memref<8x25xf32, #tpu.memory_space<vmem>>, vector<8x1xf32>
    %970 = vector.broadcast %969 : vector<8x1xf32> to vector<8x256xf32>
    %971 = arith.mulf %968, %970 : vector<8x256xf32>
    %972 = arith.addf %965, %971 : vector<8x256xf32>
    %c0_563 = arith.constant 0 : index
    %c146_564 = arith.constant 146 : index
    %973 = vector.load %arg19[%c0_563, %c146_564] : memref<8x512xf32, #tpu.memory_space<vmem>>, vector<8x256xf32>
    %cst_565 = arith.constant 0.000000e+00 : f32
    %974 = vector.broadcast %cst_565 : f32 to vector<8x256xf32>
    %975 = arith.select %848, %973, %974 : vector<8x256xi1>, vector<8x256xf32>
    %c0_566 = arith.constant 0 : index
    %c19_567 = arith.constant 19 : index
    %976 = vector.load %arg10[%c0_566, %c19_567] : memref<8x25xf32, #tpu.memory_space<vmem>>, vector<8x1xf32>
    %977 = vector.broadcast %976 : vector<8x1xf32> to vector<8x256xf32>
    %978 = arith.mulf %975, %977 : vector<8x256xf32>
    %979 = arith.addf %972, %978 : vector<8x256xf32>
    %c0_568 = arith.constant 0 : index
    %c158_569 = arith.constant 158 : index
    %980 = vector.load %arg19[%c0_568, %c158_569] : memref<8x512xf32, #tpu.memory_space<vmem>>, vector<8x256xf32>
    %cst_570 = arith.constant 0.000000e+00 : f32
    %981 = vector.broadcast %cst_570 : f32 to vector<8x256xf32>
    %982 = arith.select %842, %980, %981 : vector<8x256xi1>, vector<8x256xf32>
    %c0_571 = arith.constant 0 : index
    %c20_572 = arith.constant 20 : index
    %983 = vector.load %arg10[%c0_571, %c20_572] : memref<8x25xf32, #tpu.memory_space<vmem>>, vector<8x1xf32>
    %984 = vector.broadcast %983 : vector<8x1xf32> to vector<8x256xf32>
    %985 = arith.mulf %982, %984 : vector<8x256xf32>
    %986 = arith.addf %979, %985 : vector<8x256xf32>
    %c0_573 = arith.constant 0 : index
    %c159_574 = arith.constant 159 : index
    %987 = vector.load %arg19[%c0_573, %c159_574] : memref<8x512xf32, #tpu.memory_space<vmem>>, vector<8x256xf32>
    %cst_575 = arith.constant 0.000000e+00 : f32
    %988 = vector.broadcast %cst_575 : f32 to vector<8x256xf32>
    %989 = arith.select %844, %987, %988 : vector<8x256xi1>, vector<8x256xf32>
    %c0_576 = arith.constant 0 : index
    %c21_577 = arith.constant 21 : index
    %990 = vector.load %arg10[%c0_576, %c21_577] : memref<8x25xf32, #tpu.memory_space<vmem>>, vector<8x1xf32>
    %991 = vector.broadcast %990 : vector<8x1xf32> to vector<8x256xf32>
    %992 = arith.mulf %989, %991 : vector<8x256xf32>
    %993 = arith.addf %986, %992 : vector<8x256xf32>
    %c0_578 = arith.constant 0 : index
    %c160_579 = arith.constant 160 : index
    %994 = vector.load %arg19[%c0_578, %c160_579] : memref<8x512xf32, #tpu.memory_space<vmem>>, vector<8x256xf32>
    %c0_580 = arith.constant 0 : index
    %c22_581 = arith.constant 22 : index
    %995 = vector.load %arg10[%c0_580, %c22_581] : memref<8x25xf32, #tpu.memory_space<vmem>>, vector<8x1xf32>
    %996 = vector.broadcast %995 : vector<8x1xf32> to vector<8x256xf32>
    %997 = arith.mulf %994, %996 : vector<8x256xf32>
    %998 = arith.addf %993, %997 : vector<8x256xf32>
    %c0_582 = arith.constant 0 : index
    %c161_583 = arith.constant 161 : index
    %999 = vector.load %arg19[%c0_582, %c161_583] : memref<8x512xf32, #tpu.memory_space<vmem>>, vector<8x256xf32>
    %cst_584 = arith.constant 0.000000e+00 : f32
    %1000 = vector.broadcast %cst_584 : f32 to vector<8x256xf32>
    %1001 = arith.select %846, %999, %1000 : vector<8x256xi1>, vector<8x256xf32>
    %c0_585 = arith.constant 0 : index
    %c23_586 = arith.constant 23 : index
    %1002 = vector.load %arg10[%c0_585, %c23_586] : memref<8x25xf32, #tpu.memory_space<vmem>>, vector<8x1xf32>
    %1003 = vector.broadcast %1002 : vector<8x1xf32> to vector<8x256xf32>
    %1004 = arith.mulf %1001, %1003 : vector<8x256xf32>
    %1005 = arith.addf %998, %1004 : vector<8x256xf32>
    %c0_587 = arith.constant 0 : index
    %c162_588 = arith.constant 162 : index
    %1006 = vector.load %arg19[%c0_587, %c162_588] : memref<8x512xf32, #tpu.memory_space<vmem>>, vector<8x256xf32>
    %cst_589 = arith.constant 0.000000e+00 : f32
    %1007 = vector.broadcast %cst_589 : f32 to vector<8x256xf32>
    %1008 = arith.select %848, %1006, %1007 : vector<8x256xi1>, vector<8x256xf32>
    %c0_590 = arith.constant 0 : index
    %c24_591 = arith.constant 24 : index
    %1009 = vector.load %arg10[%c0_590, %c24_591] : memref<8x25xf32, #tpu.memory_space<vmem>>, vector<8x1xf32>
    %1010 = vector.broadcast %1009 : vector<8x1xf32> to vector<8x256xf32>
    %1011 = arith.mulf %1008, %1010 : vector<8x256xf32>
    %1012 = arith.addf %1005, %1011 : vector<8x256xf32>
    %c0_592 = arith.constant 0 : index
    %c0_593 = arith.constant 0 : index
    %1013 = vector.load %arg11[%c0_592, %c0_593] : memref<8x8xf32, #tpu.memory_space<vmem>>, vector<8x8xf32>
    %cst_594 = arith.constant dense<0.000000e+00> : vector<8x256xf32>
    %1014 = tpu.matmul %1013, %1012, %cst_594 {dimension_numbers = #tpu.dot_dimension_numbers<[1], [0], [0], [1], [0, 0, 1, 1], [], []>} : vector<8x8xf32>, vector<8x256xf32>, vector<8x256xf32> -> vector<8x256xf32>
    %cst_595 = arith.constant dense<0.000000e+00> : vector<8x256xf32>
    %1015 = tpu.matmul %6, %1014, %cst_595 {dimension_numbers = #tpu.dot_dimension_numbers<[1], [0], [0], [1], [0, 0, 1, 1], [], []>} : vector<8x8xf32>, vector<8x256xf32>, vector<8x256xf32> -> vector<8x256xf32>
    %1016 = arith.mulf %1014, %1014 : vector<8x256xf32>
    %cst_596 = arith.constant dense<0.000000e+00> : vector<8x256xf32>
    %1017 = tpu.matmul %6, %1016, %cst_596 {dimension_numbers = #tpu.dot_dimension_numbers<[1], [0], [0], [1], [0, 0, 1, 1], [], []>} : vector<8x8xf32>, vector<8x256xf32>, vector<8x256xf32> -> vector<8x256xf32>
    %cst_597 = arith.constant dense<0.000000e+00> : vector<8xf32>
    %1018 = vector.multi_reduction <add>, %1015, %cst_597 [1] : vector<8x256xf32> to vector<8xf32>
    %1019 = vector.shape_cast %1018 : vector<8xf32> to vector<8x1xf32>
    %cst_598 = arith.constant 0.001953125 : f32
    %1020 = vector.broadcast %cst_598 : f32 to vector<8x1xf32>
    %1021 = arith.mulf %1019, %1020 : vector<8x1xf32>
    %cst_599 = arith.constant dense<0.000000e+00> : vector<8xf32>
    %1022 = vector.multi_reduction <add>, %1017, %cst_599 [1] : vector<8x256xf32> to vector<8xf32>
    %1023 = vector.shape_cast %1022 : vector<8xf32> to vector<8x1xf32>
    %cst_600 = arith.constant 0.001953125 : f32
    %1024 = vector.broadcast %cst_600 : f32 to vector<8x1xf32>
    %1025 = arith.mulf %1023, %1024 : vector<8x1xf32>
    %1026 = arith.mulf %1021, %1021 : vector<8x1xf32>
    %1027 = arith.subf %1025, %1026 : vector<8x1xf32>
    %1028 = vector.broadcast %1021 : vector<8x1xf32> to vector<8x256xf32>
    %1029 = arith.subf %1014, %1028 : vector<8x256xf32>
    %cst_601 = arith.constant 9.99999974E-6 : f32
    %1030 = vector.broadcast %cst_601 : f32 to vector<8x1xf32>
    %1031 = arith.addf %1027, %1030 : vector<8x1xf32>
    %1032 = math.rsqrt %1031 : vector<8x1xf32>
    %1033 = vector.broadcast %1032 : vector<8x1xf32> to vector<8x256xf32>
    %1034 = arith.mulf %1029, %1033 : vector<8x256xf32>
    %1035 = vector.broadcast %840 : f32 to vector<8x256xf32>
    %1036 = arith.mulf %1035, %1034 : vector<8x256xf32>
    %1037 = arith.addf %839, %1036 : vector<8x256xf32>
    %c0_602 = arith.constant 0 : index
    %c0_603 = arith.constant 0 : index
    %1038 = vector.load %arg16[%c0_602, %c0_603] : memref<8x256xf32, #tpu.memory_space<vmem>>, vector<8x256xf32>
    tpu.vector_store %arg16[%c0_602, %c0_603], %1037 {strides = array<i32>} : memref<8x256xf32, #tpu.memory_space<vmem>>, vector<8x256xf32>,
    return
  }
}

</mosaic_0001>

<llo_original>
// kernel: mixed_op_forward.1
$region0: #{mixed_op_forward.1}
  #allocation0 [shape = 'u32[]', space=smem, size = 0x4, offset = 0x4, fixed_abs, tag = 'smem constant byte address 0x4 - core index']
  #allocation1 [shape = 'u32[144,128]{1,0:T(1,128)}', space=vmem, size = 0x12000, scoped, tag = 'internal scratch']
  #allocation2 [shape = 'f32[8,512]{1,0:T(8,128)}', space=vmem, size = 0x4000, scoped, tag = 'scratch operand']
  #allocation3 [shape = 'f32[8,512]{1,0:T(8,128)}', space=vmem, size = 0x4000, scoped, tag = 'scratch operand']
  #allocation4 [shape = 'f32[8,512]{1,0:T(8,128)}', space=vmem, size = 0x4000, scoped, tag = 'scratch operand']
  %s0 = inlined_call_operand.vmem [shape: f32[7], index: 0, kind: input, shape index: {}]
  %s1 = inlined_call_operand.vmem [shape: f32[8,512], index: 1, kind: input, shape index: {}]
  %s2 = inlined_call_operand.vmem [shape: s32[2,256], index: 2, kind: input, shape index: {}]
  %s3 = inlined_call_operand.vmem [shape: f32[8,8], index: 3, kind: input, shape index: {}]
  %s4 = inlined_call_operand.vmem [shape: f32[8,9], index: 4, kind: input, shape index: {}]
  %s5 = inlined_call_operand.vmem [shape: f32[8,8], index: 5, kind: input, shape index: {}]
  %s6 = inlined_call_operand.vmem [shape: f32[8,9], index: 6, kind: input, shape index: {}]
  %s7 = inlined_call_operand.vmem [shape: f32[8,8], index: 7, kind: input, shape index: {}]
  %s8 = inlined_call_operand.vmem [shape: f32[8,25], index: 8, kind: input, shape index: {}]
  %s9 = inlined_call_operand.vmem [shape: f32[8,8], index: 9, kind: input, shape index: {}]
  %s10 = inlined_call_operand.vmem [shape: f32[8,25], index: 10, kind: input, shape index: {}]
  %s11 = inlined_call_operand.vmem [shape: f32[8,8], index: 11, kind: input, shape index: {}]
  %s12 = inlined_call_operand.vmem [shape: f32[8,9], index: 12, kind: input, shape index: {}]
  %s13 = inlined_call_operand.vmem [shape: f32[8,8], index: 13, kind: input, shape index: {}]
  %s14 = inlined_call_operand.vmem [shape: f32[8,25], index: 14, kind: input, shape index: {}]
  %s15 = inlined_call_operand.vmem [shape: f32[8,8], index: 15, kind: input, shape index: {}]
  %s16 = inlined_call_operand.vmem [shape: f32[8,256], index: 16, kind: output, shape index: {}]
  %s17 = sld [smem:[#allocation0]]
  $region78: #{mixed_op_forward.1} parent=0
    _
  %s19 = ssub.s32 1, %s17
  %s20 = scalar_select 0, %s19, %s17
  $region1: #{mixed_op_forward.1} parent=0
    #allocation5 [shape = 'u8[512]{0}', space=smem, size = 0x200, scoped, tag = 'input window, operand 0, single buffered']
    #allocation6 [shape = 's32[1]{0}', space=sflag, size = 0x4, scoped, tag = 'scoped memory for mixed_op_forward.1']
    %21 = vsyncpa [#allocation6], 0
    // Predicated region
    $region2: #{mixed_op_forward.1} parent=1 // pred_check
      _
    $region3: #{mixed_op_forward.1} parent=1 // pred_check_branch
      %23 = sbr.rel (0) target = $region5
    $region4: #{mixed_op_forward.1} parent=1 // pred_region
      %s25 = ssub.s32 16, 16
      %26 = vsyncadd [#allocation6], %s25
      %s28 = sshll.u32 %s0, 4
      %s29 = int_to_ptr.vmem [resolvable:$true] %s28
      %31 = dma.vmem_to_smem %s29, 16, [#allocation5], [#allocation6]
    $region5: #{mixed_op_forward.1} parent=1 // pred_fallthru
      _
    // Predicated region
    $region6: #{mixed_op_forward.1} parent=1 // pred_check
      _
    $region7: #{mixed_op_forward.1} parent=1 // pred_check_branch
      %33 = sbr.rel (0) target = $region9
    $region8: #{mixed_op_forward.1} parent=1 // pred_region
      _
    $region9: #{mixed_op_forward.1} parent=1 // pred_fallthru
      _
    // Predicated region
    $region10: #{mixed_op_forward.1} parent=1 // pred_check
      _
    $region11: #{mixed_op_forward.1} parent=1 // pred_check_branch
      %35 = sbr.rel (0) target = $region13
    $region12: #{mixed_op_forward.1} parent=1 // pred_region
      _
    $region13: #{mixed_op_forward.1} parent=1 // pred_fallthru
      _
    // Predicated region
    $region14: #{mixed_op_forward.1} parent=1 // pred_check
      _
    $region15: #{mixed_op_forward.1} parent=1 // pred_check_branch
      %37 = sbr.rel (0) target = $region17
    $region16: #{mixed_op_forward.1} parent=1 // pred_region
      _
    $region17: #{mixed_op_forward.1} parent=1 // pred_fallthru
      _
    // Predicated region
    $region18: #{mixed_op_forward.1} parent=1 // pred_check
      _
    $region19: #{mixed_op_forward.1} parent=1 // pred_check_branch
      %39 = sbr.rel (0) target = $region21
    $region20: #{mixed_op_forward.1} parent=1 // pred_region
      _
    $region21: #{mixed_op_forward.1} parent=1 // pred_fallthru
      _
    // Predicated region
    $region22: #{mixed_op_forward.1} parent=1 // pred_check
      _
    $region23: #{mixed_op_forward.1} parent=1 // pred_check_branch
      %41 = sbr.rel (0) target = $region25
    $region24: #{mixed_op_forward.1} parent=1 // pred_region
      _
    $region25: #{mixed_op_forward.1} parent=1 // pred_fallthru
      _
    // Predicated region
    $region26: #{mixed_op_forward.1} parent=1 // pred_check
      _
    $region27: #{mixed_op_forward.1} parent=1 // pred_check_branch
      %43 = sbr.rel (0) target = $region29
    $region28: #{mixed_op_forward.1} parent=1 // pred_region
      _
    $region29: #{mixed_op_forward.1} parent=1 // pred_fallthru
      _
    // Predicated region
    $region30: #{mixed_op_forward.1} parent=1 // pred_check
      _
    $region31: #{mixed_op_forward.1} parent=1 // pred_check_branch
      %45 = sbr.rel (0) target = $region33
    $region32: #{mixed_op_forward.1} parent=1 // pred_region
      _
    $region33: #{mixed_op_forward.1} parent=1 // pred_fallthru
      _
    // Predicated region
    $region34: #{mixed_op_forward.1} parent=1 // pred_check
      _
    $region35: #{mixed_op_forward.1} parent=1 // pred_check_branch
      %47 = sbr.rel (0) target = $region37
    $region36: #{mixed_op_forward.1} parent=1 // pred_region
      _
    $region37: #{mixed_op_forward.1} parent=1 // pred_fallthru
      _
    // Predicated region
    $region38: #{mixed_op_forward.1} parent=1 // pred_check
      _
    $region39: #{mixed_op_forward.1} parent=1 // pred_check_branch
      %49 = sbr.rel (0) target = $region41
    $region40: #{mixed_op_forward.1} parent=1 // pred_region
      _
    $region41: #{mixed_op_forward.1} parent=1 // pred_fallthru
      _
    // Predicated region
    $region42: #{mixed_op_forward.1} parent=1 // pred_check
      _
    $region43: #{mixed_op_forward.1} parent=1 // pred_check_branch
      %51 = sbr.rel (0) target = $region45
    $region44: #{mixed_op_forward.1} parent=1 // pred_region
      _
    $region45: #{mixed_op_forward.1} parent=1 // pred_fallthru
      _
    // Predicated region
    $region46: #{mixed_op_forward.1} parent=1 // pred_check
      _
    $region47: #{mixed_op_forward.1} parent=1 // pred_check_branch
      %53 = sbr.rel (0) target = $region49
    $region48: #{mixed_op_forward.1} parent=1 // pred_region
      _
    $region49: #{mixed_op_forward.1} parent=1 // pred_fallthru
      _
    // Predicated region
    $region50: #{mixed_op_forward.1} parent=1 // pred_check
      _
    $region51: #{mixed_op_forward.1} parent=1 // pred_check_branch
      %55 = sbr.rel (0) target = $region53
    $region52: #{mixed_op_forward.1} parent=1 // pred_region
      _
    $region53: #{mixed_op_forward.1} parent=1 // pred_fallthru
      _
    // Predicated region
    $region54: #{mixed_op_forward.1} parent=1 // pred_check
      _
    $region55: #{mixed_op_forward.1} parent=1 // pred_check_branch
      %57 = sbr.rel (0) target = $region57
    $region56: #{mixed_op_forward.1} parent=1 // pred_region
      _
    $region57: #{mixed_op_forward.1} parent=1 // pred_fallthru
      _
    // Predicated region
    $region58: #{mixed_op_forward.1} parent=1 // pred_check
      _
    $region59: #{mixed_op_forward.1} parent=1 // pred_check_branch
      %59 = sbr.rel (0) target = $region61
    $region60: #{mixed_op_forward.1} parent=1 // pred_region
      _
    $region61: #{mixed_op_forward.1} parent=1 // pred_fallthru
      _
    // Predicated region
    $region62: #{mixed_op_forward.1} parent=1 // pred_check
      _
    $region63: #{mixed_op_forward.1} parent=1 // pred_check_branch
      %61 = sbr.rel (0) target = $region65
    $region64: #{mixed_op_forward.1} parent=1 // pred_region
      _
    $region65: #{mixed_op_forward.1} parent=1 // pred_fallthru
      _
    // Predicated region
    $region66: #{mixed_op_forward.1} parent=1 // pred_check
      _
    $region67: #{mixed_op_forward.1} parent=1 // pred_check_branch
      %63 = sbr.rel (0) target = $region69
    $region68: #{mixed_op_forward.1} parent=1 // pred_region
      %64 = dma.done [#allocation6], 16
    $region69: #{mixed_op_forward.1} parent=1 // pred_fallthru
      _
    %65 = sfence
    %v66 = vld [vmem:[%s2] ss:$2 sm:$0x3]
    %v67 = vlaneseq
    %v68 = vshrl.u32 %v67, 7
    %v69 = vsub.s32 0, %v68
    %v70 = vrot.slane %v66, %v69
    %v71 = vlaneseq
    %v72 = vshrl.u32 %v71, 7
    %v73 = vsub.s32 1, %v72
    %v74 = vrot.slane %v66, %v73
    %s75 = scalar_lea.vmem %s2, 1
    %v76 = vld [vmem:[%s75] ss:$2 sm:$0x3]
    %v77 = vlaneseq
    %v78 = vshrl.u32 %v77, 7
    %v79 = vsub.s32 0, %v78
    %v80 = vrot.slane %v76, %v79
    %v81 = vlaneseq
    %v82 = vshrl.u32 %v81, 7
    %v83 = vsub.s32 1, %v82
    %v84 = vrot.slane %v76, %v83
    %v85 = vld [vmem:[%s3] sm:$0xff]
    %v86 = vld [vmem:[%s1 + $0x8] sm:$0xff]
    %v87 = vld [vmem:[%s1 + $0x10] sm:$0xff]
    %s88 = sld [smem:[#allocation5 + $0x2]]
    %v89 = vstv %s88
    %v90 = vmul.f32 %v89, %v86
    %v91 = vmul.f32 %v89, %v87
    %v92 = vld [vmem:[%s1] sm:$0xff]
    %vm93 = vcmp.ge.s32.totalorder %v70, 1
    %vm94 = vcmp.ge.s32.totalorder %v74, 1
    %vm95 = vcmp.ge.s32.totalorder %v80, 1
    %vm96 = vcmp.ge.s32.totalorder %v84, 1
    %vm97 = vmand %vm93, %vm95
    %vm98 = vmand %vm94, %vm96
    %102 = vrot.lane.b32.xlu0 %v92, 17
    %v103 = vpop.permute.xlu0 %102
    %104 = vrot.lane.b32.xlu0 %v86, 17
    %v105 = vpop.permute.xlu0 %104
    %106 = vrot.lane.b32.xlu0 %v87, 17
    %v107 = vpop.permute.xlu0 %106
    %vm108 = vcmask 138240
    %v109 = vsel %vm108, %v103, %v105
    %v110 = vsel %vm108, %v105, %v107
    %v113 = vsel %vm97, %v109, -3.4028235e+38
    %v114 = vsel %vm98, %v110, -3.4028235e+38
    %v115 = vsel %vm97, %v109, 0.0
    %v116 = vsel %vm98, %v110, 0.0
    %v117 = vsel %vm97, 1.0, 0.0
    %v118 = vsel %vm98, 1.0, 0.0
    %119 = vrot.lane.b32.xlu0 %v92, 16
    %v120 = vpop.permute.xlu0 %119
    %121 = vrot.lane.b32.xlu0 %v86, 16
    %v122 = vpop.permute.xlu0 %121
    %123 = vrot.lane.b32.xlu0 %v87, 16
    %v124 = vpop.permute.xlu0 %123
    %vm125 = vcmask 130048
    %v126 = vsel %vm125, %v120, %v122
    %v127 = vsel %vm125, %v122, %v124
    %v130 = vsel %vm93, %v126, -3.4028235e+38
    %v131 = vsel %vm94, %v127, -3.4028235e+38
    %v132 = vsel %vm93, %v126, 0.0
    %v133 = vsel %vm94, %v127, 0.0
    %v134 = vsel %vm93, 1.0, 0.0
    %v135 = vsel %vm94, 1.0, 0.0
    %v136 = vmax.f32 %v113, %v130
    %v137 = vmax.f32 %v114, %v131
    %v138 = vadd.f32 %v115, %v132
    %v139 = vadd.f32 %v116, %v133
    %v140 = vadd.f32 %v117, %v134
    %v141 = vadd.f32 %v118, %v135
    %vm142 = vcmp.lt.s32.totalorder %v80, 15
    %vm143 = vcmp.lt.s32.totalorder %v84, 15
    %vm144 = vmand %vm93, %vm142
    %vm145 = vmand %vm94, %vm143
    %146 = vrot.lane.b32.xlu0 %v92, 15
    %v147 = vpop.permute.xlu0 %146
    %148 = vrot.lane.b32.xlu0 %v86, 15
    %v149 = vpop.permute.xlu0 %148
    %150 = vrot.lane.b32.xlu0 %v87, 15
    %v151 = vpop.permute.xlu0 %150
    %vm152 = vcmask 121856
    %v153 = vsel %vm152, %v147, %v149
    %v154 = vsel %vm152, %v149, %v151
    %v157 = vsel %vm144, %v153, -3.4028235e+38
    %v158 = vsel %vm145, %v154, -3.4028235e+38
    %v159 = vsel %vm144, %v153, 0.0
    %v160 = vsel %vm145, %v154, 0.0
    %v161 = vsel %vm144, 1.0, 0.0
    %v162 = vsel %vm145, 1.0, 0.0
    %v163 = vmax.f32 %v136, %v157
    %v164 = vmax.f32 %v137, %v158
    %v165 = vadd.f32 %v138, %v159
    %v166 = vadd.f32 %v139, %v160
    %v167 = vadd.f32 %v140, %v161
    %v168 = vadd.f32 %v141, %v162
    %169 = vrot.lane.b32.xlu0 %v92, 1
    %v170 = vpop.permute.xlu0 %169
    %171 = vrot.lane.b32.xlu0 %v86, 1
    %v172 = vpop.permute.xlu0 %171
    %173 = vrot.lane.b32.xlu0 %v87, 1
    %v174 = vpop.permute.xlu0 %173
    %vm175 = vcmask 7168
    %v176 = vsel %vm175, %v170, %v172
    %v177 = vsel %vm175, %v172, %v174
    %v180 = vsel %vm95, %v176, -3.4028235e+38
    %v181 = vsel %vm96, %v177, -3.4028235e+38
    %v182 = vsel %vm95, %v176, 0.0
    %v183 = vsel %vm96, %v177, 0.0
    %v184 = vsel %vm95, 1.0, 0.0
    %v185 = vsel %vm96, 1.0, 0.0
    %v186 = vmax.f32 %v163, %v180
    %v187 = vmax.f32 %v164, %v181
    %v188 = vadd.f32 %v165, %v182
    %v189 = vadd.f32 %v166, %v183
    %v190 = vadd.f32 %v167, %v184
    %v191 = vadd.f32 %v168, %v185
    %v192 = vmax.f32 %v186, %v86
    %v193 = vmax.f32 %v187, %v87
    %v194 = vadd.f32 %v188, %v86
    %v195 = vadd.f32 %v189, %v87
    %v196 = vadd.f32 %v190, 1.0
    %v197 = vadd.f32 %v191, 1.0
    %v198 = vld [vmem:[%s1 + $0x8] sm:$0xff]
    %v199 = vld [vmem:[%s1 + $0x10] sm:$0xff]
    %v200 = vld [vmem:[%s1 + $0x18] sm:$0xff]
    %204 = vrot.lane.b32.xlu0 %v198, 127
    %v205 = vpop.permute.xlu0 %204
    %206 = vrot.lane.b32.xlu0 %v199, 127
    %v207 = vpop.permute.xlu0 %206
    %208 = vrot.lane.b32.xlu0 %v200, 127
    %v209 = vpop.permute.xlu0 %208
    %vm210 = vcmask 1039360
    %v211 = vsel %vm210, %v205, %v207
    %v212 = vsel %vm210, %v207, %v209
    %v215 = vsel %vm142, %v211, -3.4028235e+38
    %v216 = vsel %vm143, %v212, -3.4028235e+38
    %v217 = vsel %vm142, %v211, 0.0
    %v218 = vsel %vm143, %v212, 0.0
    %v219 = vsel %vm142, 1.0, 0.0
    %v220 = vsel %vm143, 1.0, 0.0
    %v221 = vmax.f32 %v192, %v215
    %v222 = vmax.f32 %v193, %v216
    %v223 = vadd.f32 %v194, %v217
    %v224 = vadd.f32 %v195, %v218
    %v225 = vadd.f32 %v196, %v219
    %v226 = vadd.f32 %v197, %v220
    %vm227 = vcmp.lt.s32.totalorder %v70, 15
    %vm228 = vcmp.lt.s32.totalorder %v74, 15
    %vm229 = vmand %vm227, %vm95
    %vm230 = vmand %vm228, %vm96
    %231 = vrot.lane.b32.xlu0 %v198, 113
    %v232 = vpop.permute.xlu0 %231
    %233 = vrot.lane.b32.xlu0 %v199, 113
    %v234 = vpop.permute.xlu0 %233
    %235 = vrot.lane.b32.xlu0 %v200, 113
    %v236 = vpop.permute.xlu0 %235
    %vm237 = vcmask 924672
    %v238 = vsel %vm237, %v232, %v234
    %v239 = vsel %vm237, %v234, %v236
    %v242 = vsel %vm229, %v238, -3.4028235e+38
    %v243 = vsel %vm230, %v239, -3.4028235e+38
    %v244 = vsel %vm229, %v238, 0.0
    %v245 = vsel %vm230, %v239, 0.0
    %v246 = vsel %vm229, 1.0, 0.0
    %v247 = vsel %vm230, 1.0, 0.0
    %v248 = vmax.f32 %v221, %v242
    %v249 = vmax.f32 %v222, %v243
    %v250 = vadd.f32 %v223, %v244
    %v251 = vadd.f32 %v224, %v245
    %v252 = vadd.f32 %v225, %v246
    %v253 = vadd.f32 %v226, %v247
    %254 = vrot.lane.b32.xlu0 %v198, 112
    %v255 = vpop.permute.xlu0 %254
    %256 = vrot.lane.b32.xlu0 %v199, 112
    %v257 = vpop.permute.xlu0 %256
    %258 = vrot.lane.b32.xlu0 %v200, 112
    %v259 = vpop.permute.xlu0 %258
    %vm260 = vcmask 916480
    %v261 = vsel %vm260, %v255, %v257
    %v262 = vsel %vm260, %v257, %v259
    %v265 = vsel %vm227, %v261, -3.4028235e+38
    %v266 = vsel %vm228, %v262, -3.4028235e+38
    %v267 = vsel %vm227, %v261, 0.0
    %v268 = vsel %vm228, %v262, 0.0
    %v269 = vsel %vm227, 1.0, 0.0
    %v270 = vsel %vm228, 1.0, 0.0
    %v271 = vmax.f32 %v248, %v265
    %v272 = vmax.f32 %v249, %v266
    %v273 = vadd.f32 %v250, %v267
    %v274 = vadd.f32 %v251, %v268
    %v275 = vadd.f32 %v252, %v269
    %v276 = vadd.f32 %v253, %v270
    %vm277 = vmand %vm227, %vm142
    %vm278 = vmand %vm228, %vm143
    %279 = vrot.lane.b32.xlu0 %v198, 111
    %v280 = vpop.permute.xlu0 %279
    %281 = vrot.lane.b32.xlu0 %v199, 111
    %v282 = vpop.permute.xlu0 %281
    %283 = vrot.lane.b32.xlu0 %v200, 111
    %v284 = vpop.permute.xlu0 %283
    %vm285 = vcmask 908288
    %v286 = vsel %vm285, %v280, %v282
    %v287 = vsel %vm285, %v282, %v284
    %v290 = vsel %vm277, %v286, -3.4028235e+38
    %v291 = vsel %vm278, %v287, -3.4028235e+38
    %v292 = vsel %vm277, %v286, 0.0
    %v293 = vsel %vm278, %v287, 0.0
    %v294 = vsel %vm277, 1.0, 0.0
    %v295 = vsel %vm278, 1.0, 0.0
    %v296 = vmax.f32 %v271, %v290
    %v297 = vmax.f32 %v272, %v291
    %v298 = vadd.f32 %v273, %v292
    %v299 = vadd.f32 %v274, %v293
    %v300 = vadd.f32 %v275, %v294
    %v301 = vadd.f32 %v276, %v295
    %v302 = vrcp.pop %v300
    %v303 = vrcp.pop %v301
    %v304 = vmul.f32 %v298, %v302
    %v305 = vmul.f32 %v299, %v303
    %vm306 = vcmask 64512
    %v308 = vsel %vm306, %v85, 0
    %310 = vmatprep.subr.mxu0 %v297
    %311 = vmatpush1.msra.mxu0 %v296
    %312 = vmatprep.subr.mxu0 0.0
    %313 = vmatpush1.msra.mxu0 0.0
    %314 = vmatprep.subr.mxu0 0.0
    %315 = vmatpush1.msra.mxu0 0.0
    %316 = vmatprep.subr.mxu0 0.0
    %317 = vmatpush1.msra.mxu0 0.0
    %318 = vmatprep.subr.mxu0 0.0
    %319 = vmatpush1.msra.mxu0 0.0
    %320 = vmatprep.subr.mxu0 0.0
    %321 = vmatpush1.msra.mxu0 0.0
    %322 = vmatprep.subr.mxu0 0.0
    %323 = vmatpush1.msra.mxu0 0.0
    %324 = vmatprep.subr.mxu0 0.0
    %325 = vmatpush1.msra.mxu0 0.0
    %326 = vmatprep.subr.mxu0 0.0
    %327 = vmatpush1.msra.mxu0 0.0
    %328 = vmatprep.subr.mxu0 0.0
    %329 = vmatpush1.msra.mxu0 0.0
    %330 = vmatprep.subr.mxu0 0.0
    %331 = vmatpush1.msra.mxu0 0.0
    %332 = vmatprep.subr.mxu0 0.0
    %333 = vmatpush1.msra.mxu0 0.0
    %334 = vmatprep.subr.mxu0 0.0
    %335 = vmatpush1.msra.mxu0 0.0
    %336 = vmatprep.subr.mxu0 0.0
    %337 = vmatpush1.msra.mxu0 0.0
    %338 = vmatprep.subr.mxu0 0.0
    %339 = vmatpush1.msra.mxu0 0.0
    %340 = vmatprep.subr.mxu0 0.0
    %341 = vmatpush1.msra.mxu0 0.0
    %342 = vmatprep.subr.mxu0 0.0
    %343 = vmatpush1.msra.mxu0 0.0
    %344 = vmatprep.subr.mxu0 0.0
    %345 = vmatpush1.msra.mxu0 0.0
    %346 = vmatprep.subr.mxu0 0.0
    %347 = vmatpush1.msra.mxu0 0.0
    %348 = vmatprep.subr.mxu0 0.0
    %349 = vmatpush1.msra.mxu0 0.0
    %350 = vmatprep.subr.mxu0 0.0
    %351 = vmatpush1.msra.mxu0 0.0
    %352 = vmatprep.subr.mxu0 0.0
    %353 = vmatpush1.msra.mxu0 0.0
    %354 = vmatprep.subr.mxu0 0.0
    %355 = vmatpush1.msra.mxu0 0.0
    %356 = vmatprep.subr.mxu0 0.0
    %357 = vmatpush1.msra.mxu0 0.0
    %358 = vmatprep.subr.mxu0 0.0
    %359 = vmatpush1.msra.mxu0 0.0
    %360 = vmatprep.subr.mxu0 0.0
    %361 = vmatpush1.msra.mxu0 0.0
    %362 = vmatprep.subr.mxu0 0.0
    %363 = vmatpush1.msra.mxu0 0.0
    %364 = vmatprep.subr.mxu0 0.0
    %365 = vmatpush1.msra.mxu0 0.0
    %366 = vmatprep.subr.mxu0 0.0
    %367 = vmatpush1.msra.mxu0 0.0
    %368 = vmatprep.subr.mxu0 0.0
    %369 = vmatpush1.msra.mxu0 0.0
    %370 = vmatprep.subr.mxu0 0.0
    %371 = vmatpush1.msra.mxu0 0.0
    %372 = vmatprep.subr.mxu0 0.0
    %373 = vmatpush1.msra.mxu0 0.0
    %374 = vmatprep.mubr.f32.mxu0 0.0
    %375 = vmatmul.mubr.f32.gmra.mrb[0].mxu0 %v308
    %v376 = vpop.f32.mrb[0].mxu0
    %v377 = vadd.f32 0.0, %v376
    %v378 = vpop.f32.mrb[0].mxu0
    %v379 = vadd.f32 0.0, %v378
    %380 = vdwg.mxu0
    %v381 = vmul.f32 %v296, %v296
    %v382 = vmul.f32 %v297, %v297
    %383 = vmatprep.subr.mxu0 %v382
    %384 = vmatpush1.msra.mxu0 %v381
    %385 = vmatprep.subr.mxu0 0.0
    %386 = vmatpush1.msra.mxu0 0.0
    %387 = vmatprep.subr.mxu0 0.0
    %388 = vmatpush1.msra.mxu0 0.0
    %389 = vmatprep.subr.mxu0 0.0
    %390 = vmatpush1.msra.mxu0 0.0
    %391 = vmatprep.subr.mxu0 0.0
    %392 = vmatpush1.msra.mxu0 0.0
    %393 = vmatprep.subr.mxu0 0.0
    %394 = vmatpush1.msra.mxu0 0.0
    %395 = vmatprep.subr.mxu0 0.0
    %396 = vmatpush1.msra.mxu0 0.0
    %397 = vmatprep.subr.mxu0 0.0
    %398 = vmatpush1.msra.mxu0 0.0
    %399 = vmatprep.subr.mxu0 0.0
    %400 = vmatpush1.msra.mxu0 0.0
    %401 = vmatprep.subr.mxu0 0.0
    %402 = vmatpush1.msra.mxu0 0.0
    %403 = vmatprep.subr.mxu0 0.0
    %404 = vmatpush1.msra.mxu0 0.0
    %405 = vmatprep.subr.mxu0 0.0
    %406 = vmatpush1.msra.mxu0 0.0
    %407 = vmatprep.subr.mxu0 0.0
    %408 = vmatpush1.msra.mxu0 0.0
    %409 = vmatprep.subr.mxu0 0.0
    %410 = vmatpush1.msra.mxu0 0.0
    %411 = vmatprep.subr.mxu0 0.0
    %412 = vmatpush1.msra.mxu0 0.0
    %413 = vmatprep.subr.mxu0 0.0
    %414 = vmatpush1.msra.mxu0 0.0
    %415 = vmatprep.subr.mxu0 0.0
    %416 = vmatpush1.msra.mxu0 0.0
    %417 = vmatprep.subr.mxu0 0.0
    %418 = vmatpush1.msra.mxu0 0.0
    %419 = vmatprep.subr.mxu0 0.0
    %420 = vmatpush1.msra.mxu0 0.0
    %421 = vmatprep.subr.mxu0 0.0
    %422 = vmatpush1.msra.mxu0 0.0
    %423 = vmatprep.subr.mxu0 0.0
    %424 = vmatpush1.msra.mxu0 0.0
    %425 = vmatprep.subr.mxu0 0.0
    %426 = vmatpush1.msra.mxu0 0.0
    %427 = vmatprep.subr.mxu0 0.0
    %428 = vmatpush1.msra.mxu0 0.0
    %429 = vmatprep.subr.mxu0 0.0
    %430 = vmatpush1.msra.mxu0 0.0
    %431 = vmatprep.subr.mxu0 0.0
    %432 = vmatpush1.msra.mxu0 0.0
    %433 = vmatprep.subr.mxu0 0.0
    %434 = vmatpush1.msra.mxu0 0.0
    %435 = vmatprep.subr.mxu0 0.0
    %436 = vmatpush1.msra.mxu0 0.0
    %437 = vmatprep.subr.mxu0 0.0
    %438 = vmatpush1.msra.mxu0 0.0
    %439 = vmatprep.subr.mxu0 0.0
    %440 = vmatpush1.msra.mxu0 0.0
    %441 = vmatprep.subr.mxu0 0.0
    %442 = vmatpush1.msra.mxu0 0.0
    %443 = vmatprep.subr.mxu0 0.0
    %444 = vmatpush1.msra.mxu0 0.0
    %445 = vmatprep.subr.mxu0 0.0
    %446 = vmatpush1.msra.mxu0 0.0
    %447 = vmatprep.mubr.f32.mxu0 0.0
    %448 = vmatmul.mubr.f32.gmra.mrb[0].mxu0 %v308
    %v449 = vpop.f32.mrb[0].mxu0
    %v450 = vadd.f32 0.0, %v449
    %v451 = vpop.f32.mrb[0].mxu0
    %v452 = vadd.f32 0.0, %v451
    %453 = vdwg.mxu0
    %v454 = vadd.f32 %v377, %v379
    %455 = vadd.xlane.f32.xlu0 %v454
    %v456 = vpop.xlane.xlu0 %455
    %v457 = vmul.f32 %v456, 0.001953125
    %v458 = vadd.f32 %v450, %v452
    %459 = vadd.xlane.f32.xlu0 %v458
    %v460 = vpop.xlane.xlu0 %459
    %v461 = vmul.f32 %v460, 0.001953125
    %v462 = vmul.f32 %v457, %v457
    %v463 = vsub.f32 %v461, %v462
    %v464 = vsub.f32 %v296, %v457
    %v465 = vsub.f32 %v297, %v457
    %v466 = vadd.f32 %v463, 1e-05
    %v467 = vrsqrt.pop %v466
    %v468 = vmul.f32 %v464, %v467
    %v469 = vmul.f32 %v465, %v467
    %470 = vmatprep.subr.mxu0 %v305
    %471 = vmatpush1.msra.mxu0 %v304
    %472 = vmatprep.subr.mxu0 0.0
    %473 = vmatpush1.msra.mxu0 0.0
    %474 = vmatprep.subr.mxu0 0.0
    %475 = vmatpush1.msra.mxu0 0.0
    %476 = vmatprep.subr.mxu0 0.0
    %477 = vmatpush1.msra.mxu0 0.0
    %478 = vmatprep.subr.mxu0 0.0
    %479 = vmatpush1.msra.mxu0 0.0
    %480 = vmatprep.subr.mxu0 0.0
    %481 = vmatpush1.msra.mxu0 0.0
    %482 = vmatprep.subr.mxu0 0.0
    %483 = vmatpush1.msra.mxu0 0.0
    %484 = vmatprep.subr.mxu0 0.0
    %485 = vmatpush1.msra.mxu0 0.0
    %486 = vmatprep.subr.mxu0 0.0
    %487 = vmatpush1.msra.mxu0 0.0
    %488 = vmatprep.subr.mxu0 0.0
    %489 = vmatpush1.msra.mxu0 0.0
    %490 = vmatprep.subr.mxu0 0.0
    %491 = vmatpush1.msra.mxu0 0.0
    %492 = vmatprep.subr.mxu0 0.0
    %493 = vmatpush1.msra.mxu0 0.0
    %494 = vmatprep.subr.mxu0 0.0
    %495 = vmatpush1.msra.mxu0 0.0
    %496 = vmatprep.subr.mxu0 0.0
    %497 = vmatpush1.msra.mxu0 0.0
    %498 = vmatprep.subr.mxu0 0.0
    %499 = vmatpush1.msra.mxu0 0.0
    %500 = vmatprep.subr.mxu0 0.0
    %501 = vmatpush1.msra.mxu0 0.0
    %502 = vmatprep.subr.mxu0 0.0
    %503 = vmatpush1.msra.mxu0 0.0
    %504 = vmatprep.subr.mxu0 0.0
    %505 = vmatpush1.msra.mxu0 0.0
    %506 = vmatprep.subr.mxu0 0.0
    %507 = vmatpush1.msra.mxu0 0.0
    %508 = vmatprep.subr.mxu0 0.0
    %509 = vmatpush1.msra.mxu0 0.0
    %510 = vmatprep.subr.mxu0 0.0
    %511 = vmatpush1.msra.mxu0 0.0
    %512 = vmatprep.subr.mxu0 0.0
    %513 = vmatpush1.msra.mxu0 0.0
    %514 = vmatprep.subr.mxu0 0.0
    %515 = vmatpush1.msra.mxu0 0.0
    %516 = vmatprep.subr.mxu0 0.0
    %517 = vmatpush1.msra.mxu0 0.0
    %518 = vmatprep.subr.mxu0 0.0
    %519 = vmatpush1.msra.mxu0 0.0
    %520 = vmatprep.subr.mxu0 0.0
    %521 = vmatpush1.msra.mxu0 0.0
    %522 = vmatprep.subr.mxu0 0.0
    %523 = vmatpush1.msra.mxu0 0.0
    %524 = vmatprep.subr.mxu0 0.0
    %525 = vmatpush1.msra.mxu0 0.0
    %526 = vmatprep.subr.mxu0 0.0
    %527 = vmatpush1.msra.mxu0 0.0
    %528 = vmatprep.subr.mxu0 0.0
    %529 = vmatpush1.msra.mxu0 0.0
    %530 = vmatprep.subr.mxu0 0.0
    %531 = vmatpush1.msra.mxu0 0.0
    %532 = vmatprep.subr.mxu0 0.0
    %533 = vmatpush1.msra.mxu0 0.0
    %534 = vmatprep.mubr.f32.mxu0 0.0
    %535 = vmatmul.mubr.f32.gmra.mrb[0].mxu0 %v308
    %v536 = vpop.f32.mrb[0].mxu0
    %v537 = vadd.f32 0.0, %v536
    %v538 = vpop.f32.mrb[0].mxu0
    %v539 = vadd.f32 0.0, %v538
    %540 = vdwg.mxu0
    %v541 = vmul.f32 %v304, %v304
    %v542 = vmul.f32 %v305, %v305
    %543 = vmatprep.subr.mxu0 %v542
    %544 = vmatpush1.msra.mxu0 %v541
    %545 = vmatprep.subr.mxu0 0.0
    %546 = vmatpush1.msra.mxu0 0.0
    %547 = vmatprep.subr.mxu0 0.0
    %548 = vmatpush1.msra.mxu0 0.0
    %549 = vmatprep.subr.mxu0 0.0
    %550 = vmatpush1.msra.mxu0 0.0
    %551 = vmatprep.subr.mxu0 0.0
    %552 = vmatpush1.msra.mxu0 0.0
    %553 = vmatprep.subr.mxu0 0.0
    %554 = vmatpush1.msra.mxu0 0.0
    %555 = vmatprep.subr.mxu0 0.0
    %556 = vmatpush1.msra.mxu0 0.0
    %557 = vmatprep.subr.mxu0 0.0
    %558 = vmatpush1.msra.mxu0 0.0
    %559 = vmatprep.subr.mxu0 0.0
    %560 = vmatpush1.msra.mxu0 0.0
    %561 = vmatprep.subr.mxu0 0.0
    %562 = vmatpush1.msra.mxu0 0.0
    %563 = vmatprep.subr.mxu0 0.0
    %564 = vmatpush1.msra.mxu0 0.0
    %565 = vmatprep.subr.mxu0 0.0
    %566 = vmatpush1.msra.mxu0 0.0
    %567 = vmatprep.subr.mxu0 0.0
    %568 = vmatpush1.msra.mxu0 0.0
    %569 = vmatprep.subr.mxu0 0.0
    %570 = vmatpush1.msra.mxu0 0.0
    %571 = vmatprep.subr.mxu0 0.0
    %572 = vmatpush1.msra.mxu0 0.0
    %573 = vmatprep.subr.mxu0 0.0
    %574 = vmatpush1.msra.mxu0 0.0
    %575 = vmatprep.subr.mxu0 0.0
    %576 = vmatpush1.msra.mxu0 0.0
    %577 = vmatprep.subr.mxu0 0.0
    %578 = vmatpush1.msra.mxu0 0.0
    %579 = vmatprep.subr.mxu0 0.0
    %580 = vmatpush1.msra.mxu0 0.0
    %581 = vmatprep.subr.mxu0 0.0
    %582 = vmatpush1.msra.mxu0 0.0
    %583 = vmatprep.subr.mxu0 0.0
    %584 = vmatpush1.msra.mxu0 0.0
    %585 = vmatprep.subr.mxu0 0.0
    %586 = vmatpush1.msra.mxu0 0.0
    %587 = vmatprep.subr.mxu0 0.0
    %588 = vmatpush1.msra.mxu0 0.0
    %589 = vmatprep.subr.mxu0 0.0
    %590 = vmatpush1.msra.mxu0 0.0
    %591 = vmatprep.subr.mxu0 0.0
    %592 = vmatpush1.msra.mxu0 0.0
    %593 = vmatprep.subr.mxu0 0.0
    %594 = vmatpush1.msra.mxu0 0.0
    %595 = vmatprep.subr.mxu0 0.0
    %596 = vmatpush1.msra.mxu0 0.0
    %597 = vmatprep.subr.mxu0 0.0
    %598 = vmatpush1.msra.mxu0 0.0
    %599 = vmatprep.subr.mxu0 0.0
    %600 = vmatpush1.msra.mxu0 0.0
    %601 = vmatprep.subr.mxu0 0.0
    %602 = vmatpush1.msra.mxu0 0.0
    %603 = vmatprep.subr.mxu0 0.0
    %604 = vmatpush1.msra.mxu0 0.0
    %605 = vmatprep.subr.mxu0 0.0
    %606 = vmatpush1.msra.mxu0 0.0
    %607 = vmatprep.mubr.f32.mxu0 0.0
    %608 = vmatmul.mubr.f32.gmra.mrb[0].mxu0 %v308
    %v609 = vpop.f32.mrb[0].mxu0
    %v610 = vadd.f32 0.0, %v609
    %v611 = vpop.f32.mrb[0].mxu0
    %v612 = vadd.f32 0.0, %v611
    %613 = vdwg.mxu0
    %v614 = vadd.f32 %v537, %v539
    %615 = vadd.xlane.f32.xlu0 %v614
    %v616 = vpop.xlane.xlu0 %615
    %v617 = vmul.f32 %v616, 0.001953125
    %v618 = vadd.f32 %v610, %v612
    %619 = vadd.xlane.f32.xlu0 %v618
    %v620 = vpop.xlane.xlu0 %619
    %v621 = vmul.f32 %v620, 0.001953125
    %v622 = vmul.f32 %v617, %v617
    %v623 = vsub.f32 %v621, %v622
    %v624 = vsub.f32 %v304, %v617
    %v625 = vsub.f32 %v305, %v617
    %v626 = vadd.f32 %v623, 1e-05
    %v627 = vrsqrt.pop %v626
    %v628 = vmul.f32 %v624, %v627
    %v629 = vmul.f32 %v625, %v627
    %s630 = sld [smem:[#allocation5]]
    %v631 = vstv %s630
    %v632 = vmul.f32 %v631, %v468
    %v633 = vmul.f32 %v631, %v469
    %v634 = vadd.f32 %v90, %v632
    %v635 = vadd.f32 %v91, %v633
    %s636 = sld [smem:[#allocation5 + $0x1]]
    %v637 = vstv %s636
    %v638 = vmul.f32 %v637, %v628
    %v639 = vmul.f32 %v637, %v629
    %v640 = vadd.f32 %v634, %v638
    %v641 = vadd.f32 %v635, %v639
    %v642 = vld [vmem:[%s1] sm:$0xff]
    %v643 = vmax.f32 %v642, 0.0
    %v644 = vmax.f32 %v198, 0.0
    %v645 = vmax.f32 %v199, 0.0
    %v646 = vmax.f32 %v200, 0.0
    %647 = vst [vmem:[#allocation2] sm:$0xff] %v643
    %648 = vst [vmem:[#allocation2 + $0x8] sm:$0xff] %v644
    %649 = vst [vmem:[#allocation2 + $0x10] sm:$0xff] %v645
    %650 = vst [vmem:[#allocation2 + $0x18] sm:$0xff] %v646
    %s651 = sld [smem:[#allocation5 + $0x5]]
    %vm652 = vcmp.ge.s32.totalorder %v80, 2
    %vm653 = vcmp.ge.s32.totalorder %v84, 2
    %vm654 = vcmp.lt.s32.totalorder %v80, 14
    %vm655 = vcmp.lt.s32.totalorder %v84, 14
    %v656 = vld [vmem:[#allocation2] sm:$0xff]
    %v657 = vld [vmem:[#allocation2 + $0x8] sm:$0xff]
    %v658 = vld [vmem:[#allocation2 + $0x10] sm:$0xff]
    %662 = vrot.lane.b32.xlu0 %v656, 34
    %v663 = vpop.permute.xlu0 %662
    %664 = vrot.lane.b32.xlu0 %v657, 34
    %v665 = vpop.permute.xlu0 %664
    %666 = vrot.lane.b32.xlu0 %v658, 34
    %v667 = vpop.permute.xlu0 %666
    %vm668 = vcmask 277504
    %v669 = vsel %vm668, %v663, %v665
    %v670 = vsel %vm668, %v665, %v667
    %v673 = vsel %vm652, %v669, 0.0
    %v674 = vsel %vm653, %v670, 0.0
    %v675 = vld [vmem:[%s12] sm:$0xff]
    %677 = vset.pattern.permute.xlu0 0
    %678 = vperm.xlu0 %677, %v675
    %v679 = vpop.permute.xlu0 %678
    %v681 = vmul.f32 %v673, %v679
    %v682 = vmul.f32 %v674, %v679
    %683 = vset.pattern.permute.xlu0 1
    %684 = vperm.xlu0 %683, %v675
    %v685 = vpop.permute.xlu0 %684
    %v687 = vmul.f32 %v656, %v685
    %v688 = vmul.f32 %v657, %v685
    %v689 = vmul.f32 %v658, %v685
    %693 = vrot.lane.b32.xlu0 %v687, 32
    %v694 = vpop.permute.xlu0 %693
    %695 = vrot.lane.b32.xlu0 %v688, 32
    %v696 = vpop.permute.xlu0 %695
    %697 = vrot.lane.b32.xlu0 %v689, 32
    %v698 = vpop.permute.xlu0 %697
    %vm699 = vcmask 261120
    %v700 = vsel %vm699, %v694, %v696
    %v701 = vsel %vm699, %v696, %v698
    %v704 = vadd.f32 %v681, %v700
    %v705 = vadd.f32 %v682, %v701
    %706 = vrot.lane.b32.xlu0 %v656, 30
    %v707 = vpop.permute.xlu0 %706
    %708 = vrot.lane.b32.xlu0 %v657, 30
    %v709 = vpop.permute.xlu0 %708
    %710 = vrot.lane.b32.xlu0 %v658, 30
    %v711 = vpop.permute.xlu0 %710
    %vm712 = vcmask 244736
    %v713 = vsel %vm712, %v707, %v709
    %v714 = vsel %vm712, %v709, %v711
    %v717 = vsel %vm654, %v713, 0.0
    %v718 = vsel %vm655, %v714, 0.0
    %719 = vset.pattern.permute.xlu0 2
    %720 = vperm.xlu0 %719, %v675
    %v721 = vpop.permute.xlu0 %720
    %v723 = vmul.f32 %v717, %v721
    %v724 = vmul.f32 %v718, %v721
    %v725 = vadd.f32 %v704, %v723
    %v726 = vadd.f32 %v705, %v724
    %727 = vrot.lane.b32.xlu0 %v656, 2
    %v728 = vpop.permute.xlu0 %727
    %729 = vrot.lane.b32.xlu0 %v657, 2
    %v730 = vpop.permute.xlu0 %729
    %731 = vrot.lane.b32.xlu0 %v658, 2
    %v732 = vpop.permute.xlu0 %731
    %vm733 = vcmask 15360
    %v734 = vsel %vm733, %v728, %v730
    %v735 = vsel %vm733, %v730, %v732
    %v738 = vsel %vm652, %v734, 0.0
    %v739 = vsel %vm653, %v735, 0.0
    %740 = vset.pattern.permute.xlu0 3
    %741 = vperm.xlu0 %740, %v675
    %v742 = vpop.permute.xlu0 %741
    %v744 = vmul.f32 %v738, %v742
    %v745 = vmul.f32 %v739, %v742
    %v746 = vadd.f32 %v725, %v744
    %v747 = vadd.f32 %v726, %v745
    %748 = vset.pattern.permute.xlu0 4
    %749 = vperm.xlu0 %748, %v675
    %v750 = vpop.permute.xlu0 %749
    %v752 = vmul.f32 %v657, %v750
    %v753 = vmul.f32 %v658, %v750
    %v754 = vadd.f32 %v746, %v752
    %v755 = vadd.f32 %v747, %v753
    %v756 = vld [vmem:[#allocation2 + $0x8] sm:$0xff]
    %v757 = vld [vmem:[#allocation2 + $0x10] sm:$0xff]
    %v758 = vld [vmem:[#allocation2 + $0x18] sm:$0xff]
    %762 = vrot.lane.b32.xlu0 %v756, 126
    %v763 = vpop.permute.xlu0 %762
    %764 = vrot.lane.b32.xlu0 %v757, 126
    %v765 = vpop.permute.xlu0 %764
    %766 = vrot.lane.b32.xlu0 %v758, 126
    %v767 = vpop.permute.xlu0 %766
    %vm768 = vcmask 1031168
    %v769 = vsel %vm768, %v763, %v765
    %v770 = vsel %vm768, %v765, %v767
    %v773 = vsel %vm654, %v769, 0.0
    %v774 = vsel %vm655, %v770, 0.0
    %775 = vset.pattern.permute.xlu0 5
    %776 = vperm.xlu0 %775, %v675
    %v777 = vpop.permute.xlu0 %776
    %v779 = vmul.f32 %v773, %v777
    %v780 = vmul.f32 %v774, %v777
    %v781 = vadd.f32 %v754, %v779
    %v782 = vadd.f32 %v755, %v780
    %783 = vrot.lane.b32.xlu0 %v756, 98
    %v784 = vpop.permute.xlu0 %783
    %785 = vrot.lane.b32.xlu0 %v757, 98
    %v786 = vpop.permute.xlu0 %785
    %787 = vrot.lane.b32.xlu0 %v758, 98
    %v788 = vpop.permute.xlu0 %787
    %vm789 = vcmask 801792
    %v790 = vsel %vm789, %v784, %v786
    %v791 = vsel %vm789, %v786, %v788
    %v794 = vsel %vm652, %v790, 0.0
    %v795 = vsel %vm653, %v791, 0.0
    %796 = vset.pattern.permute.xlu0 6
    %797 = vperm.xlu0 %796, %v675
    %v798 = vpop.permute.xlu0 %797
    %v800 = vmul.f32 %v794, %v798
    %v801 = vmul.f32 %v795, %v798
    %v802 = vadd.f32 %v781, %v800
    %v803 = vadd.f32 %v782, %v801
    %804 = vset.pattern.permute.xlu0 7
    %805 = vperm.xlu0 %804, %v675
    %v806 = vpop.permute.xlu0 %805
    %v808 = vmul.f32 %v756, %v806
    %v809 = vmul.f32 %v757, %v806
    %v810 = vmul.f32 %v758, %v806
    %814 = vrot.lane.b32.xlu0 %v808, 96
    %v815 = vpop.permute.xlu0 %814
    %816 = vrot.lane.b32.xlu0 %v809, 96
    %v817 = vpop.permute.xlu0 %816
    %818 = vrot.lane.b32.xlu0 %v810, 96
    %v819 = vpop.permute.xlu0 %818
    %vm820 = vcmask 785408
    %v821 = vsel %vm820, %v815, %v817
    %v822 = vsel %vm820, %v817, %v819
    %v825 = vadd.f32 %v802, %v821
    %v826 = vadd.f32 %v803, %v822
    %827 = vrot.lane.b32.xlu0 %v756, 94
    %v828 = vpop.permute.xlu0 %827
    %829 = vrot.lane.b32.xlu0 %v757, 94
    %v830 = vpop.permute.xlu0 %829
    %831 = vrot.lane.b32.xlu0 %v758, 94
    %v832 = vpop.permute.xlu0 %831
    %vm833 = vcmask 769024
    %v834 = vsel %vm833, %v828, %v830
    %v835 = vsel %vm833, %v830, %v832
    %v838 = vsel %vm654, %v834, 0.0
    %v839 = vsel %vm655, %v835, 0.0
    %840 = vset.pattern.permute.xlu0 8
    %841 = vperm.xlu0 %840, %v675
    %v842 = vpop.permute.xlu0 %841
    %v844 = vmul.f32 %v838, %v842
    %v845 = vmul.f32 %v839, %v842
    %v846 = vadd.f32 %v825, %v844
    %v847 = vadd.f32 %v826, %v845
    %v848 = vld [vmem:[%s13] sm:$0xff]
    %v850 = vsel %vm306, %v848, 0
    %852 = vmatprep.subr.mxu0 %v847
    %853 = vmatpush1.msra.mxu0 %v846
    %854 = vmatprep.subr.mxu0 0.0
    %855 = vmatpush1.msra.mxu0 0.0
    %856 = vmatprep.subr.mxu0 0.0
    %857 = vmatpush1.msra.mxu0 0.0
    %858 = vmatprep.subr.mxu0 0.0
    %859 = vmatpush1.msra.mxu0 0.0
    %860 = vmatprep.subr.mxu0 0.0
    %861 = vmatpush1.msra.mxu0 0.0
    %862 = vmatprep.subr.mxu0 0.0
    %863 = vmatpush1.msra.mxu0 0.0
    %864 = vmatprep.subr.mxu0 0.0
    %865 = vmatpush1.msra.mxu0 0.0
    %866 = vmatprep.subr.mxu0 0.0
    %867 = vmatpush1.msra.mxu0 0.0
    %868 = vmatprep.subr.mxu0 0.0
    %869 = vmatpush1.msra.mxu0 0.0
    %870 = vmatprep.subr.mxu0 0.0
    %871 = vmatpush1.msra.mxu0 0.0
    %872 = vmatprep.subr.mxu0 0.0
    %873 = vmatpush1.msra.mxu0 0.0
    %874 = vmatprep.subr.mxu0 0.0
    %875 = vmatpush1.msra.mxu0 0.0
    %876 = vmatprep.subr.mxu0 0.0
    %877 = vmatpush1.msra.mxu0 0.0
    %878 = vmatprep.subr.mxu0 0.0
    %879 = vmatpush1.msra.mxu0 0.0
    %880 = vmatprep.subr.mxu0 0.0
    %881 = vmatpush1.msra.mxu0 0.0
    %882 = vmatprep.subr.mxu0 0.0
    %883 = vmatpush1.msra.mxu0 0.0
    %884 = vmatprep.subr.mxu0 0.0
    %885 = vmatpush1.msra.mxu0 0.0
    %886 = vmatprep.subr.mxu0 0.0
    %887 = vmatpush1.msra.mxu0 0.0
    %888 = vmatprep.subr.mxu0 0.0
    %889 = vmatpush1.msra.mxu0 0.0
    %890 = vmatprep.subr.mxu0 0.0
    %891 = vmatpush1.msra.mxu0 0.0
    %892 = vmatprep.subr.mxu0 0.0
    %893 = vmatpush1.msra.mxu0 0.0
    %894 = vmatprep.subr.mxu0 0.0
    %895 = vmatpush1.msra.mxu0 0.0
    %896 = vmatprep.subr.mxu0 0.0
    %897 = vmatpush1.msra.mxu0 0.0
    %898 = vmatprep.subr.mxu0 0.0
    %899 = vmatpush1.msra.mxu0 0.0
    %900 = vmatprep.subr.mxu0 0.0
    %901 = vmatpush1.msra.mxu0 0.0
    %902 = vmatprep.subr.mxu0 0.0
    %903 = vmatpush1.msra.mxu0 0.0
    %904 = vmatprep.subr.mxu0 0.0
    %905 = vmatpush1.msra.mxu0 0.0
    %906 = vmatprep.subr.mxu0 0.0
    %907 = vmatpush1.msra.mxu0 0.0
    %908 = vmatprep.subr.mxu0 0.0
    %909 = vmatpush1.msra.mxu0 0.0
    %910 = vmatprep.subr.mxu0 0.0
    %911 = vmatpush1.msra.mxu0 0.0
    %912 = vmatprep.subr.mxu0 0.0
    %913 = vmatpush1.msra.mxu0 0.0
    %914 = vmatprep.subr.mxu0 0.0
    %915 = vmatpush1.msra.mxu0 0.0
    %916 = vmatprep.mubr.f32.mxu0 0.0
    %917 = vmatmul.mubr.f32.gmra.mrb[0].mxu0 %v850
    %v918 = vpop.f32.mrb[0].mxu0
    %v919 = vadd.f32 0.0, %v918
    %v920 = vpop.f32.mrb[0].mxu0
    %v921 = vadd.f32 0.0, %v920
    %922 = vdwg.mxu0
    %923 = vmatprep.subr.mxu0 %v921
    %924 = vmatpush1.msra.mxu0 %v919
    %925 = vmatprep.subr.mxu0 0.0
    %926 = vmatpush1.msra.mxu0 0.0
    %927 = vmatprep.subr.mxu0 0.0
    %928 = vmatpush1.msra.mxu0 0.0
    %929 = vmatprep.subr.mxu0 0.0
    %930 = vmatpush1.msra.mxu0 0.0
    %931 = vmatprep.subr.mxu0 0.0
    %932 = vmatpush1.msra.mxu0 0.0
    %933 = vmatprep.subr.mxu0 0.0
    %934 = vmatpush1.msra.mxu0 0.0
    %935 = vmatprep.subr.mxu0 0.0
    %936 = vmatpush1.msra.mxu0 0.0
    %937 = vmatprep.subr.mxu0 0.0
    %938 = vmatpush1.msra.mxu0 0.0
    %939 = vmatprep.subr.mxu0 0.0
    %940 = vmatpush1.msra.mxu0 0.0
    %941 = vmatprep.subr.mxu0 0.0
    %942 = vmatpush1.msra.mxu0 0.0
    %943 = vmatprep.subr.mxu0 0.0
    %944 = vmatpush1.msra.mxu0 0.0
    %945 = vmatprep.subr.mxu0 0.0
    %946 = vmatpush1.msra.mxu0 0.0
    %947 = vmatprep.subr.mxu0 0.0
    %948 = vmatpush1.msra.mxu0 0.0
    %949 = vmatprep.subr.mxu0 0.0
    %950 = vmatpush1.msra.mxu0 0.0
    %951 = vmatprep.subr.mxu0 0.0
    %952 = vmatpush1.msra.mxu0 0.0
    %953 = vmatprep.subr.mxu0 0.0
    %954 = vmatpush1.msra.mxu0 0.0
    %955 = vmatprep.subr.mxu0 0.0
    %956 = vmatpush1.msra.mxu0 0.0
    %957 = vmatprep.subr.mxu0 0.0
    %958 = vmatpush1.msra.mxu0 0.0
    %959 = vmatprep.subr.mxu0 0.0
    %960 = vmatpush1.msra.mxu0 0.0
    %961 = vmatprep.subr.mxu0 0.0
    %962 = vmatpush1.msra.mxu0 0.0
    %963 = vmatprep.subr.mxu0 0.0
    %964 = vmatpush1.msra.mxu0 0.0
    %965 = vmatprep.subr.mxu0 0.0
    %966 = vmatpush1.msra.mxu0 0.0
    %967 = vmatprep.subr.mxu0 0.0
    %968 = vmatpush1.msra.mxu0 0.0
    %969 = vmatprep.subr.mxu0 0.0
    %970 = vmatpush1.msra.mxu0 0.0
    %971 = vmatprep.subr.mxu0 0.0
    %972 = vmatpush1.msra.mxu0 0.0
    %973 = vmatprep.subr.mxu0 0.0
    %974 = vmatpush1.msra.mxu0 0.0
    %975 = vmatprep.subr.mxu0 0.0
    %976 = vmatpush1.msra.mxu0 0.0
    %977 = vmatprep.subr.mxu0 0.0
    %978 = vmatpush1.msra.mxu0 0.0
    %979 = vmatprep.subr.mxu0 0.0
    %980 = vmatpush1.msra.mxu0 0.0
    %981 = vmatprep.subr.mxu0 0.0
    %982 = vmatpush1.msra.mxu0 0.0
    %983 = vmatprep.subr.mxu0 0.0
    %984 = vmatpush1.msra.mxu0 0.0
    %985 = vmatprep.subr.mxu0 0.0
    %986 = vmatpush1.msra.mxu0 0.0
    %987 = vmatprep.mubr.f32.mxu0 0.0
    %988 = vmatmul.mubr.f32.gmra.mrb[0].mxu0 %v308
    %v989 = vpop.f32.mrb[0].mxu0
    %v990 = vadd.f32 0.0, %v989
    %v991 = vpop.f32.mrb[0].mxu0
    %v992 = vadd.f32 0.0, %v991
    %993 = vdwg.mxu0
    %v994 = vmul.f32 %v919, %v919
    %v995 = vmul.f32 %v921, %v921
    %996 = vmatprep.subr.mxu0 %v995
    %997 = vmatpush1.msra.mxu0 %v994
    %998 = vmatprep.subr.mxu0 0.0
    %999 = vmatpush1.msra.mxu0 0.0
    %1000 = vmatprep.subr.mxu0 0.0
    %1001 = vmatpush1.msra.mxu0 0.0
    %1002 = vmatprep.subr.mxu0 0.0
    %1003 = vmatpush1.msra.mxu0 0.0
    %1004 = vmatprep.subr.mxu0 0.0
    %1005 = vmatpush1.msra.mxu0 0.0
    %1006 = vmatprep.subr.mxu0 0.0
    %1007 = vmatpush1.msra.mxu0 0.0
    %1008 = vmatprep.subr.mxu0 0.0
    %1009 = vmatpush1.msra.mxu0 0.0
    %1010 = vmatprep.subr.mxu0 0.0
    %1011 = vmatpush1.msra.mxu0 0.0
    %1012 = vmatprep.subr.mxu0 0.0
    %1013 = vmatpush1.msra.mxu0 0.0
    %1014 = vmatprep.subr.mxu0 0.0
    %1015 = vmatpush1.msra.mxu0 0.0
    %1016 = vmatprep.subr.mxu0 0.0
    %1017 = vmatpush1.msra.mxu0 0.0
    %1018 = vmatprep.subr.mxu0 0.0
    %1019 = vmatpush1.msra.mxu0 0.0
    %1020 = vmatprep.subr.mxu0 0.0
    %1021 = vmatpush1.msra.mxu0 0.0
    %1022 = vmatprep.subr.mxu0 0.0
    %1023 = vmatpush1.msra.mxu0 0.0
    %1024 = vmatprep.subr.mxu0 0.0
    %1025 = vmatpush1.msra.mxu0 0.0
    %1026 = vmatprep.subr.mxu0 0.0
    %1027 = vmatpush1.msra.mxu0 0.0
    %1028 = vmatprep.subr.mxu0 0.0
    %1029 = vmatpush1.msra.mxu0 0.0
    %1030 = vmatprep.subr.mxu0 0.0
    %1031 = vmatpush1.msra.mxu0 0.0
    %1032 = vmatprep.subr.mxu0 0.0
    %1033 = vmatpush1.msra.mxu0 0.0
    %1034 = vmatprep.subr.mxu0 0.0
    %1035 = vmatpush1.msra.mxu0 0.0
    %1036 = vmatprep.subr.mxu0 0.0
    %1037 = vmatpush1.msra.mxu0 0.0
    %1038 = vmatprep.subr.mxu0 0.0
    %1039 = vmatpush1.msra.mxu0 0.0
    %1040 = vmatprep.subr.mxu0 0.0
    %1041 = vmatpush1.msra.mxu0 0.0
    %1042 = vmatprep.subr.mxu0 0.0
    %1043 = vmatpush1.msra.mxu0 0.0
    %1044 = vmatprep.subr.mxu0 0.0
    %1045 = vmatpush1.msra.mxu0 0.0
    %1046 = vmatprep.subr.mxu0 0.0
    %1047 = vmatpush1.msra.mxu0 0.0
    %1048 = vmatprep.subr.mxu0 0.0
    %1049 = vmatpush1.msra.mxu0 0.0
    %1050 = vmatprep.subr.mxu0 0.0
    %1051 = vmatpush1.msra.mxu0 0.0
    %1052 = vmatprep.subr.mxu0 0.0
    %1053 = vmatpush1.msra.mxu0 0.0
    %1054 = vmatprep.subr.mxu0 0.0
    %1055 = vmatpush1.msra.mxu0 0.0
    %1056 = vmatprep.subr.mxu0 0.0
    %1057 = vmatpush1.msra.mxu0 0.0
    %1058 = vmatprep.subr.mxu0 0.0
    %1059 = vmatpush1.msra.mxu0 0.0
    %1060 = vmatprep.mubr.f32.mxu0 0.0
    %1061 = vmatmul.mubr.f32.gmra.mrb[0].mxu0 %v308
    %v1062 = vpop.f32.mrb[0].mxu0
    %v1063 = vadd.f32 0.0, %v1062
    %v1064 = vpop.f32.mrb[0].mxu0
    %v1065 = vadd.f32 0.0, %v1064
    %1066 = vdwg.mxu0
    %v1067 = vadd.f32 %v990, %v992
    %1068 = vadd.xlane.f32.xlu0 %v1067
    %v1069 = vpop.xlane.xlu0 %1068
    %v1070 = vmul.f32 %v1069, 0.001953125
    %v1071 = vadd.f32 %v1063, %v1065
    %1072 = vadd.xlane.f32.xlu0 %v1071
    %v1073 = vpop.xlane.xlu0 %1072
    %v1074 = vmul.f32 %v1073, 0.001953125
    %v1075 = vmul.f32 %v1070, %v1070
    %v1076 = vsub.f32 %v1074, %v1075
    %v1077 = vsub.f32 %v919, %v1070
    %v1078 = vsub.f32 %v921, %v1070
    %v1079 = vadd.f32 %v1076, 1e-05
    %v1080 = vrsqrt.pop %v1079
    %v1081 = vmul.f32 %v1077, %v1080
    %v1082 = vmul.f32 %v1078, %v1080
    %v1083 = vstv %s651
    %v1084 = vmul.f32 %v1083, %v1081
    %v1085 = vmul.f32 %v1083, %v1082
    %v1086 = vadd.f32 %v640, %v1084
    %v1087 = vadd.f32 %v641, %v1085
    %s1088 = sld [smem:[#allocation5 + $0x6]]
    %vm1089 = vcmp.ge.s32.totalorder %v80, 4
    %vm1090 = vcmp.ge.s32.totalorder %v84, 4
    %vm1091 = vcmp.lt.s32.totalorder %v80, 12
    %vm1092 = vcmp.lt.s32.totalorder %v84, 12
    %1093 = vrot.lane.b32.xlu0 %v656, 68
    %v1094 = vpop.permute.xlu0 %1093
    %1095 = vrot.lane.b32.xlu0 %v657, 68
    %v1096 = vpop.permute.xlu0 %1095
    %1097 = vrot.lane.b32.xlu0 %v658, 68
    %v1098 = vpop.permute.xlu0 %1097
    %vm1099 = vcmask 556032
    %v1100 = vsel %vm1099, %v1094, %v1096
    %v1101 = vsel %vm1099, %v1096, %v1098
    %v1104 = vsel %vm1089, %v1100, 0.0
    %v1105 = vsel %vm1090, %v1101, 0.0
    %v1106 = vld [vmem:[%s14] sm:$0xff]
    %1108 = vset.pattern.permute.xlu0 0
    %1109 = vperm.xlu0 %1108, %v1106
    %v1110 = vpop.permute.xlu0 %1109
    %v1112 = vmul.f32 %v1104, %v1110
    %v1113 = vmul.f32 %v1105, %v1110
    %1114 = vrot.lane.b32.xlu0 %v656, 66
    %v1115 = vpop.permute.xlu0 %1114
    %1116 = vrot.lane.b32.xlu0 %v657, 66
    %v1117 = vpop.permute.xlu0 %1116
    %1118 = vrot.lane.b32.xlu0 %v658, 66
    %v1119 = vpop.permute.xlu0 %1118
    %vm1120 = vcmask 539648
    %v1121 = vsel %vm1120, %v1115, %v1117
    %v1122 = vsel %vm1120, %v1117, %v1119
    %v1125 = vsel %vm652, %v1121, 0.0
    %v1126 = vsel %vm653, %v1122, 0.0
    %1127 = vset.pattern.permute.xlu0 1
    %1128 = vperm.xlu0 %1127, %v1106
    %v1129 = vpop.permute.xlu0 %1128
    %v1131 = vmul.f32 %v1125, %v1129
    %v1132 = vmul.f32 %v1126, %v1129
    %v1133 = vadd.f32 %v1112, %v1131
    %v1134 = vadd.f32 %v1113, %v1132
    %1135 = vset.pattern.permute.xlu0 2
    %1136 = vperm.xlu0 %1135, %v1106
    %v1137 = vpop.permute.xlu0 %1136
    %v1139 = vmul.f32 %v656, %v1137
    %v1140 = vmul.f32 %v657, %v1137
    %v1141 = vmul.f32 %v658, %v1137
    %1145 = vrot.lane.b32.xlu0 %v1139, 64
    %v1146 = vpop.permute.xlu0 %1145
    %1147 = vrot.lane.b32.xlu0 %v1140, 64
    %v1148 = vpop.permute.xlu0 %1147
    %1149 = vrot.lane.b32.xlu0 %v1141, 64
    %v1150 = vpop.permute.xlu0 %1149
    %vm1151 = vcmask 523264
    %v1152 = vsel %vm1151, %v1146, %v1148
    %v1153 = vsel %vm1151, %v1148, %v1150
    %v1156 = vadd.f32 %v1133, %v1152
    %v1157 = vadd.f32 %v1134, %v1153
    %1158 = vrot.lane.b32.xlu0 %v656, 62
    %v1159 = vpop.permute.xlu0 %1158
    %1160 = vrot.lane.b32.xlu0 %v657, 62
    %v1161 = vpop.permute.xlu0 %1160
    %1162 = vrot.lane.b32.xlu0 %v658, 62
    %v1163 = vpop.permute.xlu0 %1162
    %vm1164 = vcmask 506880
    %v1165 = vsel %vm1164, %v1159, %v1161
    %v1166 = vsel %vm1164, %v1161, %v1163
    %v1169 = vsel %vm654, %v1165, 0.0
    %v1170 = vsel %vm655, %v1166, 0.0
    %1171 = vset.pattern.permute.xlu0 3
    %1172 = vperm.xlu0 %1171, %v1106
    %v1173 = vpop.permute.xlu0 %1172
    %v1175 = vmul.f32 %v1169, %v1173
    %v1176 = vmul.f32 %v1170, %v1173
    %v1177 = vadd.f32 %v1156, %v1175
    %v1178 = vadd.f32 %v1157, %v1176
    %1179 = vrot.lane.b32.xlu0 %v656, 60
    %v1180 = vpop.permute.xlu0 %1179
    %1181 = vrot.lane.b32.xlu0 %v657, 60
    %v1182 = vpop.permute.xlu0 %1181
    %1183 = vrot.lane.b32.xlu0 %v658, 60
    %v1184 = vpop.permute.xlu0 %1183
    %vm1185 = vcmask 490496
    %v1186 = vsel %vm1185, %v1180, %v1182
    %v1187 = vsel %vm1185, %v1182, %v1184
    %v1190 = vsel %vm1091, %v1186, 0.0
    %v1191 = vsel %vm1092, %v1187, 0.0
    %1192 = vset.pattern.permute.xlu0 4
    %1193 = vperm.xlu0 %1192, %v1106
    %v1194 = vpop.permute.xlu0 %1193
    %v1196 = vmul.f32 %v1190, %v1194
    %v1197 = vmul.f32 %v1191, %v1194
    %v1198 = vadd.f32 %v1177, %v1196
    %v1199 = vadd.f32 %v1178, %v1197
    %1200 = vrot.lane.b32.xlu0 %v656, 36
    %v1201 = vpop.permute.xlu0 %1200
    %1202 = vrot.lane.b32.xlu0 %v657, 36
    %v1203 = vpop.permute.xlu0 %1202
    %1204 = vrot.lane.b32.xlu0 %v658, 36
    %v1205 = vpop.permute.xlu0 %1204
    %vm1206 = vcmask 293888
    %v1207 = vsel %vm1206, %v1201, %v1203
    %v1208 = vsel %vm1206, %v1203, %v1205
    %v1211 = vsel %vm1089, %v1207, 0.0
    %v1212 = vsel %vm1090, %v1208, 0.0
    %1213 = vset.pattern.permute.xlu0 5
    %1214 = vperm.xlu0 %1213, %v1106
    %v1215 = vpop.permute.xlu0 %1214
    %v1217 = vmul.f32 %v1211, %v1215
    %v1218 = vmul.f32 %v1212, %v1215
    %v1219 = vadd.f32 %v1198, %v1217
    %v1220 = vadd.f32 %v1199, %v1218
    %1221 = vset.pattern.permute.xlu0 6
    %1222 = vperm.xlu0 %1221, %v1106
    %v1223 = vpop.permute.xlu0 %1222
    %v1225 = vmul.f32 %v673, %v1223
    %v1226 = vmul.f32 %v674, %v1223
    %v1227 = vadd.f32 %v1219, %v1225
    %v1228 = vadd.f32 %v1220, %v1226
    %1229 = vset.pattern.permute.xlu0 7
    %1230 = vperm.xlu0 %1229, %v1106
    %v1231 = vpop.permute.xlu0 %1230
    %v1233 = vmul.f32 %v656, %v1231
    %v1234 = vmul.f32 %v657, %v1231
    %v1235 = vmul.f32 %v658, %v1231
    %1239 = vrot.lane.b32.xlu0 %v1233, 32
    %v1240 = vpop.permute.xlu0 %1239
    %1241 = vrot.lane.b32.xlu0 %v1234, 32
    %v1242 = vpop.permute.xlu0 %1241
    %1243 = vrot.lane.b32.xlu0 %v1235, 32
    %v1244 = vpop.permute.xlu0 %1243
    %v1245 = vsel %vm699, %v1240, %v1242
    %v1246 = vsel %vm699, %v1242, %v1244
    %v1249 = vadd.f32 %v1227, %v1245
    %v1250 = vadd.f32 %v1228, %v1246
    %1251 = vset.pattern.permute.xlu0 8
    %1252 = vperm.xlu0 %1251, %v1106
    %v1253 = vpop.permute.xlu0 %1252
    %v1255 = vmul.f32 %v717, %v1253
    %v1256 = vmul.f32 %v718, %v1253
    %v1257 = vadd.f32 %v1249, %v1255
    %v1258 = vadd.f32 %v1250, %v1256
    %1259 = vrot.lane.b32.xlu0 %v656, 28
    %v1260 = vpop.permute.xlu0 %1259
    %1261 = vrot.lane.b32.xlu0 %v657, 28
    %v1262 = vpop.permute.xlu0 %1261
    %1263 = vrot.lane.b32.xlu0 %v658, 28
    %v1264 = vpop.permute.xlu0 %1263
    %vm1265 = vcmask 228352
    %v1266 = vsel %vm1265, %v1260, %v1262
    %v1267 = vsel %vm1265, %v1262, %v1264
    %v1270 = vsel %vm1091, %v1266, 0.0
    %v1271 = vsel %vm1092, %v1267, 0.0
    %1272 = vset.pattern.permute.xlu0 9
    %1273 = vperm.xlu0 %1272, %v1106
    %v1274 = vpop.permute.xlu0 %1273
    %v1276 = vmul.f32 %v1270, %v1274
    %v1277 = vmul.f32 %v1271, %v1274
    %v1278 = vadd.f32 %v1257, %v1276
    %v1279 = vadd.f32 %v1258, %v1277
    %1280 = vrot.lane.b32.xlu0 %v656, 4
    %v1281 = vpop.permute.xlu0 %1280
    %1282 = vrot.lane.b32.xlu0 %v657, 4
    %v1283 = vpop.permute.xlu0 %1282
    %1284 = vrot.lane.b32.xlu0 %v658, 4
    %v1285 = vpop.permute.xlu0 %1284
    %vm1286 = vcmask 31744
    %v1287 = vsel %vm1286, %v1281, %v1283
    %v1288 = vsel %vm1286, %v1283, %v1285
    %v1291 = vsel %vm1089, %v1287, 0.0
    %v1292 = vsel %vm1090, %v1288, 0.0
    %1293 = vset.pattern.permute.xlu0 10
    %1294 = vperm.xlu0 %1293, %v1106
    %v1295 = vpop.permute.xlu0 %1294
    %v1297 = vmul.f32 %v1291, %v1295
    %v1298 = vmul.f32 %v1292, %v1295
    %v1299 = vadd.f32 %v1278, %v1297
    %v1300 = vadd.f32 %v1279, %v1298
    %1301 = vset.pattern.permute.xlu0 11
    %1302 = vperm.xlu0 %1301, %v1106
    %v1303 = vpop.permute.xlu0 %1302
    %v1305 = vmul.f32 %v738, %v1303
    %v1306 = vmul.f32 %v739, %v1303
    %v1307 = vadd.f32 %v1299, %v1305
    %v1308 = vadd.f32 %v1300, %v1306
    %1309 = vset.pattern.permute.xlu0 12
    %1310 = vperm.xlu0 %1309, %v1106
    %v1311 = vpop.permute.xlu0 %1310
    %v1313 = vmul.f32 %v657, %v1311
    %v1314 = vmul.f32 %v658, %v1311
    %v1315 = vadd.f32 %v1307, %v1313
    %v1316 = vadd.f32 %v1308, %v1314
    %1317 = vset.pattern.permute.xlu0 13
    %1318 = vperm.xlu0 %1317, %v1106
    %v1319 = vpop.permute.xlu0 %1318
    %v1321 = vmul.f32 %v773, %v1319
    %v1322 = vmul.f32 %v774, %v1319
    %v1323 = vadd.f32 %v1315, %v1321
    %v1324 = vadd.f32 %v1316, %v1322
    %1325 = vrot.lane.b32.xlu0 %v756, 124
    %v1326 = vpop.permute.xlu0 %1325
    %1327 = vrot.lane.b32.xlu0 %v757, 124
    %v1328 = vpop.permute.xlu0 %1327
    %1329 = vrot.lane.b32.xlu0 %v758, 124
    %v1330 = vpop.permute.xlu0 %1329
    %vm1331 = vcmask 1014784
    %v1332 = vsel %vm1331, %v1326, %v1328
    %v1333 = vsel %vm1331, %v1328, %v1330
    %v1336 = vsel %vm1091, %v1332, 0.0
    %v1337 = vsel %vm1092, %v1333, 0.0
    %1338 = vset.pattern.permute.xlu0 14
    %1339 = vperm.xlu0 %1338, %v1106
    %v1340 = vpop.permute.xlu0 %1339
    %v1342 = vmul.f32 %v1336, %v1340
    %v1343 = vmul.f32 %v1337, %v1340
    %v1344 = vadd.f32 %v1323, %v1342
    %v1345 = vadd.f32 %v1324, %v1343
    %1346 = vrot.lane.b32.xlu0 %v756, 100
    %v1347 = vpop.permute.xlu0 %1346
    %1348 = vrot.lane.b32.xlu0 %v757, 100
    %v1349 = vpop.permute.xlu0 %1348
    %1350 = vrot.lane.b32.xlu0 %v758, 100
    %v1351 = vpop.permute.xlu0 %1350
    %vm1352 = vcmask 818176
    %v1353 = vsel %vm1352, %v1347, %v1349
    %v1354 = vsel %vm1352, %v1349, %v1351
    %v1357 = vsel %vm1089, %v1353, 0.0
    %v1358 = vsel %vm1090, %v1354, 0.0
    %1359 = vset.pattern.permute.xlu0 15
    %1360 = vperm.xlu0 %1359, %v1106
    %v1361 = vpop.permute.xlu0 %1360
    %v1363 = vmul.f32 %v1357, %v1361
    %v1364 = vmul.f32 %v1358, %v1361
    %v1365 = vadd.f32 %v1344, %v1363
    %v1366 = vadd.f32 %v1345, %v1364
    %1367 = vset.pattern.permute.xlu0 16
    %1368 = vperm.xlu0 %1367, %v1106
    %v1369 = vpop.permute.xlu0 %1368
    %v1371 = vmul.f32 %v794, %v1369
    %v1372 = vmul.f32 %v795, %v1369
    %v1373 = vadd.f32 %v1365, %v1371
    %v1374 = vadd.f32 %v1366, %v1372
    %1375 = vset.pattern.permute.xlu0 17
    %1376 = vperm.xlu0 %1375, %v1106
    %v1377 = vpop.permute.xlu0 %1376
    %v1379 = vmul.f32 %v756, %v1377
    %v1380 = vmul.f32 %v757, %v1377
    %v1381 = vmul.f32 %v758, %v1377
    %1385 = vrot.lane.b32.xlu0 %v1379, 96
    %v1386 = vpop.permute.xlu0 %1385
    %1387 = vrot.lane.b32.xlu0 %v1380, 96
    %v1388 = vpop.permute.xlu0 %1387
    %1389 = vrot.lane.b32.xlu0 %v1381, 96
    %v1390 = vpop.permute.xlu0 %1389
    %v1391 = vsel %vm820, %v1386, %v1388
    %v1392 = vsel %vm820, %v1388, %v1390
    %v1395 = vadd.f32 %v1373, %v1391
    %v1396 = vadd.f32 %v1374, %v1392
    %1397 = vset.pattern.permute.xlu0 18
    %1398 = vperm.xlu0 %1397, %v1106
    %v1399 = vpop.permute.xlu0 %1398
    %v1401 = vmul.f32 %v838, %v1399
    %v1402 = vmul.f32 %v839, %v1399
    %v1403 = vadd.f32 %v1395, %v1401
    %v1404 = vadd.f32 %v1396, %v1402
    %1405 = vrot.lane.b32.xlu0 %v756, 92
    %v1406 = vpop.permute.xlu0 %1405
    %1407 = vrot.lane.b32.xlu0 %v757, 92
    %v1408 = vpop.permute.xlu0 %1407
    %1409 = vrot.lane.b32.xlu0 %v758, 92
    %v1410 = vpop.permute.xlu0 %1409
    %vm1411 = vcmask 752640
    %v1412 = vsel %vm1411, %v1406, %v1408
    %v1413 = vsel %vm1411, %v1408, %v1410
    %v1416 = vsel %vm1091, %v1412, 0.0
    %v1417 = vsel %vm1092, %v1413, 0.0
    %1418 = vset.pattern.permute.xlu0 19
    %1419 = vperm.xlu0 %1418, %v1106
    %v1420 = vpop.permute.xlu0 %1419
    %v1422 = vmul.f32 %v1416, %v1420
    %v1423 = vmul.f32 %v1417, %v1420
    %v1424 = vadd.f32 %v1403, %v1422
    %v1425 = vadd.f32 %v1404, %v1423
    %1426 = vrot.lane.b32.xlu0 %v756, 68
    %v1427 = vpop.permute.xlu0 %1426
    %1428 = vrot.lane.b32.xlu0 %v757, 68
    %v1429 = vpop.permute.xlu0 %1428
    %1430 = vrot.lane.b32.xlu0 %v758, 68
    %v1431 = vpop.permute.xlu0 %1430
    %v1432 = vsel %vm1099, %v1427, %v1429
    %v1433 = vsel %vm1099, %v1429, %v1431
    %v1436 = vsel %vm1089, %v1432, 0.0
    %v1437 = vsel %vm1090, %v1433, 0.0
    %1438 = vset.pattern.permute.xlu0 20
    %1439 = vperm.xlu0 %1438, %v1106
    %v1440 = vpop.permute.xlu0 %1439
    %v1442 = vmul.f32 %v1436, %v1440
    %v1443 = vmul.f32 %v1437, %v1440
    %v1444 = vadd.f32 %v1424, %v1442
    %v1445 = vadd.f32 %v1425, %v1443
    %1446 = vrot.lane.b32.xlu0 %v756, 66
    %v1447 = vpop.permute.xlu0 %1446
    %1448 = vrot.lane.b32.xlu0 %v757, 66
    %v1449 = vpop.permute.xlu0 %1448
    %1450 = vrot.lane.b32.xlu0 %v758, 66
    %v1451 = vpop.permute.xlu0 %1450
    %v1452 = vsel %vm1120, %v1447, %v1449
    %v1453 = vsel %vm1120, %v1449, %v1451
    %v1456 = vsel %vm652, %v1452, 0.0
    %v1457 = vsel %vm653, %v1453, 0.0
    %1458 = vset.pattern.permute.xlu0 21
    %1459 = vperm.xlu0 %1458, %v1106
    %v1460 = vpop.permute.xlu0 %1459
    %v1462 = vmul.f32 %v1456, %v1460
    %v1463 = vmul.f32 %v1457, %v1460
    %v1464 = vadd.f32 %v1444, %v1462
    %v1465 = vadd.f32 %v1445, %v1463
    %1466 = vset.pattern.permute.xlu0 22
    %1467 = vperm.xlu0 %1466, %v1106
    %v1468 = vpop.permute.xlu0 %1467
    %v1470 = vmul.f32 %v756, %v1468
    %v1471 = vmul.f32 %v757, %v1468
    %v1472 = vmul.f32 %v758, %v1468
    %1476 = vrot.lane.b32.xlu0 %v1470, 64
    %v1477 = vpop.permute.xlu0 %1476
    %1478 = vrot.lane.b32.xlu0 %v1471, 64
    %v1479 = vpop.permute.xlu0 %1478
    %1480 = vrot.lane.b32.xlu0 %v1472, 64
    %v1481 = vpop.permute.xlu0 %1480
    %v1482 = vsel %vm1151, %v1477, %v1479
    %v1483 = vsel %vm1151, %v1479, %v1481
    %v1486 = vadd.f32 %v1464, %v1482
    %v1487 = vadd.f32 %v1465, %v1483
    %1488 = vrot.lane.b32.xlu0 %v756, 62
    %v1489 = vpop.permute.xlu0 %1488
    %1490 = vrot.lane.b32.xlu0 %v757, 62
    %v1491 = vpop.permute.xlu0 %1490
    %1492 = vrot.lane.b32.xlu0 %v758, 62
    %v1493 = vpop.permute.xlu0 %1492
    %v1494 = vsel %vm1164, %v1489, %v1491
    %v1495 = vsel %vm1164, %v1491, %v1493
    %v1498 = vsel %vm654, %v1494, 0.0
    %v1499 = vsel %vm655, %v1495, 0.0
    %1500 = vset.pattern.permute.xlu0 23
    %1501 = vperm.xlu0 %1500, %v1106
    %v1502 = vpop.permute.xlu0 %1501
    %v1504 = vmul.f32 %v1498, %v1502
    %v1505 = vmul.f32 %v1499, %v1502
    %v1506 = vadd.f32 %v1486, %v1504
    %v1507 = vadd.f32 %v1487, %v1505
    %1508 = vrot.lane.b32.xlu0 %v756, 60
    %v1509 = vpop.permute.xlu0 %1508
    %1510 = vrot.lane.b32.xlu0 %v757, 60
    %v1511 = vpop.permute.xlu0 %1510
    %1512 = vrot.lane.b32.xlu0 %v758, 60
    %v1513 = vpop.permute.xlu0 %1512
    %v1514 = vsel %vm1185, %v1509, %v1511
    %v1515 = vsel %vm1185, %v1511, %v1513
    %v1518 = vsel %vm1091, %v1514, 0.0
    %v1519 = vsel %vm1092, %v1515, 0.0
    %1520 = vset.pattern.permute.xlu0 24
    %1521 = vperm.xlu0 %1520, %v1106
    %v1522 = vpop.permute.xlu0 %1521
    %v1524 = vmul.f32 %v1518, %v1522
    %v1525 = vmul.f32 %v1519, %v1522
    %v1526 = vadd.f32 %v1506, %v1524
    %v1527 = vadd.f32 %v1507, %v1525
    %v1528 = vld [vmem:[%s15] sm:$0xff]
    %v1530 = vsel %vm306, %v1528, 0
    %1532 = vmatprep.subr.mxu0 %v1527
    %1533 = vmatpush1.msra.mxu0 %v1526
    %1534 = vmatprep.subr.mxu0 0.0
    %1535 = vmatpush1.msra.mxu0 0.0
    %1536 = vmatprep.subr.mxu0 0.0
    %1537 = vmatpush1.msra.mxu0 0.0
    %1538 = vmatprep.subr.mxu0 0.0
    %1539 = vmatpush1.msra.mxu0 0.0
    %1540 = vmatprep.subr.mxu0 0.0
    %1541 = vmatpush1.msra.mxu0 0.0
    %1542 = vmatprep.subr.mxu0 0.0
    %1543 = vmatpush1.msra.mxu0 0.0
    %1544 = vmatprep.subr.mxu0 0.0
    %1545 = vmatpush1.msra.mxu0 0.0
    %1546 = vmatprep.subr.mxu0 0.0
    %1547 = vmatpush1.msra.mxu0 0.0
    %1548 = vmatprep.subr.mxu0 0.0
    %1549 = vmatpush1.msra.mxu0 0.0
    %1550 = vmatprep.subr.mxu0 0.0
    %1551 = vmatpush1.msra.mxu0 0.0
    %1552 = vmatprep.subr.mxu0 0.0
    %1553 = vmatpush1.msra.mxu0 0.0
    %1554 = vmatprep.subr.mxu0 0.0
    %1555 = vmatpush1.msra.mxu0 0.0
    %1556 = vmatprep.subr.mxu0 0.0
    %1557 = vmatpush1.msra.mxu0 0.0
    %1558 = vmatprep.subr.mxu0 0.0
    %1559 = vmatpush1.msra.mxu0 0.0
    %1560 = vmatprep.subr.mxu0 0.0
    %1561 = vmatpush1.msra.mxu0 0.0
    %1562 = vmatprep.subr.mxu0 0.0
    %1563 = vmatpush1.msra.mxu0 0.0
    %1564 = vmatprep.subr.mxu0 0.0
    %1565 = vmatpush1.msra.mxu0 0.0
    %1566 = vmatprep.subr.mxu0 0.0
    %1567 = vmatpush1.msra.mxu0 0.0
    %1568 = vmatprep.subr.mxu0 0.0
    %1569 = vmatpush1.msra.mxu0 0.0
    %1570 = vmatprep.subr.mxu0 0.0
    %1571 = vmatpush1.msra.mxu0 0.0
    %1572 = vmatprep.subr.mxu0 0.0
    %1573 = vmatpush1.msra.mxu0 0.0
    %1574 = vmatprep.subr.mxu0 0.0
    %1575 = vmatpush1.msra.mxu0 0.0
    %1576 = vmatprep.subr.mxu0 0.0
    %1577 = vmatpush1.msra.mxu0 0.0
    %1578 = vmatprep.subr.mxu0 0.0
    %1579 = vmatpush1.msra.mxu0 0.0
    %1580 = vmatprep.subr.mxu0 0.0
    %1581 = vmatpush1.msra.mxu0 0.0
    %1582 = vmatprep.subr.mxu0 0.0
    %1583 = vmatpush1.msra.mxu0 0.0
    %1584 = vmatprep.subr.mxu0 0.0
    %1585 = vmatpush1.msra.mxu0 0.0
    %1586 = vmatprep.subr.mxu0 0.0
    %1587 = vmatpush1.msra.mxu0 0.0
    %1588 = vmatprep.subr.mxu0 0.0
    %1589 = vmatpush1.msra.mxu0 0.0
    %1590 = vmatprep.subr.mxu0 0.0
    %1591 = vmatpush1.msra.mxu0 0.0
    %1592 = vmatprep.subr.mxu0 0.0
    %1593 = vmatpush1.msra.mxu0 0.0
    %1594 = vmatprep.subr.mxu0 0.0
    %1595 = vmatpush1.msra.mxu0 0.0
    %1596 = vmatprep.mubr.f32.mxu0 0.0
    %1597 = vmatmul.mubr.f32.gmra.mrb[0].mxu0 %v1530
    %v1598 = vpop.f32.mrb[0].mxu0
    %v1599 = vadd.f32 0.0, %v1598
    %v1600 = vpop.f32.mrb[0].mxu0
    %v1601 = vadd.f32 0.0, %v1600
    %1602 = vdwg.mxu0
    %1603 = vmatprep.subr.mxu0 %v1601
    %1604 = vmatpush1.msra.mxu0 %v1599
    %1605 = vmatprep.subr.mxu0 0.0
    %1606 = vmatpush1.msra.mxu0 0.0
    %1607 = vmatprep.subr.mxu0 0.0
    %1608 = vmatpush1.msra.mxu0 0.0
    %1609 = vmatprep.subr.mxu0 0.0
    %1610 = vmatpush1.msra.mxu0 0.0
    %1611 = vmatprep.subr.mxu0 0.0
    %1612 = vmatpush1.msra.mxu0 0.0
    %1613 = vmatprep.subr.mxu0 0.0
    %1614 = vmatpush1.msra.mxu0 0.0
    %1615 = vmatprep.subr.mxu0 0.0
    %1616 = vmatpush1.msra.mxu0 0.0
    %1617 = vmatprep.subr.mxu0 0.0
    %1618 = vmatpush1.msra.mxu0 0.0
    %1619 = vmatprep.subr.mxu0 0.0
    %1620 = vmatpush1.msra.mxu0 0.0
    %1621 = vmatprep.subr.mxu0 0.0
    %1622 = vmatpush1.msra.mxu0 0.0
    %1623 = vmatprep.subr.mxu0 0.0
    %1624 = vmatpush1.msra.mxu0 0.0
    %1625 = vmatprep.subr.mxu0 0.0
    %1626 = vmatpush1.msra.mxu0 0.0
    %1627 = vmatprep.subr.mxu0 0.0
    %1628 = vmatpush1.msra.mxu0 0.0
    %1629 = vmatprep.subr.mxu0 0.0
    %1630 = vmatpush1.msra.mxu0 0.0
    %1631 = vmatprep.subr.mxu0 0.0
    %1632 = vmatpush1.msra.mxu0 0.0
    %1633 = vmatprep.subr.mxu0 0.0
    %1634 = vmatpush1.msra.mxu0 0.0
    %1635 = vmatprep.subr.mxu0 0.0
    %1636 = vmatpush1.msra.mxu0 0.0
    %1637 = vmatprep.subr.mxu0 0.0
    %1638 = vmatpush1.msra.mxu0 0.0
    %1639 = vmatprep.subr.mxu0 0.0
    %1640 = vmatpush1.msra.mxu0 0.0
    %1641 = vmatprep.subr.mxu0 0.0
    %1642 = vmatpush1.msra.mxu0 0.0
    %1643 = vmatprep.subr.mxu0 0.0
    %1644 = vmatpush1.msra.mxu0 0.0
    %1645 = vmatprep.subr.mxu0 0.0
    %1646 = vmatpush1.msra.mxu0 0.0
    %1647 = vmatprep.subr.mxu0 0.0
    %1648 = vmatpush1.msra.mxu0 0.0
    %1649 = vmatprep.subr.mxu0 0.0
    %1650 = vmatpush1.msra.mxu0 0.0
    %1651 = vmatprep.subr.mxu0 0.0
    %1652 = vmatpush1.msra.mxu0 0.0
    %1653 = vmatprep.subr.mxu0 0.0
    %1654 = vmatpush1.msra.mxu0 0.0
    %1655 = vmatprep.subr.mxu0 0.0
    %1656 = vmatpush1.msra.mxu0 0.0
    %1657 = vmatprep.subr.mxu0 0.0
    %1658 = vmatpush1.msra.mxu0 0.0
    %1659 = vmatprep.subr.mxu0 0.0
    %1660 = vmatpush1.msra.mxu0 0.0
    %1661 = vmatprep.subr.mxu0 0.0
    %1662 = vmatpush1.msra.mxu0 0.0
    %1663 = vmatprep.subr.mxu0 0.0
    %1664 = vmatpush1.msra.mxu0 0.0
    %1665 = vmatprep.subr.mxu0 0.0
    %1666 = vmatpush1.msra.mxu0 0.0
    %1667 = vmatprep.mubr.f32.mxu0 0.0
    %1668 = vmatmul.mubr.f32.gmra.mrb[0].mxu0 %v308
    %v1669 = vpop.f32.mrb[0].mxu0
    %v1670 = vadd.f32 0.0, %v1669
    %v1671 = vpop.f32.mrb[0].mxu0
    %v1672 = vadd.f32 0.0, %v1671
    %1673 = vdwg.mxu0
    %v1674 = vmul.f32 %v1599, %v1599
    %v1675 = vmul.f32 %v1601, %v1601
    %1676 = vmatprep.subr.mxu0 %v1675
    %1677 = vmatpush1.msra.mxu0 %v1674
    %1678 = vmatprep.subr.mxu0 0.0
    %1679 = vmatpush1.msra.mxu0 0.0
    %1680 = vmatprep.subr.mxu0 0.0
    %1681 = vmatpush1.msra.mxu0 0.0
    %1682 = vmatprep.subr.mxu0 0.0
    %1683 = vmatpush1.msra.mxu0 0.0
    %1684 = vmatprep.subr.mxu0 0.0
    %1685 = vmatpush1.msra.mxu0 0.0
    %1686 = vmatprep.subr.mxu0 0.0
    %1687 = vmatpush1.msra.mxu0 0.0
    %1688 = vmatprep.subr.mxu0 0.0
    %1689 = vmatpush1.msra.mxu0 0.0
    %1690 = vmatprep.subr.mxu0 0.0
    %1691 = vmatpush1.msra.mxu0 0.0
    %1692 = vmatprep.subr.mxu0 0.0
    %1693 = vmatpush1.msra.mxu0 0.0
    %1694 = vmatprep.subr.mxu0 0.0
    %1695 = vmatpush1.msra.mxu0 0.0
    %1696 = vmatprep.subr.mxu0 0.0
    %1697 = vmatpush1.msra.mxu0 0.0
    %1698 = vmatprep.subr.mxu0 0.0
    %1699 = vmatpush1.msra.mxu0 0.0
    %1700 = vmatprep.subr.mxu0 0.0
    %1701 = vmatpush1.msra.mxu0 0.0
    %1702 = vmatprep.subr.mxu0 0.0
    %1703 = vmatpush1.msra.mxu0 0.0
    %1704 = vmatprep.subr.mxu0 0.0
    %1705 = vmatpush1.msra.mxu0 0.0
    %1706 = vmatprep.subr.mxu0 0.0
    %1707 = vmatpush1.msra.mxu0 0.0
    %1708 = vmatprep.subr.mxu0 0.0
    %1709 = vmatpush1.msra.mxu0 0.0
    %1710 = vmatprep.subr.mxu0 0.0
    %1711 = vmatpush1.msra.mxu0 0.0
    %1712 = vmatprep.subr.mxu0 0.0
    %1713 = vmatpush1.msra.mxu0 0.0
    %1714 = vmatprep.subr.mxu0 0.0
    %1715 = vmatpush1.msra.mxu0 0.0
    %1716 = vmatprep.subr.mxu0 0.0
    %1717 = vmatpush1.msra.mxu0 0.0
    %1718 = vmatprep.subr.mxu0 0.0
    %1719 = vmatpush1.msra.mxu0 0.0
    %1720 = vmatprep.subr.mxu0 0.0
    %1721 = vmatpush1.msra.mxu0 0.0
    %1722 = vmatprep.subr.mxu0 0.0
    %1723 = vmatpush1.msra.mxu0 0.0
    %1724 = vmatprep.subr.mxu0 0.0
    %1725 = vmatpush1.msra.mxu0 0.0
    %1726 = vmatprep.subr.mxu0 0.0
    %1727 = vmatpush1.msra.mxu0 0.0
    %1728 = vmatprep.subr.mxu0 0.0
    %1729 = vmatpush1.msra.mxu0 0.0
    %1730 = vmatprep.subr.mxu0 0.0
    %1731 = vmatpush1.msra.mxu0 0.0
    %1732 = vmatprep.subr.mxu0 0.0
    %1733 = vmatpush1.msra.mxu0 0.0
    %1734 = vmatprep.subr.mxu0 0.0
    %1735 = vmatpush1.msra.mxu0 0.0
    %1736 = vmatprep.subr.mxu0 0.0
    %1737 = vmatpush1.msra.mxu0 0.0
    %1738 = vmatprep.subr.mxu0 0.0
    %1739 = vmatpush1.msra.mxu0 0.0
    %1740 = vmatprep.mubr.f32.mxu0 0.0
    %1741 = vmatmul.mubr.f32.gmra.mrb[0].mxu0 %v308
    %v1742 = vpop.f32.mrb[0].mxu0
    %v1743 = vadd.f32 0.0, %v1742
    %v1744 = vpop.f32.mrb[0].mxu0
    %v1745 = vadd.f32 0.0, %v1744
    %1746 = vdwg.mxu0
    %v1747 = vadd.f32 %v1670, %v1672
    %1748 = vadd.xlane.f32.xlu0 %v1747
    %v1749 = vpop.xlane.xlu0 %1748
    %v1750 = vmul.f32 %v1749, 0.001953125
    %v1751 = vadd.f32 %v1743, %v1745
    %1752 = vadd.xlane.f32.xlu0 %v1751
    %v1753 = vpop.xlane.xlu0 %1752
    %v1754 = vmul.f32 %v1753, 0.001953125
    %v1755 = vmul.f32 %v1750, %v1750
    %v1756 = vsub.f32 %v1754, %v1755
    %v1757 = vsub.f32 %v1599, %v1750
    %v1758 = vsub.f32 %v1601, %v1750
    %v1759 = vadd.f32 %v1756, 1e-05
    %v1760 = vrsqrt.pop %v1759
    %v1761 = vmul.f32 %v1757, %v1760
    %v1762 = vmul.f32 %v1758, %v1760
    %v1763 = vstv %s1088
    %v1764 = vmul.f32 %v1763, %v1761
    %v1765 = vmul.f32 %v1763, %v1762
    %v1766 = vadd.f32 %v1086, %v1764
    %v1767 = vadd.f32 %v1087, %v1765
    %1768 = vrot.lane.b32.xlu0 %v656, 17
    %v1769 = vpop.permute.xlu0 %1768
    %1770 = vrot.lane.b32.xlu0 %v657, 17
    %v1771 = vpop.permute.xlu0 %1770
    %1772 = vrot.lane.b32.xlu0 %v658, 17
    %v1773 = vpop.permute.xlu0 %1772
    %v1774 = vsel %vm108, %v1769, %v1771
    %v1775 = vsel %vm108, %v1771, %v1773
    %v1778 = vsel %vm95, %v1774, 0.0
    %v1779 = vsel %vm96, %v1775, 0.0
    %v1780 = vld [vmem:[%s4] sm:$0xff]
    %1782 = vset.pattern.permute.xlu0 0
    %1783 = vperm.xlu0 %1782, %v1780
    %v1784 = vpop.permute.xlu0 %1783
    %v1786 = vmul.f32 %v1778, %v1784
    %v1787 = vmul.f32 %v1779, %v1784
    %1788 = vset.pattern.permute.xlu0 1
    %1789 = vperm.xlu0 %1788, %v1780
    %v1790 = vpop.permute.xlu0 %1789
    %v1792 = vmul.f32 %v656, %v1790
    %v1793 = vmul.f32 %v657, %v1790
    %v1794 = vmul.f32 %v658, %v1790
    %1798 = vrot.lane.b32.xlu0 %v1792, 16
    %v1799 = vpop.permute.xlu0 %1798
    %1800 = vrot.lane.b32.xlu0 %v1793, 16
    %v1801 = vpop.permute.xlu0 %1800
    %1802 = vrot.lane.b32.xlu0 %v1794, 16
    %v1803 = vpop.permute.xlu0 %1802
    %v1804 = vsel %vm125, %v1799, %v1801
    %v1805 = vsel %vm125, %v1801, %v1803
    %v1808 = vadd.f32 %v1786, %v1804
    %v1809 = vadd.f32 %v1787, %v1805
    %1810 = vrot.lane.b32.xlu0 %v656, 15
    %v1811 = vpop.permute.xlu0 %1810
    %1812 = vrot.lane.b32.xlu0 %v657, 15
    %v1813 = vpop.permute.xlu0 %1812
    %1814 = vrot.lane.b32.xlu0 %v658, 15
    %v1815 = vpop.permute.xlu0 %1814
    %v1816 = vsel %vm152, %v1811, %v1813
    %v1817 = vsel %vm152, %v1813, %v1815
    %v1820 = vsel %vm142, %v1816, 0.0
    %v1821 = vsel %vm143, %v1817, 0.0
    %1822 = vset.pattern.permute.xlu0 2
    %1823 = vperm.xlu0 %1822, %v1780
    %v1824 = vpop.permute.xlu0 %1823
    %v1826 = vmul.f32 %v1820, %v1824
    %v1827 = vmul.f32 %v1821, %v1824
    %v1828 = vadd.f32 %v1808, %v1826
    %v1829 = vadd.f32 %v1809, %v1827
    %1830 = vrot.lane.b32.xlu0 %v656, 1
    %v1831 = vpop.permute.xlu0 %1830
    %1832 = vrot.lane.b32.xlu0 %v657, 1
    %v1833 = vpop.permute.xlu0 %1832
    %1834 = vrot.lane.b32.xlu0 %v658, 1
    %v1835 = vpop.permute.xlu0 %1834
    %v1836 = vsel %vm175, %v1831, %v1833
    %v1837 = vsel %vm175, %v1833, %v1835
    %v1840 = vsel %vm95, %v1836, 0.0
    %v1841 = vsel %vm96, %v1837, 0.0
    %1842 = vset.pattern.permute.xlu0 3
    %1843 = vperm.xlu0 %1842, %v1780
    %v1844 = vpop.permute.xlu0 %1843
    %v1846 = vmul.f32 %v1840, %v1844
    %v1847 = vmul.f32 %v1841, %v1844
    %v1848 = vadd.f32 %v1828, %v1846
    %v1849 = vadd.f32 %v1829, %v1847
    %1850 = vset.pattern.permute.xlu0 4
    %1851 = vperm.xlu0 %1850, %v1780
    %v1852 = vpop.permute.xlu0 %1851
    %v1854 = vmul.f32 %v657, %v1852
    %v1855 = vmul.f32 %v658, %v1852
    %v1856 = vadd.f32 %v1848, %v1854
    %v1857 = vadd.f32 %v1849, %v1855
    %1858 = vrot.lane.b32.xlu0 %v756, 127
    %v1859 = vpop.permute.xlu0 %1858
    %1860 = vrot.lane.b32.xlu0 %v757, 127
    %v1861 = vpop.permute.xlu0 %1860
    %1862 = vrot.lane.b32.xlu0 %v758, 127
    %v1863 = vpop.permute.xlu0 %1862
    %v1864 = vsel %vm210, %v1859, %v1861
    %v1865 = vsel %vm210, %v1861, %v1863
    %v1868 = vsel %vm142, %v1864, 0.0
    %v1869 = vsel %vm143, %v1865, 0.0
    %1870 = vset.pattern.permute.xlu0 5
    %1871 = vperm.xlu0 %1870, %v1780
    %v1872 = vpop.permute.xlu0 %1871
    %v1874 = vmul.f32 %v1868, %v1872
    %v1875 = vmul.f32 %v1869, %v1872
    %v1876 = vadd.f32 %v1856, %v1874
    %v1877 = vadd.f32 %v1857, %v1875
    %1878 = vrot.lane.b32.xlu0 %v756, 113
    %v1879 = vpop.permute.xlu0 %1878
    %1880 = vrot.lane.b32.xlu0 %v757, 113
    %v1881 = vpop.permute.xlu0 %1880
    %1882 = vrot.lane.b32.xlu0 %v758, 113
    %v1883 = vpop.permute.xlu0 %1882
    %v1884 = vsel %vm237, %v1879, %v1881
    %v1885 = vsel %vm237, %v1881, %v1883
    %v1888 = vsel %vm95, %v1884, 0.0
    %v1889 = vsel %vm96, %v1885, 0.0
    %1890 = vset.pattern.permute.xlu0 6
    %1891 = vperm.xlu0 %1890, %v1780
    %v1892 = vpop.permute.xlu0 %1891
    %v1894 = vmul.f32 %v1888, %v1892
    %v1895 = vmul.f32 %v1889, %v1892
    %v1896 = vadd.f32 %v1876, %v1894
    %v1897 = vadd.f32 %v1877, %v1895
    %1898 = vset.pattern.permute.xlu0 7
    %1899 = vperm.xlu0 %1898, %v1780
    %v1900 = vpop.permute.xlu0 %1899
    %v1902 = vmul.f32 %v756, %v1900
    %v1903 = vmul.f32 %v757, %v1900
    %v1904 = vmul.f32 %v758, %v1900
    %1908 = vrot.lane.b32.xlu0 %v1902, 112
    %v1909 = vpop.permute.xlu0 %1908
    %1910 = vrot.lane.b32.xlu0 %v1903, 112
    %v1911 = vpop.permute.xlu0 %1910
    %1912 = vrot.lane.b32.xlu0 %v1904, 112
    %v1913 = vpop.permute.xlu0 %1912
    %v1914 = vsel %vm260, %v1909, %v1911
    %v1915 = vsel %vm260, %v1911, %v1913
    %v1918 = vadd.f32 %v1896, %v1914
    %v1919 = vadd.f32 %v1897, %v1915
    %1920 = vrot.lane.b32.xlu0 %v756, 111
    %v1921 = vpop.permute.xlu0 %1920
    %1922 = vrot.lane.b32.xlu0 %v757, 111
    %v1923 = vpop.permute.xlu0 %1922
    %1924 = vrot.lane.b32.xlu0 %v758, 111
    %v1925 = vpop.permute.xlu0 %1924
    %v1926 = vsel %vm285, %v1921, %v1923
    %v1927 = vsel %vm285, %v1923, %v1925
    %v1930 = vsel %vm142, %v1926, 0.0
    %v1931 = vsel %vm143, %v1927, 0.0
    %1932 = vset.pattern.permute.xlu0 8
    %1933 = vperm.xlu0 %1932, %v1780
    %v1934 = vpop.permute.xlu0 %1933
    %v1936 = vmul.f32 %v1930, %v1934
    %v1937 = vmul.f32 %v1931, %v1934
    %v1938 = vadd.f32 %v1918, %v1936
    %v1939 = vadd.f32 %v1919, %v1937
    %v1940 = vld [vmem:[%s5] sm:$0xff]
    %v1942 = vsel %vm306, %v1940, 0
    %1944 = vmatprep.subr.mxu0 %v1939
    %1945 = vmatpush1.msra.mxu0 %v1938
    %1946 = vmatprep.subr.mxu0 0.0
    %1947 = vmatpush1.msra.mxu0 0.0
    %1948 = vmatprep.subr.mxu0 0.0
    %1949 = vmatpush1.msra.mxu0 0.0
    %1950 = vmatprep.subr.mxu0 0.0
    %1951 = vmatpush1.msra.mxu0 0.0
    %1952 = vmatprep.subr.mxu0 0.0
    %1953 = vmatpush1.msra.mxu0 0.0
    %1954 = vmatprep.subr.mxu0 0.0
    %1955 = vmatpush1.msra.mxu0 0.0
    %1956 = vmatprep.subr.mxu0 0.0
    %1957 = vmatpush1.msra.mxu0 0.0
    %1958 = vmatprep.subr.mxu0 0.0
    %1959 = vmatpush1.msra.mxu0 0.0
    %1960 = vmatprep.subr.mxu0 0.0
    %1961 = vmatpush1.msra.mxu0 0.0
    %1962 = vmatprep.subr.mxu0 0.0
    %1963 = vmatpush1.msra.mxu0 0.0
    %1964 = vmatprep.subr.mxu0 0.0
    %1965 = vmatpush1.msra.mxu0 0.0
    %1966 = vmatprep.subr.mxu0 0.0
    %1967 = vmatpush1.msra.mxu0 0.0
    %1968 = vmatprep.subr.mxu0 0.0
    %1969 = vmatpush1.msra.mxu0 0.0
    %1970 = vmatprep.subr.mxu0 0.0
    %1971 = vmatpush1.msra.mxu0 0.0
    %1972 = vmatprep.subr.mxu0 0.0
    %1973 = vmatpush1.msra.mxu0 0.0
    %1974 = vmatprep.subr.mxu0 0.0
    %1975 = vmatpush1.msra.mxu0 0.0
    %1976 = vmatprep.subr.mxu0 0.0
    %1977 = vmatpush1.msra.mxu0 0.0
    %1978 = vmatprep.subr.mxu0 0.0
    %1979 = vmatpush1.msra.mxu0 0.0
    %1980 = vmatprep.subr.mxu0 0.0
    %1981 = vmatpush1.msra.mxu0 0.0
    %1982 = vmatprep.subr.mxu0 0.0
    %1983 = vmatpush1.msra.mxu0 0.0
    %1984 = vmatprep.subr.mxu0 0.0
    %1985 = vmatpush1.msra.mxu0 0.0
    %1986 = vmatprep.subr.mxu0 0.0
    %1987 = vmatpush1.msra.mxu0 0.0
    %1988 = vmatprep.subr.mxu0 0.0
    %1989 = vmatpush1.msra.mxu0 0.0
    %1990 = vmatprep.subr.mxu0 0.0
    %1991 = vmatpush1.msra.mxu0 0.0
    %1992 = vmatprep.subr.mxu0 0.0
    %1993 = vmatpush1.msra.mxu0 0.0
    %1994 = vmatprep.subr.mxu0 0.0
    %1995 = vmatpush1.msra.mxu0 0.0
    %1996 = vmatprep.subr.mxu0 0.0
    %1997 = vmatpush1.msra.mxu0 0.0
    %1998 = vmatprep.subr.mxu0 0.0
    %1999 = vmatpush1.msra.mxu0 0.0
    %2000 = vmatprep.subr.mxu0 0.0
    %2001 = vmatpush1.msra.mxu0 0.0
    %2002 = vmatprep.subr.mxu0 0.0
    %2003 = vmatpush1.msra.mxu0 0.0
    %2004 = vmatprep.subr.mxu0 0.0
    %2005 = vmatpush1.msra.mxu0 0.0
    %2006 = vmatprep.subr.mxu0 0.0
    %2007 = vmatpush1.msra.mxu0 0.0
    %2008 = vmatprep.mubr.f32.mxu0 0.0
    %2009 = vmatmul.mubr.f32.gmra.mrb[0].mxu0 %v1942
    %v2010 = vpop.f32.mrb[0].mxu0
    %v2011 = vadd.f32 0.0, %v2010
    %v2012 = vpop.f32.mrb[0].mxu0
    %v2013 = vadd.f32 0.0, %v2012
    %2014 = vdwg.mxu0
    %2015 = vmatprep.subr.mxu0 %v2013
    %2016 = vmatpush1.msra.mxu0 %v2011
    %2017 = vmatprep.subr.mxu0 0.0
    %2018 = vmatpush1.msra.mxu0 0.0
    %2019 = vmatprep.subr.mxu0 0.0
    %2020 = vmatpush1.msra.mxu0 0.0
    %2021 = vmatprep.subr.mxu0 0.0
    %2022 = vmatpush1.msra.mxu0 0.0
    %2023 = vmatprep.subr.mxu0 0.0
    %2024 = vmatpush1.msra.mxu0 0.0
    %2025 = vmatprep.subr.mxu0 0.0
    %2026 = vmatpush1.msra.mxu0 0.0
    %2027 = vmatprep.subr.mxu0 0.0
    %2028 = vmatpush1.msra.mxu0 0.0
    %2029 = vmatprep.subr.mxu0 0.0
    %2030 = vmatpush1.msra.mxu0 0.0
    %2031 = vmatprep.subr.mxu0 0.0
    %2032 = vmatpush1.msra.mxu0 0.0
    %2033 = vmatprep.subr.mxu0 0.0
    %2034 = vmatpush1.msra.mxu0 0.0
    %2035 = vmatprep.subr.mxu0 0.0
    %2036 = vmatpush1.msra.mxu0 0.0
    %2037 = vmatprep.subr.mxu0 0.0
    %2038 = vmatpush1.msra.mxu0 0.0
    %2039 = vmatprep.subr.mxu0 0.0
    %2040 = vmatpush1.msra.mxu0 0.0
    %2041 = vmatprep.subr.mxu0 0.0
    %2042 = vmatpush1.msra.mxu0 0.0
    %2043 = vmatprep.subr.mxu0 0.0
    %2044 = vmatpush1.msra.mxu0 0.0
    %2045 = vmatprep.subr.mxu0 0.0
    %2046 = vmatpush1.msra.mxu0 0.0
    %2047 = vmatprep.subr.mxu0 0.0
    %2048 = vmatpush1.msra.mxu0 0.0
    %2049 = vmatprep.subr.mxu0 0.0
    %2050 = vmatpush1.msra.mxu0 0.0
    %2051 = vmatprep.subr.mxu0 0.0
    %2052 = vmatpush1.msra.mxu0 0.0
    %2053 = vmatprep.subr.mxu0 0.0
    %2054 = vmatpush1.msra.mxu0 0.0
    %2055 = vmatprep.subr.mxu0 0.0
    %2056 = vmatpush1.msra.mxu0 0.0
    %2057 = vmatprep.subr.mxu0 0.0
    %2058 = vmatpush1.msra.mxu0 0.0
    %2059 = vmatprep.subr.mxu0 0.0
    %2060 = vmatpush1.msra.mxu0 0.0
    %2061 = vmatprep.subr.mxu0 0.0
    %2062 = vmatpush1.msra.mxu0 0.0
    %2063 = vmatprep.subr.mxu0 0.0
    %2064 = vmatpush1.msra.mxu0 0.0
    %2065 = vmatprep.subr.mxu0 0.0
    %2066 = vmatpush1.msra.mxu0 0.0
    %2067 = vmatprep.subr.mxu0 0.0
    %2068 = vmatpush1.msra.mxu0 0.0
    %2069 = vmatprep.subr.mxu0 0.0
    %2070 = vmatpush1.msra.mxu0 0.0
    %2071 = vmatprep.subr.mxu0 0.0
    %2072 = vmatpush1.msra.mxu0 0.0
    %2073 = vmatprep.subr.mxu0 0.0
    %2074 = vmatpush1.msra.mxu0 0.0
    %2075 = vmatprep.subr.mxu0 0.0
    %2076 = vmatpush1.msra.mxu0 0.0
    %2077 = vmatprep.subr.mxu0 0.0
    %2078 = vmatpush1.msra.mxu0 0.0
    %2079 = vmatprep.mubr.f32.mxu0 0.0
    %2080 = vmatmul.mubr.f32.gmra.mrb[0].mxu0 %v308
    %v2081 = vpop.f32.mrb[0].mxu0
    %v2082 = vadd.f32 0.0, %v2081
    %v2083 = vpop.f32.mrb[0].mxu0
    %v2084 = vadd.f32 0.0, %v2083
    %2085 = vdwg.mxu0
    %v2086 = vmul.f32 %v2011, %v2011
    %v2087 = vmul.f32 %v2013, %v2013
    %2088 = vmatprep.subr.mxu0 %v2087
    %2089 = vmatpush1.msra.mxu0 %v2086
    %2090 = vmatprep.subr.mxu0 0.0
    %2091 = vmatpush1.msra.mxu0 0.0
    %2092 = vmatprep.subr.mxu0 0.0
    %2093 = vmatpush1.msra.mxu0 0.0
    %2094 = vmatprep.subr.mxu0 0.0
    %2095 = vmatpush1.msra.mxu0 0.0
    %2096 = vmatprep.subr.mxu0 0.0
    %2097 = vmatpush1.msra.mxu0 0.0
    %2098 = vmatprep.subr.mxu0 0.0
    %2099 = vmatpush1.msra.mxu0 0.0
    %2100 = vmatprep.subr.mxu0 0.0
    %2101 = vmatpush1.msra.mxu0 0.0
    %2102 = vmatprep.subr.mxu0 0.0
    %2103 = vmatpush1.msra.mxu0 0.0
    %2104 = vmatprep.subr.mxu0 0.0
    %2105 = vmatpush1.msra.mxu0 0.0
    %2106 = vmatprep.subr.mxu0 0.0
    %2107 = vmatpush1.msra.mxu0 0.0
    %2108 = vmatprep.subr.mxu0 0.0
    %2109 = vmatpush1.msra.mxu0 0.0
    %2110 = vmatprep.subr.mxu0 0.0
    %2111 = vmatpush1.msra.mxu0 0.0
    %2112 = vmatprep.subr.mxu0 0.0
    %2113 = vmatpush1.msra.mxu0 0.0
    %2114 = vmatprep.subr.mxu0 0.0
    %2115 = vmatpush1.msra.mxu0 0.0
    %2116 = vmatprep.subr.mxu0 0.0
    %2117 = vmatpush1.msra.mxu0 0.0
    %2118 = vmatprep.subr.mxu0 0.0
    %2119 = vmatpush1.msra.mxu0 0.0
    %2120 = vmatprep.subr.mxu0 0.0
    %2121 = vmatpush1.msra.mxu0 0.0
    %2122 = vmatprep.subr.mxu0 0.0
    %2123 = vmatpush1.msra.mxu0 0.0
    %2124 = vmatprep.subr.mxu0 0.0
    %2125 = vmatpush1.msra.mxu0 0.0
    %2126 = vmatprep.subr.mxu0 0.0
    %2127 = vmatpush1.msra.mxu0 0.0
    %2128 = vmatprep.subr.mxu0 0.0
    %2129 = vmatpush1.msra.mxu0 0.0
    %2130 = vmatprep.subr.mxu0 0.0
    %2131 = vmatpush1.msra.mxu0 0.0
    %2132 = vmatprep.subr.mxu0 0.0
    %2133 = vmatpush1.msra.mxu0 0.0
    %2134 = vmatprep.subr.mxu0 0.0
    %2135 = vmatpush1.msra.mxu0 0.0
    %2136 = vmatprep.subr.mxu0 0.0
    %2137 = vmatpush1.msra.mxu0 0.0
    %2138 = vmatprep.subr.mxu0 0.0
    %2139 = vmatpush1.msra.mxu0 0.0
    %2140 = vmatprep.subr.mxu0 0.0
    %2141 = vmatpush1.msra.mxu0 0.0
    %2142 = vmatprep.subr.mxu0 0.0
    %2143 = vmatpush1.msra.mxu0 0.0
    %2144 = vmatprep.subr.mxu0 0.0
    %2145 = vmatpush1.msra.mxu0 0.0
    %2146 = vmatprep.subr.mxu0 0.0
    %2147 = vmatpush1.msra.mxu0 0.0
    %2148 = vmatprep.subr.mxu0 0.0
    %2149 = vmatpush1.msra.mxu0 0.0
    %2150 = vmatprep.subr.mxu0 0.0
    %2151 = vmatpush1.msra.mxu0 0.0
    %2152 = vmatprep.mubr.f32.mxu0 0.0
    %2153 = vmatmul.mubr.f32.gmra.mrb[0].mxu0 %v308
    %v2154 = vpop.f32.mrb[0].mxu0
    %v2155 = vadd.f32 0.0, %v2154
    %v2156 = vpop.f32.mrb[0].mxu0
    %v2157 = vadd.f32 0.0, %v2156
    %2158 = vdwg.mxu0
    %v2159 = vadd.f32 %v2082, %v2084
    %2160 = vadd.xlane.f32.xlu0 %v2159
    %v2161 = vpop.xlane.xlu0 %2160
    %v2162 = vmul.f32 %v2161, 0.001953125
    %v2163 = vadd.f32 %v2155, %v2157
    %2164 = vadd.xlane.f32.xlu0 %v2163
    %v2165 = vpop.xlane.xlu0 %2164
    %v2166 = vmul.f32 %v2165, 0.001953125
    %v2167 = vmul.f32 %v2162, %v2162
    %v2168 = vsub.f32 %v2166, %v2167
    %v2169 = vsub.f32 %v2011, %v2162
    %v2170 = vsub.f32 %v2013, %v2162
    %v2171 = vadd.f32 %v2168, 1e-05
    %v2172 = vrsqrt.pop %v2171
    %v2173 = vmul.f32 %v2169, %v2172
    %v2174 = vmul.f32 %v2170, %v2172
    %v2175 = vld [vmem:[%s8] sm:$0xff]
    %2177 = vset.pattern.permute.xlu0 0
    %2178 = vperm.xlu0 %2177, %v2175
    %v2179 = vpop.permute.xlu0 %2178
    %v2181 = vmul.f32 %v673, %v2179
    %v2182 = vmul.f32 %v674, %v2179
    %2183 = vrot.lane.b32.xlu0 %v656, 33
    %v2184 = vpop.permute.xlu0 %2183
    %2185 = vrot.lane.b32.xlu0 %v657, 33
    %v2186 = vpop.permute.xlu0 %2185
    %2187 = vrot.lane.b32.xlu0 %v658, 33
    %v2188 = vpop.permute.xlu0 %2187
    %vm2189 = vcmask 269312
    %v2190 = vsel %vm2189, %v2184, %v2186
    %v2191 = vsel %vm2189, %v2186, %v2188
    %v2194 = vsel %vm95, %v2190, 0.0
    %v2195 = vsel %vm96, %v2191, 0.0
    %2196 = vset.pattern.permute.xlu0 1
    %2197 = vperm.xlu0 %2196, %v2175
    %v2198 = vpop.permute.xlu0 %2197
    %v2200 = vmul.f32 %v2194, %v2198
    %v2201 = vmul.f32 %v2195, %v2198
    %v2202 = vadd.f32 %v2181, %v2200
    %v2203 = vadd.f32 %v2182, %v2201
    %2204 = vset.pattern.permute.xlu0 2
    %2205 = vperm.xlu0 %2204, %v2175
    %v2206 = vpop.permute.xlu0 %2205
    %v2208 = vmul.f32 %v656, %v2206
    %v2209 = vmul.f32 %v657, %v2206
    %v2210 = vmul.f32 %v658, %v2206
    %2214 = vrot.lane.b32.xlu0 %v2208, 32
    %v2215 = vpop.permute.xlu0 %2214
    %2216 = vrot.lane.b32.xlu0 %v2209, 32
    %v2217 = vpop.permute.xlu0 %2216
    %2218 = vrot.lane.b32.xlu0 %v2210, 32
    %v2219 = vpop.permute.xlu0 %2218
    %v2220 = vsel %vm699, %v2215, %v2217
    %v2221 = vsel %vm699, %v2217, %v2219
    %v2224 = vadd.f32 %v2202, %v2220
    %v2225 = vadd.f32 %v2203, %v2221
    %2226 = vrot.lane.b32.xlu0 %v656, 31
    %v2227 = vpop.permute.xlu0 %2226
    %2228 = vrot.lane.b32.xlu0 %v657, 31
    %v2229 = vpop.permute.xlu0 %2228
    %2230 = vrot.lane.b32.xlu0 %v658, 31
    %v2231 = vpop.permute.xlu0 %2230
    %vm2232 = vcmask 252928
    %v2233 = vsel %vm2232, %v2227, %v2229
    %v2234 = vsel %vm2232, %v2229, %v2231
    %v2237 = vsel %vm142, %v2233, 0.0
    %v2238 = vsel %vm143, %v2234, 0.0
    %2239 = vset.pattern.permute.xlu0 3
    %2240 = vperm.xlu0 %2239, %v2175
    %v2241 = vpop.permute.xlu0 %2240
    %v2243 = vmul.f32 %v2237, %v2241
    %v2244 = vmul.f32 %v2238, %v2241
    %v2245 = vadd.f32 %v2224, %v2243
    %v2246 = vadd.f32 %v2225, %v2244
    %2247 = vset.pattern.permute.xlu0 4
    %2248 = vperm.xlu0 %2247, %v2175
    %v2249 = vpop.permute.xlu0 %2248
    %v2251 = vmul.f32 %v717, %v2249
    %v2252 = vmul.f32 %v718, %v2249
    %v2253 = vadd.f32 %v2245, %v2251
    %v2254 = vadd.f32 %v2246, %v2252
    %2255 = vrot.lane.b32.xlu0 %v656, 18
    %v2256 = vpop.permute.xlu0 %2255
    %2257 = vrot.lane.b32.xlu0 %v657, 18
    %v2258 = vpop.permute.xlu0 %2257
    %2259 = vrot.lane.b32.xlu0 %v658, 18
    %v2260 = vpop.permute.xlu0 %2259
    %vm2261 = vcmask 146432
    %v2262 = vsel %vm2261, %v2256, %v2258
    %v2263 = vsel %vm2261, %v2258, %v2260
    %v2266 = vsel %vm652, %v2262, 0.0
    %v2267 = vsel %vm653, %v2263, 0.0
    %2268 = vset.pattern.permute.xlu0 5
    %2269 = vperm.xlu0 %2268, %v2175
    %v2270 = vpop.permute.xlu0 %2269
    %v2272 = vmul.f32 %v2266, %v2270
    %v2273 = vmul.f32 %v2267, %v2270
    %v2274 = vadd.f32 %v2253, %v2272
    %v2275 = vadd.f32 %v2254, %v2273
    %2276 = vset.pattern.permute.xlu0 6
    %2277 = vperm.xlu0 %2276, %v2175
    %v2278 = vpop.permute.xlu0 %2277
    %v2280 = vmul.f32 %v1778, %v2278
    %v2281 = vmul.f32 %v1779, %v2278
    %v2282 = vadd.f32 %v2274, %v2280
    %v2283 = vadd.f32 %v2275, %v2281
    %2284 = vset.pattern.permute.xlu0 7
    %2285 = vperm.xlu0 %2284, %v2175
    %v2286 = vpop.permute.xlu0 %2285
    %v2288 = vmul.f32 %v656, %v2286
    %v2289 = vmul.f32 %v657, %v2286
    %v2290 = vmul.f32 %v658, %v2286
    %2294 = vrot.lane.b32.xlu0 %v2288, 16
    %v2295 = vpop.permute.xlu0 %2294
    %2296 = vrot.lane.b32.xlu0 %v2289, 16
    %v2297 = vpop.permute.xlu0 %2296
    %2298 = vrot.lane.b32.xlu0 %v2290, 16
    %v2299 = vpop.permute.xlu0 %2298
    %v2300 = vsel %vm125, %v2295, %v2297
    %v2301 = vsel %vm125, %v2297, %v2299
    %v2304 = vadd.f32 %v2282, %v2300
    %v2305 = vadd.f32 %v2283, %v2301
    %2306 = vset.pattern.permute.xlu0 8
    %2307 = vperm.xlu0 %2306, %v2175
    %v2308 = vpop.permute.xlu0 %2307
    %v2310 = vmul.f32 %v1820, %v2308
    %v2311 = vmul.f32 %v1821, %v2308
    %v2312 = vadd.f32 %v2304, %v2310
    %v2313 = vadd.f32 %v2305, %v2311
    %2314 = vrot.lane.b32.xlu0 %v656, 14
    %v2315 = vpop.permute.xlu0 %2314
    %2316 = vrot.lane.b32.xlu0 %v657, 14
    %v2317 = vpop.permute.xlu0 %2316
    %2318 = vrot.lane.b32.xlu0 %v658, 14
    %v2319 = vpop.permute.xlu0 %2318
    %vm2320 = vcmask 113664
    %v2321 = vsel %vm2320, %v2315, %v2317
    %v2322 = vsel %vm2320, %v2317, %v2319
    %v2325 = vsel %vm654, %v2321, 0.0
    %v2326 = vsel %vm655, %v2322, 0.0
    %2327 = vset.pattern.permute.xlu0 9
    %2328 = vperm.xlu0 %2327, %v2175
    %v2329 = vpop.permute.xlu0 %2328
    %v2331 = vmul.f32 %v2325, %v2329
    %v2332 = vmul.f32 %v2326, %v2329
    %v2333 = vadd.f32 %v2312, %v2331
    %v2334 = vadd.f32 %v2313, %v2332
    %2335 = vset.pattern.permute.xlu0 10
    %2336 = vperm.xlu0 %2335, %v2175
    %v2337 = vpop.permute.xlu0 %2336
    %v2339 = vmul.f32 %v738, %v2337
    %v2340 = vmul.f32 %v739, %v2337
    %v2341 = vadd.f32 %v2333, %v2339
    %v2342 = vadd.f32 %v2334, %v2340
    %2343 = vset.pattern.permute.xlu0 11
    %2344 = vperm.xlu0 %2343, %v2175
    %v2345 = vpop.permute.xlu0 %2344
    %v2347 = vmul.f32 %v1840, %v2345
    %v2348 = vmul.f32 %v1841, %v2345
    %v2349 = vadd.f32 %v2341, %v2347
    %v2350 = vadd.f32 %v2342, %v2348
    %2351 = vset.pattern.permute.xlu0 12
    %2352 = vperm.xlu0 %2351, %v2175
    %v2353 = vpop.permute.xlu0 %2352
    %v2355 = vmul.f32 %v657, %v2353
    %v2356 = vmul.f32 %v658, %v2353
    %v2357 = vadd.f32 %v2349, %v2355
    %v2358 = vadd.f32 %v2350, %v2356
    %2359 = vset.pattern.permute.xlu0 13
    %2360 = vperm.xlu0 %2359, %v2175
    %v2361 = vpop.permute.xlu0 %2360
    %v2363 = vmul.f32 %v1868, %v2361
    %v2364 = vmul.f32 %v1869, %v2361
    %v2365 = vadd.f32 %v2357, %v2363
    %v2366 = vadd.f32 %v2358, %v2364
    %2367 = vset.pattern.permute.xlu0 14
    %2368 = vperm.xlu0 %2367, %v2175
    %v2369 = vpop.permute.xlu0 %2368
    %v2371 = vmul.f32 %v773, %v2369
    %v2372 = vmul.f32 %v774, %v2369
    %v2373 = vadd.f32 %v2365, %v2371
    %v2374 = vadd.f32 %v2366, %v2372
    %2375 = vrot.lane.b32.xlu0 %v756, 114
    %v2376 = vpop.permute.xlu0 %2375
    %2377 = vrot.lane.b32.xlu0 %v757, 114
    %v2378 = vpop.permute.xlu0 %2377
    %2379 = vrot.lane.b32.xlu0 %v758, 114
    %v2380 = vpop.permute.xlu0 %2379
    %vm2381 = vcmask 932864
    %v2382 = vsel %vm2381, %v2376, %v2378
    %v2383 = vsel %vm2381, %v2378, %v2380
    %v2386 = vsel %vm652, %v2382, 0.0
    %v2387 = vsel %vm653, %v2383, 0.0
    %2388 = vset.pattern.permute.xlu0 15
    %2389 = vperm.xlu0 %2388, %v2175
    %v2390 = vpop.permute.xlu0 %2389
    %v2392 = vmul.f32 %v2386, %v2390
    %v2393 = vmul.f32 %v2387, %v2390
    %v2394 = vadd.f32 %v2373, %v2392
    %v2395 = vadd.f32 %v2374, %v2393
    %2396 = vset.pattern.permute.xlu0 16
    %2397 = vperm.xlu0 %2396, %v2175
    %v2398 = vpop.permute.xlu0 %2397
    %v2400 = vmul.f32 %v1888, %v2398
    %v2401 = vmul.f32 %v1889, %v2398
    %v2402 = vadd.f32 %v2394, %v2400
    %v2403 = vadd.f32 %v2395, %v2401
    %2404 = vset.pattern.permute.xlu0 17
    %2405 = vperm.xlu0 %2404, %v2175
    %v2406 = vpop.permute.xlu0 %2405
    %v2408 = vmul.f32 %v756, %v2406
    %v2409 = vmul.f32 %v757, %v2406
    %v2410 = vmul.f32 %v758, %v2406
    %2414 = vrot.lane.b32.xlu0 %v2408, 112
    %v2415 = vpop.permute.xlu0 %2414
    %2416 = vrot.lane.b32.xlu0 %v2409, 112
    %v2417 = vpop.permute.xlu0 %2416
    %2418 = vrot.lane.b32.xlu0 %v2410, 112
    %v2419 = vpop.permute.xlu0 %2418
    %v2420 = vsel %vm260, %v2415, %v2417
    %v2421 = vsel %vm260, %v2417, %v2419
    %v2424 = vadd.f32 %v2402, %v2420
    %v2425 = vadd.f32 %v2403, %v2421
    %2426 = vset.pattern.permute.xlu0 18
    %2427 = vperm.xlu0 %2426, %v2175
    %v2428 = vpop.permute.xlu0 %2427
    %v2430 = vmul.f32 %v1930, %v2428
    %v2431 = vmul.f32 %v1931, %v2428
    %v2432 = vadd.f32 %v2424, %v2430
    %v2433 = vadd.f32 %v2425, %v2431
    %2434 = vrot.lane.b32.xlu0 %v756, 110
    %v2435 = vpop.permute.xlu0 %2434
    %2436 = vrot.lane.b32.xlu0 %v757, 110
    %v2437 = vpop.permute.xlu0 %2436
    %2438 = vrot.lane.b32.xlu0 %v758, 110
    %v2439 = vpop.permute.xlu0 %2438
    %vm2440 = vcmask 900096
    %v2441 = vsel %vm2440, %v2435, %v2437
    %v2442 = vsel %vm2440, %v2437, %v2439
    %v2445 = vsel %vm654, %v2441, 0.0
    %v2446 = vsel %vm655, %v2442, 0.0
    %2447 = vset.pattern.permute.xlu0 19
    %2448 = vperm.xlu0 %2447, %v2175
    %v2449 = vpop.permute.xlu0 %2448
    %v2451 = vmul.f32 %v2445, %v2449
    %v2452 = vmul.f32 %v2446, %v2449
    %v2453 = vadd.f32 %v2432, %v2451
    %v2454 = vadd.f32 %v2433, %v2452
    %2455 = vset.pattern.permute.xlu0 20
    %2456 = vperm.xlu0 %2455, %v2175
    %v2457 = vpop.permute.xlu0 %2456
    %v2459 = vmul.f32 %v794, %v2457
    %v2460 = vmul.f32 %v795, %v2457
    %v2461 = vadd.f32 %v2453, %v2459
    %v2462 = vadd.f32 %v2454, %v2460
    %2463 = vrot.lane.b32.xlu0 %v756, 97
    %v2464 = vpop.permute.xlu0 %2463
    %2465 = vrot.lane.b32.xlu0 %v757, 97
    %v2466 = vpop.permute.xlu0 %2465
    %2467 = vrot.lane.b32.xlu0 %v758, 97
    %v2468 = vpop.permute.xlu0 %2467
    %vm2469 = vcmask 793600
    %v2470 = vsel %vm2469, %v2464, %v2466
    %v2471 = vsel %vm2469, %v2466, %v2468
    %v2474 = vsel %vm95, %v2470, 0.0
    %v2475 = vsel %vm96, %v2471, 0.0
    %2476 = vset.pattern.permute.xlu0 21
    %2477 = vperm.xlu0 %2476, %v2175
    %v2478 = vpop.permute.xlu0 %2477
    %v2480 = vmul.f32 %v2474, %v2478
    %v2481 = vmul.f32 %v2475, %v2478
    %v2482 = vadd.f32 %v2461, %v2480
    %v2483 = vadd.f32 %v2462, %v2481
    %2484 = vset.pattern.permute.xlu0 22
    %2485 = vperm.xlu0 %2484, %v2175
    %v2486 = vpop.permute.xlu0 %2485
    %v2488 = vmul.f32 %v756, %v2486
    %v2489 = vmul.f32 %v757, %v2486
    %v2490 = vmul.f32 %v758, %v2486
    %2494 = vrot.lane.b32.xlu0 %v2488, 96
    %v2495 = vpop.permute.xlu0 %2494
    %2496 = vrot.lane.b32.xlu0 %v2489, 96
    %v2497 = vpop.permute.xlu0 %2496
    %2498 = vrot.lane.b32.xlu0 %v2490, 96
    %v2499 = vpop.permute.xlu0 %2498
    %v2500 = vsel %vm820, %v2495, %v2497
    %v2501 = vsel %vm820, %v2497, %v2499
    %v2504 = vadd.f32 %v2482, %v2500
    %v2505 = vadd.f32 %v2483, %v2501
    %2506 = vrot.lane.b32.xlu0 %v756, 95
    %v2507 = vpop.permute.xlu0 %2506
    %2508 = vrot.lane.b32.xlu0 %v757, 95
    %v2509 = vpop.permute.xlu0 %2508
    %2510 = vrot.lane.b32.xlu0 %v758, 95
    %v2511 = vpop.permute.xlu0 %2510
    %vm2512 = vcmask 777216
    %v2513 = vsel %vm2512, %v2507, %v2509
    %v2514 = vsel %vm2512, %v2509, %v2511
    %v2517 = vsel %vm142, %v2513, 0.0
    %v2518 = vsel %vm143, %v2514, 0.0
    %2519 = vset.pattern.permute.xlu0 23
    %2520 = vperm.xlu0 %2519, %v2175
    %v2521 = vpop.permute.xlu0 %2520
    %v2523 = vmul.f32 %v2517, %v2521
    %v2524 = vmul.f32 %v2518, %v2521
    %v2525 = vadd.f32 %v2504, %v2523
    %v2526 = vadd.f32 %v2505, %v2524
    %2527 = vset.pattern.permute.xlu0 24
    %2528 = vperm.xlu0 %2527, %v2175
    %v2529 = vpop.permute.xlu0 %2528
    %v2531 = vmul.f32 %v838, %v2529
    %v2532 = vmul.f32 %v839, %v2529
    %v2533 = vadd.f32 %v2525, %v2531
    %v2534 = vadd.f32 %v2526, %v2532
    %v2535 = vld [vmem:[%s9] sm:$0xff]
    %v2537 = vsel %vm306, %v2535, 0
    %2539 = vmatprep.subr.mxu0 %v2534
    %2540 = vmatpush1.msra.mxu0 %v2533
    %2541 = vmatprep.subr.mxu0 0.0
    %2542 = vmatpush1.msra.mxu0 0.0
    %2543 = vmatprep.subr.mxu0 0.0
    %2544 = vmatpush1.msra.mxu0 0.0
    %2545 = vmatprep.subr.mxu0 0.0
    %2546 = vmatpush1.msra.mxu0 0.0
    %2547 = vmatprep.subr.mxu0 0.0
    %2548 = vmatpush1.msra.mxu0 0.0
    %2549 = vmatprep.subr.mxu0 0.0
    %2550 = vmatpush1.msra.mxu0 0.0
    %2551 = vmatprep.subr.mxu0 0.0
    %2552 = vmatpush1.msra.mxu0 0.0
    %2553 = vmatprep.subr.mxu0 0.0
    %2554 = vmatpush1.msra.mxu0 0.0
    %2555 = vmatprep.subr.mxu0 0.0
    %2556 = vmatpush1.msra.mxu0 0.0
    %2557 = vmatprep.subr.mxu0 0.0
    %2558 = vmatpush1.msra.mxu0 0.0
    %2559 = vmatprep.subr.mxu0 0.0
    %2560 = vmatpush1.msra.mxu0 0.0
    %2561 = vmatprep.subr.mxu0 0.0
    %2562 = vmatpush1.msra.mxu0 0.0
    %2563 = vmatprep.subr.mxu0 0.0
    %2564 = vmatpush1.msra.mxu0 0.0
    %2565 = vmatprep.subr.mxu0 0.0
    %2566 = vmatpush1.msra.mxu0 0.0
    %2567 = vmatprep.subr.mxu0 0.0
    %2568 = vmatpush1.msra.mxu0 0.0
    %2569 = vmatprep.subr.mxu0 0.0
    %2570 = vmatpush1.msra.mxu0 0.0
    %2571 = vmatprep.subr.mxu0 0.0
    %2572 = vmatpush1.msra.mxu0 0.0
    %2573 = vmatprep.subr.mxu0 0.0
    %2574 = vmatpush1.msra.mxu0 0.0
    %2575 = vmatprep.subr.mxu0 0.0
    %2576 = vmatpush1.msra.mxu0 0.0
    %2577 = vmatprep.subr.mxu0 0.0
    %2578 = vmatpush1.msra.mxu0 0.0
    %2579 = vmatprep.subr.mxu0 0.0
    %2580 = vmatpush1.msra.mxu0 0.0
    %2581 = vmatprep.subr.mxu0 0.0
    %2582 = vmatpush1.msra.mxu0 0.0
    %2583 = vmatprep.subr.mxu0 0.0
    %2584 = vmatpush1.msra.mxu0 0.0
    %2585 = vmatprep.subr.mxu0 0.0
    %2586 = vmatpush1.msra.mxu0 0.0
    %2587 = vmatprep.subr.mxu0 0.0
    %2588 = vmatpush1.msra.mxu0 0.0
    %2589 = vmatprep.subr.mxu0 0.0
    %2590 = vmatpush1.msra.mxu0 0.0
    %2591 = vmatprep.subr.mxu0 0.0
    %2592 = vmatpush1.msra.mxu0 0.0
    %2593 = vmatprep.subr.mxu0 0.0
    %2594 = vmatpush1.msra.mxu0 0.0
    %2595 = vmatprep.subr.mxu0 0.0
    %2596 = vmatpush1.msra.mxu0 0.0
    %2597 = vmatprep.subr.mxu0 0.0
    %2598 = vmatpush1.msra.mxu0 0.0
    %2599 = vmatprep.subr.mxu0 0.0
    %2600 = vmatpush1.msra.mxu0 0.0
    %2601 = vmatprep.subr.mxu0 0.0
    %2602 = vmatpush1.msra.mxu0 0.0
    %2603 = vmatprep.mubr.f32.mxu0 0.0
    %2604 = vmatmul.mubr.f32.gmra.mrb[0].mxu0 %v2537
    %v2605 = vpop.f32.mrb[0].mxu0
    %v2606 = vadd.f32 0.0, %v2605
    %v2607 = vpop.f32.mrb[0].mxu0
    %v2608 = vadd.f32 0.0, %v2607
    %2609 = vdwg.mxu0
    %2610 = vmatprep.subr.mxu0 %v2608
    %2611 = vmatpush1.msra.mxu0 %v2606
    %2612 = vmatprep.subr.mxu0 0.0
    %2613 = vmatpush1.msra.mxu0 0.0
    %2614 = vmatprep.subr.mxu0 0.0
    %2615 = vmatpush1.msra.mxu0 0.0
    %2616 = vmatprep.subr.mxu0 0.0
    %2617 = vmatpush1.msra.mxu0 0.0
    %2618 = vmatprep.subr.mxu0 0.0
    %2619 = vmatpush1.msra.mxu0 0.0
    %2620 = vmatprep.subr.mxu0 0.0
    %2621 = vmatpush1.msra.mxu0 0.0
    %2622 = vmatprep.subr.mxu0 0.0
    %2623 = vmatpush1.msra.mxu0 0.0
    %2624 = vmatprep.subr.mxu0 0.0
    %2625 = vmatpush1.msra.mxu0 0.0
    %2626 = vmatprep.subr.mxu0 0.0
    %2627 = vmatpush1.msra.mxu0 0.0
    %2628 = vmatprep.subr.mxu0 0.0
    %2629 = vmatpush1.msra.mxu0 0.0
    %2630 = vmatprep.subr.mxu0 0.0
    %2631 = vmatpush1.msra.mxu0 0.0
    %2632 = vmatprep.subr.mxu0 0.0
    %2633 = vmatpush1.msra.mxu0 0.0
    %2634 = vmatprep.subr.mxu0 0.0
    %2635 = vmatpush1.msra.mxu0 0.0
    %2636 = vmatprep.subr.mxu0 0.0
    %2637 = vmatpush1.msra.mxu0 0.0
    %2638 = vmatprep.subr.mxu0 0.0
    %2639 = vmatpush1.msra.mxu0 0.0
    %2640 = vmatprep.subr.mxu0 0.0
    %2641 = vmatpush1.msra.mxu0 0.0
    %2642 = vmatprep.subr.mxu0 0.0
    %2643 = vmatpush1.msra.mxu0 0.0
    %2644 = vmatprep.subr.mxu0 0.0
    %2645 = vmatpush1.msra.mxu0 0.0
    %2646 = vmatprep.subr.mxu0 0.0
    %2647 = vmatpush1.msra.mxu0 0.0
    %2648 = vmatprep.subr.mxu0 0.0
    %2649 = vmatpush1.msra.mxu0 0.0
    %2650 = vmatprep.subr.mxu0 0.0
    %2651 = vmatpush1.msra.mxu0 0.0
    %2652 = vmatprep.subr.mxu0 0.0
    %2653 = vmatpush1.msra.mxu0 0.0
    %2654 = vmatprep.subr.mxu0 0.0
    %2655 = vmatpush1.msra.mxu0 0.0
    %2656 = vmatprep.subr.mxu0 0.0
    %2657 = vmatpush1.msra.mxu0 0.0
    %2658 = vmatprep.subr.mxu0 0.0
    %2659 = vmatpush1.msra.mxu0 0.0
    %2660 = vmatprep.subr.mxu0 0.0
    %2661 = vmatpush1.msra.mxu0 0.0
    %2662 = vmatprep.subr.mxu0 0.0
    %2663 = vmatpush1.msra.mxu0 0.0
    %2664 = vmatprep.subr.mxu0 0.0
    %2665 = vmatpush1.msra.mxu0 0.0
    %2666 = vmatprep.subr.mxu0 0.0
    %2667 = vmatpush1.msra.mxu0 0.0
    %2668 = vmatprep.subr.mxu0 0.0
    %2669 = vmatpush1.msra.mxu0 0.0
    %2670 = vmatprep.subr.mxu0 0.0
    %2671 = vmatpush1.msra.mxu0 0.0
    %2672 = vmatprep.subr.mxu0 0.0
    %2673 = vmatpush1.msra.mxu0 0.0
    %2674 = vmatprep.mubr.f32.mxu0 0.0
    %2675 = vmatmul.mubr.f32.gmra.mrb[0].mxu0 %v308
    %v2676 = vpop.f32.mrb[0].mxu0
    %v2677 = vadd.f32 0.0, %v2676
    %v2678 = vpop.f32.mrb[0].mxu0
    %v2679 = vadd.f32 0.0, %v2678
    %2680 = vdwg.mxu0
    %v2681 = vmul.f32 %v2606, %v2606
    %v2682 = vmul.f32 %v2608, %v2608
    %2683 = vmatprep.subr.mxu0 %v2682
    %2684 = vmatpush1.msra.mxu0 %v2681
    %2685 = vmatprep.subr.mxu0 0.0
    %2686 = vmatpush1.msra.mxu0 0.0
    %2687 = vmatprep.subr.mxu0 0.0
    %2688 = vmatpush1.msra.mxu0 0.0
    %2689 = vmatprep.subr.mxu0 0.0
    %2690 = vmatpush1.msra.mxu0 0.0
    %2691 = vmatprep.subr.mxu0 0.0
    %2692 = vmatpush1.msra.mxu0 0.0
    %2693 = vmatprep.subr.mxu0 0.0
    %2694 = vmatpush1.msra.mxu0 0.0
    %2695 = vmatprep.subr.mxu0 0.0
    %2696 = vmatpush1.msra.mxu0 0.0
    %2697 = vmatprep.subr.mxu0 0.0
    %2698 = vmatpush1.msra.mxu0 0.0
    %2699 = vmatprep.subr.mxu0 0.0
    %2700 = vmatpush1.msra.mxu0 0.0
    %2701 = vmatprep.subr.mxu0 0.0
    %2702 = vmatpush1.msra.mxu0 0.0
    %2703 = vmatprep.subr.mxu0 0.0
    %2704 = vmatpush1.msra.mxu0 0.0
    %2705 = vmatprep.subr.mxu0 0.0
    %2706 = vmatpush1.msra.mxu0 0.0
    %2707 = vmatprep.subr.mxu0 0.0
    %2708 = vmatpush1.msra.mxu0 0.0
    %2709 = vmatprep.subr.mxu0 0.0
    %2710 = vmatpush1.msra.mxu0 0.0
    %2711 = vmatprep.subr.mxu0 0.0
    %2712 = vmatpush1.msra.mxu0 0.0
    %2713 = vmatprep.subr.mxu0 0.0
    %2714 = vmatpush1.msra.mxu0 0.0
    %2715 = vmatprep.subr.mxu0 0.0
    %2716 = vmatpush1.msra.mxu0 0.0
    %2717 = vmatprep.subr.mxu0 0.0
    %2718 = vmatpush1.msra.mxu0 0.0
    %2719 = vmatprep.subr.mxu0 0.0
    %2720 = vmatpush1.msra.mxu0 0.0
    %2721 = vmatprep.subr.mxu0 0.0
    %2722 = vmatpush1.msra.mxu0 0.0
    %2723 = vmatprep.subr.mxu0 0.0
    %2724 = vmatpush1.msra.mxu0 0.0
    %2725 = vmatprep.subr.mxu0 0.0
    %2726 = vmatpush1.msra.mxu0 0.0
    %2727 = vmatprep.subr.mxu0 0.0
    %2728 = vmatpush1.msra.mxu0 0.0
    %2729 = vmatprep.subr.mxu0 0.0
    %2730 = vmatpush1.msra.mxu0 0.0
    %2731 = vmatprep.subr.mxu0 0.0
    %2732 = vmatpush1.msra.mxu0 0.0
    %2733 = vmatprep.subr.mxu0 0.0
    %2734 = vmatpush1.msra.mxu0 0.0
    %2735 = vmatprep.subr.mxu0 0.0
    %2736 = vmatpush1.msra.mxu0 0.0
    %2737 = vmatprep.subr.mxu0 0.0
    %2738 = vmatpush1.msra.mxu0 0.0
    %2739 = vmatprep.subr.mxu0 0.0
    %2740 = vmatpush1.msra.mxu0 0.0
    %2741 = vmatprep.subr.mxu0 0.0
    %2742 = vmatpush1.msra.mxu0 0.0
    %2743 = vmatprep.subr.mxu0 0.0
    %2744 = vmatpush1.msra.mxu0 0.0
    %2745 = vmatprep.subr.mxu0 0.0
    %2746 = vmatpush1.msra.mxu0 0.0
    %2747 = vmatprep.mubr.f32.mxu0 0.0
    %2748 = vmatmul.mubr.f32.gmra.mrb[0].mxu0 %v308
    %v2749 = vpop.f32.mrb[0].mxu0
    %v2750 = vadd.f32 0.0, %v2749
    %v2751 = vpop.f32.mrb[0].mxu0
    %v2752 = vadd.f32 0.0, %v2751
    %2753 = vdwg.mxu0
    %v2754 = vadd.f32 %v2677, %v2679
    %2755 = vadd.xlane.f32.xlu0 %v2754
    %v2756 = vpop.xlane.xlu0 %2755
    %v2757 = vmul.f32 %v2756, 0.001953125
    %v2758 = vadd.f32 %v2750, %v2752
    %2759 = vadd.xlane.f32.xlu0 %v2758
    %v2760 = vpop.xlane.xlu0 %2759
    %v2761 = vmul.f32 %v2760, 0.001953125
    %v2762 = vmul.f32 %v2757, %v2757
    %v2763 = vsub.f32 %v2761, %v2762
    %v2764 = vsub.f32 %v2606, %v2757
    %v2765 = vsub.f32 %v2608, %v2757
    %v2766 = vadd.f32 %v2763, 1e-05
    %v2767 = vrsqrt.pop %v2766
    %v2768 = vmul.f32 %v2764, %v2767
    %v2769 = vmul.f32 %v2765, %v2767
    %2770 = vst [vmem:[#allocation3] sm:$0xff] 0.0
    %2771 = vst [vmem:[#allocation3 + $0x18] sm:$0xff] 0.0
    %v2772 = vmax.f32 %v2173, 0.0
    %v2773 = vmax.f32 %v2174, 0.0
    %2774 = vst [vmem:[#allocation3 + $0x8] sm:$0xff] %v2772
    %2775 = vst [vmem:[#allocation3 + $0x10] sm:$0xff] %v2773
    %2776 = vst [vmem:[#allocation4] sm:$0xff] 0.0
    %2777 = vst [vmem:[#allocation4 + $0x18] sm:$0xff] 0.0
    %v2778 = vmax.f32 %v2768, 0.0
    %v2779 = vmax.f32 %v2769, 0.0
    %2780 = vst [vmem:[#allocation4 + $0x8] sm:$0xff] %v2778
    %2781 = vst [vmem:[#allocation4 + $0x10] sm:$0xff] %v2779
    %s2782 = sld [smem:[#allocation5 + $0x3]]
    %v2783 = vld [vmem:[#allocation3] sm:$0xff]
    %v2784 = vld [vmem:[#allocation3 + $0x8] sm:$0xff]
    %v2785 = vld [vmem:[#allocation3 + $0x10] sm:$0xff]
    %2789 = vrot.lane.b32.xlu0 %v2783, 17
    %v2790 = vpop.permute.xlu0 %2789
    %2791 = vrot.lane.b32.xlu0 %v2784, 17
    %v2792 = vpop.permute.xlu0 %2791
    %2793 = vrot.lane.b32.xlu0 %v2785, 17
    %v2794 = vpop.permute.xlu0 %2793
    %v2795 = vsel %vm108, %v2790, %v2792
    %v2796 = vsel %vm108, %v2792, %v2794
    %v2799 = vsel %vm95, %v2795, 0.0
    %v2800 = vsel %vm96, %v2796, 0.0
    %v2801 = vld [vmem:[%s6] sm:$0xff]
    %2803 = vset.pattern.permute.xlu0 0
    %2804 = vperm.xlu0 %2803, %v2801
    %v2805 = vpop.permute.xlu0 %2804
    %v2807 = vmul.f32 %v2799, %v2805
    %v2808 = vmul.f32 %v2800, %v2805
    %2809 = vset.pattern.permute.xlu0 1
    %2810 = vperm.xlu0 %2809, %v2801
    %v2811 = vpop.permute.xlu0 %2810
    %v2813 = vmul.f32 %v2783, %v2811
    %v2814 = vmul.f32 %v2784, %v2811
    %v2815 = vmul.f32 %v2785, %v2811
    %2819 = vrot.lane.b32.xlu0 %v2813, 16
    %v2820 = vpop.permute.xlu0 %2819
    %2821 = vrot.lane.b32.xlu0 %v2814, 16
    %v2822 = vpop.permute.xlu0 %2821
    %2823 = vrot.lane.b32.xlu0 %v2815, 16
    %v2824 = vpop.permute.xlu0 %2823
    %v2825 = vsel %vm125, %v2820, %v2822
    %v2826 = vsel %vm125, %v2822, %v2824
    %v2829 = vadd.f32 %v2807, %v2825
    %v2830 = vadd.f32 %v2808, %v2826
    %2831 = vrot.lane.b32.xlu0 %v2783, 15
    %v2832 = vpop.permute.xlu0 %2831
    %2833 = vrot.lane.b32.xlu0 %v2784, 15
    %v2834 = vpop.permute.xlu0 %2833
    %2835 = vrot.lane.b32.xlu0 %v2785, 15
    %v2836 = vpop.permute.xlu0 %2835
    %v2837 = vsel %vm152, %v2832, %v2834
    %v2838 = vsel %vm152, %v2834, %v2836
    %v2841 = vsel %vm142, %v2837, 0.0
    %v2842 = vsel %vm143, %v2838, 0.0
    %2843 = vset.pattern.permute.xlu0 2
    %2844 = vperm.xlu0 %2843, %v2801
    %v2845 = vpop.permute.xlu0 %2844
    %v2847 = vmul.f32 %v2841, %v2845
    %v2848 = vmul.f32 %v2842, %v2845
    %v2849 = vadd.f32 %v2829, %v2847
    %v2850 = vadd.f32 %v2830, %v2848
    %2851 = vrot.lane.b32.xlu0 %v2783, 1
    %v2852 = vpop.permute.xlu0 %2851
    %2853 = vrot.lane.b32.xlu0 %v2784, 1
    %v2854 = vpop.permute.xlu0 %2853
    %2855 = vrot.lane.b32.xlu0 %v2785, 1
    %v2856 = vpop.permute.xlu0 %2855
    %v2857 = vsel %vm175, %v2852, %v2854
    %v2858 = vsel %vm175, %v2854, %v2856
    %v2861 = vsel %vm95, %v2857, 0.0
    %v2862 = vsel %vm96, %v2858, 0.0
    %2863 = vset.pattern.permute.xlu0 3
    %2864 = vperm.xlu0 %2863, %v2801
    %v2865 = vpop.permute.xlu0 %2864
    %v2867 = vmul.f32 %v2861, %v2865
    %v2868 = vmul.f32 %v2862, %v2865
    %v2869 = vadd.f32 %v2849, %v2867
    %v2870 = vadd.f32 %v2850, %v2868
    %2871 = vset.pattern.permute.xlu0 4
    %2872 = vperm.xlu0 %2871, %v2801
    %v2873 = vpop.permute.xlu0 %2872
    %v2875 = vmul.f32 %v2784, %v2873
    %v2876 = vmul.f32 %v2785, %v2873
    %v2877 = vadd.f32 %v2869, %v2875
    %v2878 = vadd.f32 %v2870, %v2876
    %v2879 = vld [vmem:[#allocation3 + $0x8] sm:$0xff]
    %v2880 = vld [vmem:[#allocation3 + $0x10] sm:$0xff]
    %v2881 = vld [vmem:[#allocation3 + $0x18] sm:$0xff]
    %2885 = vrot.lane.b32.xlu0 %v2879, 127
    %v2886 = vpop.permute.xlu0 %2885
    %2887 = vrot.lane.b32.xlu0 %v2880, 127
    %v2888 = vpop.permute.xlu0 %2887
    %2889 = vrot.lane.b32.xlu0 %v2881, 127
    %v2890 = vpop.permute.xlu0 %2889
    %v2891 = vsel %vm210, %v2886, %v2888
    %v2892 = vsel %vm210, %v2888, %v2890
    %v2895 = vsel %vm142, %v2891, 0.0
    %v2896 = vsel %vm143, %v2892, 0.0
    %2897 = vset.pattern.permute.xlu0 5
    %2898 = vperm.xlu0 %2897, %v2801
    %v2899 = vpop.permute.xlu0 %2898
    %v2901 = vmul.f32 %v2895, %v2899
    %v2902 = vmul.f32 %v2896, %v2899
    %v2903 = vadd.f32 %v2877, %v2901
    %v2904 = vadd.f32 %v2878, %v2902
    %2905 = vrot.lane.b32.xlu0 %v2879, 113
    %v2906 = vpop.permute.xlu0 %2905
    %2907 = vrot.lane.b32.xlu0 %v2880, 113
    %v2908 = vpop.permute.xlu0 %2907
    %2909 = vrot.lane.b32.xlu0 %v2881, 113
    %v2910 = vpop.permute.xlu0 %2909
    %v2911 = vsel %vm237, %v2906, %v2908
    %v2912 = vsel %vm237, %v2908, %v2910
    %v2915 = vsel %vm95, %v2911, 0.0
    %v2916 = vsel %vm96, %v2912, 0.0
    %2917 = vset.pattern.permute.xlu0 6
    %2918 = vperm.xlu0 %2917, %v2801
    %v2919 = vpop.permute.xlu0 %2918
    %v2921 = vmul.f32 %v2915, %v2919
    %v2922 = vmul.f32 %v2916, %v2919
    %v2923 = vadd.f32 %v2903, %v2921
    %v2924 = vadd.f32 %v2904, %v2922
    %2925 = vset.pattern.permute.xlu0 7
    %2926 = vperm.xlu0 %2925, %v2801
    %v2927 = vpop.permute.xlu0 %2926
    %v2929 = vmul.f32 %v2879, %v2927
    %v2930 = vmul.f32 %v2880, %v2927
    %v2931 = vmul.f32 %v2881, %v2927
    %2935 = vrot.lane.b32.xlu0 %v2929, 112
    %v2936 = vpop.permute.xlu0 %2935
    %2937 = vrot.lane.b32.xlu0 %v2930, 112
    %v2938 = vpop.permute.xlu0 %2937
    %2939 = vrot.lane.b32.xlu0 %v2931, 112
    %v2940 = vpop.permute.xlu0 %2939
    %v2941 = vsel %vm260, %v2936, %v2938
    %v2942 = vsel %vm260, %v2938, %v2940
    %v2945 = vadd.f32 %v2923, %v2941
    %v2946 = vadd.f32 %v2924, %v2942
    %2947 = vrot.lane.b32.xlu0 %v2879, 111
    %v2948 = vpop.permute.xlu0 %2947
    %2949 = vrot.lane.b32.xlu0 %v2880, 111
    %v2950 = vpop.permute.xlu0 %2949
    %2951 = vrot.lane.b32.xlu0 %v2881, 111
    %v2952 = vpop.permute.xlu0 %2951
    %v2953 = vsel %vm285, %v2948, %v2950
    %v2954 = vsel %vm285, %v2950, %v2952
    %v2957 = vsel %vm142, %v2953, 0.0
    %v2958 = vsel %vm143, %v2954, 0.0
    %2959 = vset.pattern.permute.xlu0 8
    %2960 = vperm.xlu0 %2959, %v2801
    %v2961 = vpop.permute.xlu0 %2960
    %v2963 = vmul.f32 %v2957, %v2961
    %v2964 = vmul.f32 %v2958, %v2961
    %v2965 = vadd.f32 %v2945, %v2963
    %v2966 = vadd.f32 %v2946, %v2964
    %v2967 = vld [vmem:[%s7] sm:$0xff]
    %v2969 = vsel %vm306, %v2967, 0
    %2971 = vmatprep.subr.mxu0 %v2966
    %2972 = vmatpush1.msra.mxu0 %v2965
    %2973 = vmatprep.subr.mxu0 0.0
    %2974 = vmatpush1.msra.mxu0 0.0
    %2975 = vmatprep.subr.mxu0 0.0
    %2976 = vmatpush1.msra.mxu0 0.0
    %2977 = vmatprep.subr.mxu0 0.0
    %2978 = vmatpush1.msra.mxu0 0.0
    %2979 = vmatprep.subr.mxu0 0.0
    %2980 = vmatpush1.msra.mxu0 0.0
    %2981 = vmatprep.subr.mxu0 0.0
    %2982 = vmatpush1.msra.mxu0 0.0
    %2983 = vmatprep.subr.mxu0 0.0
    %2984 = vmatpush1.msra.mxu0 0.0
    %2985 = vmatprep.subr.mxu0 0.0
    %2986 = vmatpush1.msra.mxu0 0.0
    %2987 = vmatprep.subr.mxu0 0.0
    %2988 = vmatpush1.msra.mxu0 0.0
    %2989 = vmatprep.subr.mxu0 0.0
    %2990 = vmatpush1.msra.mxu0 0.0
    %2991 = vmatprep.subr.mxu0 0.0
    %2992 = vmatpush1.msra.mxu0 0.0
    %2993 = vmatprep.subr.mxu0 0.0
    %2994 = vmatpush1.msra.mxu0 0.0
    %2995 = vmatprep.subr.mxu0 0.0
    %2996 = vmatpush1.msra.mxu0 0.0
    %2997 = vmatprep.subr.mxu0 0.0
    %2998 = vmatpush1.msra.mxu0 0.0
    %2999 = vmatprep.subr.mxu0 0.0
    %3000 = vmatpush1.msra.mxu0 0.0
    %3001 = vmatprep.subr.mxu0 0.0
    %3002 = vmatpush1.msra.mxu0 0.0
    %3003 = vmatprep.subr.mxu0 0.0
    %3004 = vmatpush1.msra.mxu0 0.0
    %3005 = vmatprep.subr.mxu0 0.0
    %3006 = vmatpush1.msra.mxu0 0.0
    %3007 = vmatprep.subr.mxu0 0.0
    %3008 = vmatpush1.msra.mxu0 0.0
    %3009 = vmatprep.subr.mxu0 0.0
    %3010 = vmatpush1.msra.mxu0 0.0
    %3011 = vmatprep.subr.mxu0 0.0
    %3012 = vmatpush1.msra.mxu0 0.0
    %3013 = vmatprep.subr.mxu0 0.0
    %3014 = vmatpush1.msra.mxu0 0.0
    %3015 = vmatprep.subr.mxu0 0.0
    %3016 = vmatpush1.msra.mxu0 0.0
    %3017 = vmatprep.subr.mxu0 0.0
    %3018 = vmatpush1.msra.mxu0 0.0
    %3019 = vmatprep.subr.mxu0 0.0
    %3020 = vmatpush1.msra.mxu0 0.0
    %3021 = vmatprep.subr.mxu0 0.0
    %3022 = vmatpush1.msra.mxu0 0.0
    %3023 = vmatprep.subr.mxu0 0.0
    %3024 = vmatpush1.msra.mxu0 0.0
    %3025 = vmatprep.subr.mxu0 0.0
    %3026 = vmatpush1.msra.mxu0 0.0
    %3027 = vmatprep.subr.mxu0 0.0
    %3028 = vmatpush1.msra.mxu0 0.0
    %3029 = vmatprep.subr.mxu0 0.0
    %3030 = vmatpush1.msra.mxu0 0.0
    %3031 = vmatprep.subr.mxu0 0.0
    %3032 = vmatpush1.msra.mxu0 0.0
    %3033 = vmatprep.subr.mxu0 0.0
    %3034 = vmatpush1.msra.mxu0 0.0
    %3035 = vmatprep.mubr.f32.mxu0 0.0
    %3036 = vmatmul.mubr.f32.gmra.mrb[0].mxu0 %v2969
    %v3037 = vpop.f32.mrb[0].mxu0
    %v3038 = vadd.f32 0.0, %v3037
    %v3039 = vpop.f32.mrb[0].mxu0
    %v3040 = vadd.f32 0.0, %v3039
    %3041 = vdwg.mxu0
    %3042 = vmatprep.subr.mxu0 %v3040
    %3043 = vmatpush1.msra.mxu0 %v3038
    %3044 = vmatprep.subr.mxu0 0.0
    %3045 = vmatpush1.msra.mxu0 0.0
    %3046 = vmatprep.subr.mxu0 0.0
    %3047 = vmatpush1.msra.mxu0 0.0
    %3048 = vmatprep.subr.mxu0 0.0
    %3049 = vmatpush1.msra.mxu0 0.0
    %3050 = vmatprep.subr.mxu0 0.0
    %3051 = vmatpush1.msra.mxu0 0.0
    %3052 = vmatprep.subr.mxu0 0.0
    %3053 = vmatpush1.msra.mxu0 0.0
    %3054 = vmatprep.subr.mxu0 0.0
    %3055 = vmatpush1.msra.mxu0 0.0
    %3056 = vmatprep.subr.mxu0 0.0
    %3057 = vmatpush1.msra.mxu0 0.0
    %3058 = vmatprep.subr.mxu0 0.0
    %3059 = vmatpush1.msra.mxu0 0.0
    %3060 = vmatprep.subr.mxu0 0.0
    %3061 = vmatpush1.msra.mxu0 0.0
    %3062 = vmatprep.subr.mxu0 0.0
    %3063 = vmatpush1.msra.mxu0 0.0
    %3064 = vmatprep.subr.mxu0 0.0
    %3065 = vmatpush1.msra.mxu0 0.0
    %3066 = vmatprep.subr.mxu0 0.0
    %3067 = vmatpush1.msra.mxu0 0.0
    %3068 = vmatprep.subr.mxu0 0.0
    %3069 = vmatpush1.msra.mxu0 0.0
    %3070 = vmatprep.subr.mxu0 0.0
    %3071 = vmatpush1.msra.mxu0 0.0
    %3072 = vmatprep.subr.mxu0 0.0
    %3073 = vmatpush1.msra.mxu0 0.0
    %3074 = vmatprep.subr.mxu0 0.0
    %3075 = vmatpush1.msra.mxu0 0.0
    %3076 = vmatprep.subr.mxu0 0.0
    %3077 = vmatpush1.msra.mxu0 0.0
    %3078 = vmatprep.subr.mxu0 0.0
    %3079 = vmatpush1.msra.mxu0 0.0
    %3080 = vmatprep.subr.mxu0 0.0
    %3081 = vmatpush1.msra.mxu0 0.0
    %3082 = vmatprep.subr.mxu0 0.0
    %3083 = vmatpush1.msra.mxu0 0.0
    %3084 = vmatprep.subr.mxu0 0.0
    %3085 = vmatpush1.msra.mxu0 0.0
    %3086 = vmatprep.subr.mxu0 0.0
    %3087 = vmatpush1.msra.mxu0 0.0
    %3088 = vmatprep.subr.mxu0 0.0
    %3089 = vmatpush1.msra.mxu0 0.0
    %3090 = vmatprep.subr.mxu0 0.0
    %3091 = vmatpush1.msra.mxu0 0.0
    %3092 = vmatprep.subr.mxu0 0.0
    %3093 = vmatpush1.msra.mxu0 0.0
    %3094 = vmatprep.subr.mxu0 0.0
    %3095 = vmatpush1.msra.mxu0 0.0
    %3096 = vmatprep.subr.mxu0 0.0
    %3097 = vmatpush1.msra.mxu0 0.0
    %3098 = vmatprep.subr.mxu0 0.0
    %3099 = vmatpush1.msra.mxu0 0.0
    %3100 = vmatprep.subr.mxu0 0.0
    %3101 = vmatpush1.msra.mxu0 0.0
    %3102 = vmatprep.subr.mxu0 0.0
    %3103 = vmatpush1.msra.mxu0 0.0
    %3104 = vmatprep.subr.mxu0 0.0
    %3105 = vmatpush1.msra.mxu0 0.0
    %3106 = vmatprep.mubr.f32.mxu0 0.0
    %3107 = vmatmul.mubr.f32.gmra.mrb[0].mxu0 %v308
    %v3108 = vpop.f32.mrb[0].mxu0
    %v3109 = vadd.f32 0.0, %v3108
    %v3110 = vpop.f32.mrb[0].mxu0
    %v3111 = vadd.f32 0.0, %v3110
    %3112 = vdwg.mxu0
    %v3113 = vmul.f32 %v3038, %v3038
    %v3114 = vmul.f32 %v3040, %v3040
    %3115 = vmatprep.subr.mxu0 %v3114
    %3116 = vmatpush1.msra.mxu0 %v3113
    %3117 = vmatprep.subr.mxu0 0.0
    %3118 = vmatpush1.msra.mxu0 0.0
    %3119 = vmatprep.subr.mxu0 0.0
    %3120 = vmatpush1.msra.mxu0 0.0
    %3121 = vmatprep.subr.mxu0 0.0
    %3122 = vmatpush1.msra.mxu0 0.0
    %3123 = vmatprep.subr.mxu0 0.0
    %3124 = vmatpush1.msra.mxu0 0.0
    %3125 = vmatprep.subr.mxu0 0.0
    %3126 = vmatpush1.msra.mxu0 0.0
    %3127 = vmatprep.subr.mxu0 0.0
    %3128 = vmatpush1.msra.mxu0 0.0
    %3129 = vmatprep.subr.mxu0 0.0
    %3130 = vmatpush1.msra.mxu0 0.0
    %3131 = vmatprep.subr.mxu0 0.0
    %3132 = vmatpush1.msra.mxu0 0.0
    %3133 = vmatprep.subr.mxu0 0.0
    %3134 = vmatpush1.msra.mxu0 0.0
    %3135 = vmatprep.subr.mxu0 0.0
    %3136 = vmatpush1.msra.mxu0 0.0
    %3137 = vmatprep.subr.mxu0 0.0
    %3138 = vmatpush1.msra.mxu0 0.0
    %3139 = vmatprep.subr.mxu0 0.0
    %3140 = vmatpush1.msra.mxu0 0.0
    %3141 = vmatprep.subr.mxu0 0.0
    %3142 = vmatpush1.msra.mxu0 0.0
    %3143 = vmatprep.subr.mxu0 0.0
    %3144 = vmatpush1.msra.mxu0 0.0
    %3145 = vmatprep.subr.mxu0 0.0
    %3146 = vmatpush1.msra.mxu0 0.0
    %3147 = vmatprep.subr.mxu0 0.0
    %3148 = vmatpush1.msra.mxu0 0.0
    %3149 = vmatprep.subr.mxu0 0.0
    %3150 = vmatpush1.msra.mxu0 0.0
    %3151 = vmatprep.subr.mxu0 0.0
    %3152 = vmatpush1.msra.mxu0 0.0
    %3153 = vmatprep.subr.mxu0 0.0
    %3154 = vmatpush1.msra.mxu0 0.0
    %3155 = vmatprep.subr.mxu0 0.0
    %3156 = vmatpush1.msra.mxu0 0.0
    %3157 = vmatprep.subr.mxu0 0.0
    %3158 = vmatpush1.msra.mxu0 0.0
    %3159 = vmatprep.subr.mxu0 0.0
    %3160 = vmatpush1.msra.mxu0 0.0
    %3161 = vmatprep.subr.mxu0 0.0
    %3162 = vmatpush1.msra.mxu0 0.0
    %3163 = vmatprep.subr.mxu0 0.0
    %3164 = vmatpush1.msra.mxu0 0.0
    %3165 = vmatprep.subr.mxu0 0.0
    %3166 = vmatpush1.msra.mxu0 0.0
    %3167 = vmatprep.subr.mxu0 0.0
    %3168 = vmatpush1.msra.mxu0 0.0
    %3169 = vmatprep.subr.mxu0 0.0
    %3170 = vmatpush1.msra.mxu0 0.0
    %3171 = vmatprep.subr.mxu0 0.0
    %3172 = vmatpush1.msra.mxu0 0.0
    %3173 = vmatprep.subr.mxu0 0.0
    %3174 = vmatpush1.msra.mxu0 0.0
    %3175 = vmatprep.subr.mxu0 0.0
    %3176 = vmatpush1.msra.mxu0 0.0
    %3177 = vmatprep.subr.mxu0 0.0
    %3178 = vmatpush1.msra.mxu0 0.0
    %3179 = vmatprep.mubr.f32.mxu0 0.0
    %3180 = vmatmul.mubr.f32.gmra.mrb[0].mxu0 %v308
    %v3181 = vpop.f32.mrb[0].mxu0
    %v3182 = vadd.f32 0.0, %v3181
    %v3183 = vpop.f32.mrb[0].mxu0
    %v3184 = vadd.f32 0.0, %v3183
    %3185 = vdwg.mxu0
    %v3186 = vadd.f32 %v3109, %v3111
    %3187 = vadd.xlane.f32.xlu0 %v3186
    %v3188 = vpop.xlane.xlu0 %3187
    %v3189 = vmul.f32 %v3188, 0.001953125
    %v3190 = vadd.f32 %v3182, %v3184
    %3191 = vadd.xlane.f32.xlu0 %v3190
    %v3192 = vpop.xlane.xlu0 %3191
    %v3193 = vmul.f32 %v3192, 0.001953125
    %v3194 = vmul.f32 %v3189, %v3189
    %v3195 = vsub.f32 %v3193, %v3194
    %v3196 = vsub.f32 %v3038, %v3189
    %v3197 = vsub.f32 %v3040, %v3189
    %v3198 = vadd.f32 %v3195, 1e-05
    %v3199 = vrsqrt.pop %v3198
    %v3200 = vmul.f32 %v3196, %v3199
    %v3201 = vmul.f32 %v3197, %v3199
    %v3202 = vstv %s2782
    %v3203 = vmul.f32 %v3202, %v3200
    %v3204 = vmul.f32 %v3202, %v3201
    %v3205 = vadd.f32 %v1766, %v3203
    %v3206 = vadd.f32 %v1767, %v3204
    %s3207 = sld [smem:[#allocation5 + $0x4]]
    %v3208 = vld [vmem:[#allocation4] sm:$0xff]
    %v3209 = vld [vmem:[#allocation4 + $0x8] sm:$0xff]
    %v3210 = vld [vmem:[#allocation4 + $0x10] sm:$0xff]
    %3214 = vrot.lane.b32.xlu0 %v3208, 34
    %v3215 = vpop.permute.xlu0 %3214
    %3216 = vrot.lane.b32.xlu0 %v3209, 34
    %v3217 = vpop.permute.xlu0 %3216
    %3218 = vrot.lane.b32.xlu0 %v3210, 34
    %v3219 = vpop.permute.xlu0 %3218
    %v3220 = vsel %vm668, %v3215, %v3217
    %v3221 = vsel %vm668, %v3217, %v3219
    %v3224 = vsel %vm652, %v3220, 0.0
    %v3225 = vsel %vm653, %v3221, 0.0
    %v3226 = vld [vmem:[%s10] sm:$0xff]
    %3228 = vset.pattern.permute.xlu0 0
    %3229 = vperm.xlu0 %3228, %v3226
    %v3230 = vpop.permute.xlu0 %3229
    %v3232 = vmul.f32 %v3224, %v3230
    %v3233 = vmul.f32 %v3225, %v3230
    %3234 = vrot.lane.b32.xlu0 %v3208, 33
    %v3235 = vpop.permute.xlu0 %3234
    %3236 = vrot.lane.b32.xlu0 %v3209, 33
    %v3237 = vpop.permute.xlu0 %3236
    %3238 = vrot.lane.b32.xlu0 %v3210, 33
    %v3239 = vpop.permute.xlu0 %3238
    %v3240 = vsel %vm2189, %v3235, %v3237
    %v3241 = vsel %vm2189, %v3237, %v3239
    %v3244 = vsel %vm95, %v3240, 0.0
    %v3245 = vsel %vm96, %v3241, 0.0
    %3246 = vset.pattern.permute.xlu0 1
    %3247 = vperm.xlu0 %3246, %v3226
    %v3248 = vpop.permute.xlu0 %3247
    %v3250 = vmul.f32 %v3244, %v3248
    %v3251 = vmul.f32 %v3245, %v3248
    %v3252 = vadd.f32 %v3232, %v3250
    %v3253 = vadd.f32 %v3233, %v3251
    %3254 = vset.pattern.permute.xlu0 2
    %3255 = vperm.xlu0 %3254, %v3226
    %v3256 = vpop.permute.xlu0 %3255
    %v3258 = vmul.f32 %v3208, %v3256
    %v3259 = vmul.f32 %v3209, %v3256
    %v3260 = vmul.f32 %v3210, %v3256
    %3264 = vrot.lane.b32.xlu0 %v3258, 32
    %v3265 = vpop.permute.xlu0 %3264
    %3266 = vrot.lane.b32.xlu0 %v3259, 32
    %v3267 = vpop.permute.xlu0 %3266
    %3268 = vrot.lane.b32.xlu0 %v3260, 32
    %v3269 = vpop.permute.xlu0 %3268
    %v3270 = vsel %vm699, %v3265, %v3267
    %v3271 = vsel %vm699, %v3267, %v3269
    %v3274 = vadd.f32 %v3252, %v3270
    %v3275 = vadd.f32 %v3253, %v3271
    %3276 = vrot.lane.b32.xlu0 %v3208, 31
    %v3277 = vpop.permute.xlu0 %3276
    %3278 = vrot.lane.b32.xlu0 %v3209, 31
    %v3279 = vpop.permute.xlu0 %3278
    %3280 = vrot.lane.b32.xlu0 %v3210, 31
    %v3281 = vpop.permute.xlu0 %3280
    %v3282 = vsel %vm2232, %v3277, %v3279
    %v3283 = vsel %vm2232, %v3279, %v3281
    %v3286 = vsel %vm142, %v3282, 0.0
    %v3287 = vsel %vm143, %v3283, 0.0
    %3288 = vset.pattern.permute.xlu0 3
    %3289 = vperm.xlu0 %3288, %v3226
    %v3290 = vpop.permute.xlu0 %3289
    %v3292 = vmul.f32 %v3286, %v3290
    %v3293 = vmul.f32 %v3287, %v3290
    %v3294 = vadd.f32 %v3274, %v3292
    %v3295 = vadd.f32 %v3275, %v3293
    %3296 = vrot.lane.b32.xlu0 %v3208, 30
    %v3297 = vpop.permute.xlu0 %3296
    %3298 = vrot.lane.b32.xlu0 %v3209, 30
    %v3299 = vpop.permute.xlu0 %3298
    %3300 = vrot.lane.b32.xlu0 %v3210, 30
    %v3301 = vpop.permute.xlu0 %3300
    %v3302 = vsel %vm712, %v3297, %v3299
    %v3303 = vsel %vm712, %v3299, %v3301
    %v3306 = vsel %vm654, %v3302, 0.0
    %v3307 = vsel %vm655, %v3303, 0.0
    %3308 = vset.pattern.permute.xlu0 4
    %3309 = vperm.xlu0 %3308, %v3226
    %v3310 = vpop.permute.xlu0 %3309
    %v3312 = vmul.f32 %v3306, %v3310
    %v3313 = vmul.f32 %v3307, %v3310
    %v3314 = vadd.f32 %v3294, %v3312
    %v3315 = vadd.f32 %v3295, %v3313
    %3316 = vrot.lane.b32.xlu0 %v3208, 18
    %v3317 = vpop.permute.xlu0 %3316
    %3318 = vrot.lane.b32.xlu0 %v3209, 18
    %v3319 = vpop.permute.xlu0 %3318
    %3320 = vrot.lane.b32.xlu0 %v3210, 18
    %v3321 = vpop.permute.xlu0 %3320
    %v3322 = vsel %vm2261, %v3317, %v3319
    %v3323 = vsel %vm2261, %v3319, %v3321
    %v3326 = vsel %vm652, %v3322, 0.0
    %v3327 = vsel %vm653, %v3323, 0.0
    %3328 = vset.pattern.permute.xlu0 5
    %3329 = vperm.xlu0 %3328, %v3226
    %v3330 = vpop.permute.xlu0 %3329
    %v3332 = vmul.f32 %v3326, %v3330
    %v3333 = vmul.f32 %v3327, %v3330
    %v3334 = vadd.f32 %v3314, %v3332
    %v3335 = vadd.f32 %v3315, %v3333
    %3336 = vrot.lane.b32.xlu0 %v3208, 17
    %v3337 = vpop.permute.xlu0 %3336
    %3338 = vrot.lane.b32.xlu0 %v3209, 17
    %v3339 = vpop.permute.xlu0 %3338
    %3340 = vrot.lane.b32.xlu0 %v3210, 17
    %v3341 = vpop.permute.xlu0 %3340
    %v3342 = vsel %vm108, %v3337, %v3339
    %v3343 = vsel %vm108, %v3339, %v3341
    %v3346 = vsel %vm95, %v3342, 0.0
    %v3347 = vsel %vm96, %v3343, 0.0
    %3348 = vset.pattern.permute.xlu0 6
    %3349 = vperm.xlu0 %3348, %v3226
    %v3350 = vpop.permute.xlu0 %3349
    %v3352 = vmul.f32 %v3346, %v3350
    %v3353 = vmul.f32 %v3347, %v3350
    %v3354 = vadd.f32 %v3334, %v3352
    %v3355 = vadd.f32 %v3335, %v3353
    %3356 = vset.pattern.permute.xlu0 7
    %3357 = vperm.xlu0 %3356, %v3226
    %v3358 = vpop.permute.xlu0 %3357
    %v3360 = vmul.f32 %v3208, %v3358
    %v3361 = vmul.f32 %v3209, %v3358
    %v3362 = vmul.f32 %v3210, %v3358
    %3366 = vrot.lane.b32.xlu0 %v3360, 16
    %v3367 = vpop.permute.xlu0 %3366
    %3368 = vrot.lane.b32.xlu0 %v3361, 16
    %v3369 = vpop.permute.xlu0 %3368
    %3370 = vrot.lane.b32.xlu0 %v3362, 16
    %v3371 = vpop.permute.xlu0 %3370
    %v3372 = vsel %vm125, %v3367, %v3369
    %v3373 = vsel %vm125, %v3369, %v3371
    %v3376 = vadd.f32 %v3354, %v3372
    %v3377 = vadd.f32 %v3355, %v3373
    %3378 = vrot.lane.b32.xlu0 %v3208, 15
    %v3379 = vpop.permute.xlu0 %3378
    %3380 = vrot.lane.b32.xlu0 %v3209, 15
    %v3381 = vpop.permute.xlu0 %3380
    %3382 = vrot.lane.b32.xlu0 %v3210, 15
    %v3383 = vpop.permute.xlu0 %3382
    %v3384 = vsel %vm152, %v3379, %v3381
    %v3385 = vsel %vm152, %v3381, %v3383
    %v3388 = vsel %vm142, %v3384, 0.0
    %v3389 = vsel %vm143, %v3385, 0.0
    %3390 = vset.pattern.permute.xlu0 8
    %3391 = vperm.xlu0 %3390, %v3226
    %v3392 = vpop.permute.xlu0 %3391
    %v3394 = vmul.f32 %v3388, %v3392
    %v3395 = vmul.f32 %v3389, %v3392
    %v3396 = vadd.f32 %v3376, %v3394
    %v3397 = vadd.f32 %v3377, %v3395
    %3398 = vrot.lane.b32.xlu0 %v3208, 14
    %v3399 = vpop.permute.xlu0 %3398
    %3400 = vrot.lane.b32.xlu0 %v3209, 14
    %v3401 = vpop.permute.xlu0 %3400
    %3402 = vrot.lane.b32.xlu0 %v3210, 14
    %v3403 = vpop.permute.xlu0 %3402
    %v3404 = vsel %vm2320, %v3399, %v3401
    %v3405 = vsel %vm2320, %v3401, %v3403
    %v3408 = vsel %vm654, %v3404, 0.0
    %v3409 = vsel %vm655, %v3405, 0.0
    %3410 = vset.pattern.permute.xlu0 9
    %3411 = vperm.xlu0 %3410, %v3226
    %v3412 = vpop.permute.xlu0 %3411
    %v3414 = vmul.f32 %v3408, %v3412
    %v3415 = vmul.f32 %v3409, %v3412
    %v3416 = vadd.f32 %v3396, %v3414
    %v3417 = vadd.f32 %v3397, %v3415
    %3418 = vrot.lane.b32.xlu0 %v3208, 2
    %v3419 = vpop.permute.xlu0 %3418
    %3420 = vrot.lane.b32.xlu0 %v3209, 2
    %v3421 = vpop.permute.xlu0 %3420
    %3422 = vrot.lane.b32.xlu0 %v3210, 2
    %v3423 = vpop.permute.xlu0 %3422
    %v3424 = vsel %vm733, %v3419, %v3421
    %v3425 = vsel %vm733, %v3421, %v3423
    %v3428 = vsel %vm652, %v3424, 0.0
    %v3429 = vsel %vm653, %v3425, 0.0
    %3430 = vset.pattern.permute.xlu0 10
    %3431 = vperm.xlu0 %3430, %v3226
    %v3432 = vpop.permute.xlu0 %3431
    %v3434 = vmul.f32 %v3428, %v3432
    %v3435 = vmul.f32 %v3429, %v3432
    %v3436 = vadd.f32 %v3416, %v3434
    %v3437 = vadd.f32 %v3417, %v3435
    %3438 = vrot.lane.b32.xlu0 %v3208, 1
    %v3439 = vpop.permute.xlu0 %3438
    %3440 = vrot.lane.b32.xlu0 %v3209, 1
    %v3441 = vpop.permute.xlu0 %3440
    %3442 = vrot.lane.b32.xlu0 %v3210, 1
    %v3443 = vpop.permute.xlu0 %3442
    %v3444 = vsel %vm175, %v3439, %v3441
    %v3445 = vsel %vm175, %v3441, %v3443
    %v3448 = vsel %vm95, %v3444, 0.0
    %v3449 = vsel %vm96, %v3445, 0.0
    %3450 = vset.pattern.permute.xlu0 11
    %3451 = vperm.xlu0 %3450, %v3226
    %v3452 = vpop.permute.xlu0 %3451
    %v3454 = vmul.f32 %v3448, %v3452
    %v3455 = vmul.f32 %v3449, %v3452
    %v3456 = vadd.f32 %v3436, %v3454
    %v3457 = vadd.f32 %v3437, %v3455
    %3458 = vset.pattern.permute.xlu0 12
    %3459 = vperm.xlu0 %3458, %v3226
    %v3460 = vpop.permute.xlu0 %3459
    %v3462 = vmul.f32 %v3209, %v3460
    %v3463 = vmul.f32 %v3210, %v3460
    %v3464 = vadd.f32 %v3456, %v3462
    %v3465 = vadd.f32 %v3457, %v3463
    %v3466 = vld [vmem:[#allocation4 + $0x8] sm:$0xff]
    %v3467 = vld [vmem:[#allocation4 + $0x10] sm:$0xff]
    %v3468 = vld [vmem:[#allocation4 + $0x18] sm:$0xff]
    %3472 = vrot.lane.b32.xlu0 %v3466, 127
    %v3473 = vpop.permute.xlu0 %3472
    %3474 = vrot.lane.b32.xlu0 %v3467, 127
    %v3475 = vpop.permute.xlu0 %3474
    %3476 = vrot.lane.b32.xlu0 %v3468, 127
    %v3477 = vpop.permute.xlu0 %3476
    %v3478 = vsel %vm210, %v3473, %v3475
    %v3479 = vsel %vm210, %v3475, %v3477
    %v3482 = vsel %vm142, %v3478, 0.0
    %v3483 = vsel %vm143, %v3479, 0.0
    %3484 = vset.pattern.permute.xlu0 13
    %3485 = vperm.xlu0 %3484, %v3226
    %v3486 = vpop.permute.xlu0 %3485
    %v3488 = vmul.f32 %v3482, %v3486
    %v3489 = vmul.f32 %v3483, %v3486
    %v3490 = vadd.f32 %v3464, %v3488
    %v3491 = vadd.f32 %v3465, %v3489
    %3492 = vrot.lane.b32.xlu0 %v3466, 126
    %v3493 = vpop.permute.xlu0 %3492
    %3494 = vrot.lane.b32.xlu0 %v3467, 126
    %v3495 = vpop.permute.xlu0 %3494
    %3496 = vrot.lane.b32.xlu0 %v3468, 126
    %v3497 = vpop.permute.xlu0 %3496
    %v3498 = vsel %vm768, %v3493, %v3495
    %v3499 = vsel %vm768, %v3495, %v3497
    %v3502 = vsel %vm654, %v3498, 0.0
    %v3503 = vsel %vm655, %v3499, 0.0
    %3504 = vset.pattern.permute.xlu0 14
    %3505 = vperm.xlu0 %3504, %v3226
    %v3506 = vpop.permute.xlu0 %3505
    %v3508 = vmul.f32 %v3502, %v3506
    %v3509 = vmul.f32 %v3503, %v3506
    %v3510 = vadd.f32 %v3490, %v3508
    %v3511 = vadd.f32 %v3491, %v3509
    %3512 = vrot.lane.b32.xlu0 %v3466, 114
    %v3513 = vpop.permute.xlu0 %3512
    %3514 = vrot.lane.b32.xlu0 %v3467, 114
    %v3515 = vpop.permute.xlu0 %3514
    %3516 = vrot.lane.b32.xlu0 %v3468, 114
    %v3517 = vpop.permute.xlu0 %3516
    %v3518 = vsel %vm2381, %v3513, %v3515
    %v3519 = vsel %vm2381, %v3515, %v3517
    %v3522 = vsel %vm652, %v3518, 0.0
    %v3523 = vsel %vm653, %v3519, 0.0
    %3524 = vset.pattern.permute.xlu0 15
    %3525 = vperm.xlu0 %3524, %v3226
    %v3526 = vpop.permute.xlu0 %3525
    %v3528 = vmul.f32 %v3522, %v3526
    %v3529 = vmul.f32 %v3523, %v3526
    %v3530 = vadd.f32 %v3510, %v3528
    %v3531 = vadd.f32 %v3511, %v3529
    %3532 = vrot.lane.b32.xlu0 %v3466, 113
    %v3533 = vpop.permute.xlu0 %3532
    %3534 = vrot.lane.b32.xlu0 %v3467, 113
    %v3535 = vpop.permute.xlu0 %3534
    %3536 = vrot.lane.b32.xlu0 %v3468, 113
    %v3537 = vpop.permute.xlu0 %3536
    %v3538 = vsel %vm237, %v3533, %v3535
    %v3539 = vsel %vm237, %v3535, %v3537
    %v3542 = vsel %vm95, %v3538, 0.0
    %v3543 = vsel %vm96, %v3539, 0.0
    %3544 = vset.pattern.permute.xlu0 16
    %3545 = vperm.xlu0 %3544, %v3226
    %v3546 = vpop.permute.xlu0 %3545
    %v3548 = vmul.f32 %v3542, %v3546
    %v3549 = vmul.f32 %v3543, %v3546
    %v3550 = vadd.f32 %v3530, %v3548
    %v3551 = vadd.f32 %v3531, %v3549
    %3552 = vset.pattern.permute.xlu0 17
    %3553 = vperm.xlu0 %3552, %v3226
    %v3554 = vpop.permute.xlu0 %3553
    %v3556 = vmul.f32 %v3466, %v3554
    %v3557 = vmul.f32 %v3467, %v3554
    %v3558 = vmul.f32 %v3468, %v3554
    %3562 = vrot.lane.b32.xlu0 %v3556, 112
    %v3563 = vpop.permute.xlu0 %3562
    %3564 = vrot.lane.b32.xlu0 %v3557, 112
    %v3565 = vpop.permute.xlu0 %3564
    %3566 = vrot.lane.b32.xlu0 %v3558, 112
    %v3567 = vpop.permute.xlu0 %3566
    %v3568 = vsel %vm260, %v3563, %v3565
    %v3569 = vsel %vm260, %v3565, %v3567
    %v3572 = vadd.f32 %v3550, %v3568
    %v3573 = vadd.f32 %v3551, %v3569
    %3574 = vrot.lane.b32.xlu0 %v3466, 111
    %v3575 = vpop.permute.xlu0 %3574
    %3576 = vrot.lane.b32.xlu0 %v3467, 111
    %v3577 = vpop.permute.xlu0 %3576
    %3578 = vrot.lane.b32.xlu0 %v3468, 111
    %v3579 = vpop.permute.xlu0 %3578
    %v3580 = vsel %vm285, %v3575, %v3577
    %v3581 = vsel %vm285, %v3577, %v3579
    %v3584 = vsel %vm142, %v3580, 0.0
    %v3585 = vsel %vm143, %v3581, 0.0
    %3586 = vset.pattern.permute.xlu0 18
    %3587 = vperm.xlu0 %3586, %v3226
    %v3588 = vpop.permute.xlu0 %3587
    %v3590 = vmul.f32 %v3584, %v3588
    %v3591 = vmul.f32 %v3585, %v3588
    %v3592 = vadd.f32 %v3572, %v3590
    %v3593 = vadd.f32 %v3573, %v3591
    %3594 = vrot.lane.b32.xlu0 %v3466, 110
    %v3595 = vpop.permute.xlu0 %3594
    %3596 = vrot.lane.b32.xlu0 %v3467, 110
    %v3597 = vpop.permute.xlu0 %3596
    %3598 = vrot.lane.b32.xlu0 %v3468, 110
    %v3599 = vpop.permute.xlu0 %3598
    %v3600 = vsel %vm2440, %v3595, %v3597
    %v3601 = vsel %vm2440, %v3597, %v3599
    %v3604 = vsel %vm654, %v3600, 0.0
    %v3605 = vsel %vm655, %v3601, 0.0
    %3606 = vset.pattern.permute.xlu0 19
    %3607 = vperm.xlu0 %3606, %v3226
    %v3608 = vpop.permute.xlu0 %3607
    %v3610 = vmul.f32 %v3604, %v3608
    %v3611 = vmul.f32 %v3605, %v3608
    %v3612 = vadd.f32 %v3592, %v3610
    %v3613 = vadd.f32 %v3593, %v3611
    %3614 = vrot.lane.b32.xlu0 %v3466, 98
    %v3615 = vpop.permute.xlu0 %3614
    %3616 = vrot.lane.b32.xlu0 %v3467, 98
    %v3617 = vpop.permute.xlu0 %3616
    %3618 = vrot.lane.b32.xlu0 %v3468, 98
    %v3619 = vpop.permute.xlu0 %3618
    %v3620 = vsel %vm789, %v3615, %v3617
    %v3621 = vsel %vm789, %v3617, %v3619
    %v3624 = vsel %vm652, %v3620, 0.0
    %v3625 = vsel %vm653, %v3621, 0.0
    %3626 = vset.pattern.permute.xlu0 20
    %3627 = vperm.xlu0 %3626, %v3226
    %v3628 = vpop.permute.xlu0 %3627
    %v3630 = vmul.f32 %v3624, %v3628
    %v3631 = vmul.f32 %v3625, %v3628
    %v3632 = vadd.f32 %v3612, %v3630
    %v3633 = vadd.f32 %v3613, %v3631
    %3634 = vrot.lane.b32.xlu0 %v3466, 97
    %v3635 = vpop.permute.xlu0 %3634
    %3636 = vrot.lane.b32.xlu0 %v3467, 97
    %v3637 = vpop.permute.xlu0 %3636
    %3638 = vrot.lane.b32.xlu0 %v3468, 97
    %v3639 = vpop.permute.xlu0 %3638
    %v3640 = vsel %vm2469, %v3635, %v3637
    %v3641 = vsel %vm2469, %v3637, %v3639
    %v3644 = vsel %vm95, %v3640, 0.0
    %v3645 = vsel %vm96, %v3641, 0.0
    %3646 = vset.pattern.permute.xlu0 21
    %3647 = vperm.xlu0 %3646, %v3226
    %v3648 = vpop.permute.xlu0 %3647
    %v3650 = vmul.f32 %v3644, %v3648
    %v3651 = vmul.f32 %v3645, %v3648
    %v3652 = vadd.f32 %v3632, %v3650
    %v3653 = vadd.f32 %v3633, %v3651
    %3654 = vset.pattern.permute.xlu0 22
    %3655 = vperm.xlu0 %3654, %v3226
    %v3656 = vpop.permute.xlu0 %3655
    %v3658 = vmul.f32 %v3466, %v3656
    %v3659 = vmul.f32 %v3467, %v3656
    %v3660 = vmul.f32 %v3468, %v3656
    %3664 = vrot.lane.b32.xlu0 %v3658, 96
    %v3665 = vpop.permute.xlu0 %3664
    %3666 = vrot.lane.b32.xlu0 %v3659, 96
    %v3667 = vpop.permute.xlu0 %3666
    %3668 = vrot.lane.b32.xlu0 %v3660, 96
    %v3669 = vpop.permute.xlu0 %3668
    %v3670 = vsel %vm820, %v3665, %v3667
    %v3671 = vsel %vm820, %v3667, %v3669
    %v3674 = vadd.f32 %v3652, %v3670
    %v3675 = vadd.f32 %v3653, %v3671
    %3676 = vrot.lane.b32.xlu0 %v3466, 95
    %v3677 = vpop.permute.xlu0 %3676
    %3678 = vrot.lane.b32.xlu0 %v3467, 95
    %v3679 = vpop.permute.xlu0 %3678
    %3680 = vrot.lane.b32.xlu0 %v3468, 95
    %v3681 = vpop.permute.xlu0 %3680
    %v3682 = vsel %vm2512, %v3677, %v3679
    %v3683 = vsel %vm2512, %v3679, %v3681
    %v3686 = vsel %vm142, %v3682, 0.0
    %v3687 = vsel %vm143, %v3683, 0.0
    %3688 = vset.pattern.permute.xlu0 23
    %3689 = vperm.xlu0 %3688, %v3226
    %v3690 = vpop.permute.xlu0 %3689
    %v3692 = vmul.f32 %v3686, %v3690
    %v3693 = vmul.f32 %v3687, %v3690
    %v3694 = vadd.f32 %v3674, %v3692
    %v3695 = vadd.f32 %v3675, %v3693
    %3696 = vrot.lane.b32.xlu0 %v3466, 94
    %v3697 = vpop.permute.xlu0 %3696
    %3698 = vrot.lane.b32.xlu0 %v3467, 94
    %v3699 = vpop.permute.xlu0 %3698
    %3700 = vrot.lane.b32.xlu0 %v3468, 94
    %v3701 = vpop.permute.xlu0 %3700
    %v3702 = vsel %vm833, %v3697, %v3699
    %v3703 = vsel %vm833, %v3699, %v3701
    %v3706 = vsel %vm654, %v3702, 0.0
    %v3707 = vsel %vm655, %v3703, 0.0
    %3708 = vset.pattern.permute.xlu0 24
    %3709 = vperm.xlu0 %3708, %v3226
    %v3710 = vpop.permute.xlu0 %3709
    %v3712 = vmul.f32 %v3706, %v3710
    %v3713 = vmul.f32 %v3707, %v3710
    %v3714 = vadd.f32 %v3694, %v3712
    %v3715 = vadd.f32 %v3695, %v3713
    %v3716 = vld [vmem:[%s11] sm:$0xff]
    %v3718 = vsel %vm306, %v3716, 0
    %3720 = vmatprep.subr.mxu0 %v3715
    %3721 = vmatpush1.msra.mxu0 %v3714
    %3722 = vmatprep.subr.mxu0 0.0
    %3723 = vmatpush1.msra.mxu0 0.0
    %3724 = vmatprep.subr.mxu0 0.0
    %3725 = vmatpush1.msra.mxu0 0.0
    %3726 = vmatprep.subr.mxu0 0.0
    %3727 = vmatpush1.msra.mxu0 0.0
    %3728 = vmatprep.subr.mxu0 0.0
    %3729 = vmatpush1.msra.mxu0 0.0
    %3730 = vmatprep.subr.mxu0 0.0
    %3731 = vmatpush1.msra.mxu0 0.0
    %3732 = vmatprep.subr.mxu0 0.0
    %3733 = vmatpush1.msra.mxu0 0.0
    %3734 = vmatprep.subr.mxu0 0.0
    %3735 = vmatpush1.msra.mxu0 0.0
    %3736 = vmatprep.subr.mxu0 0.0
    %3737 = vmatpush1.msra.mxu0 0.0
    %3738 = vmatprep.subr.mxu0 0.0
    %3739 = vmatpush1.msra.mxu0 0.0
    %3740 = vmatprep.subr.mxu0 0.0
    %3741 = vmatpush1.msra.mxu0 0.0
    %3742 = vmatprep.subr.mxu0 0.0
    %3743 = vmatpush1.msra.mxu0 0.0
    %3744 = vmatprep.subr.mxu0 0.0
    %3745 = vmatpush1.msra.mxu0 0.0
    %3746 = vmatprep.subr.mxu0 0.0
    %3747 = vmatpush1.msra.mxu0 0.0
    %3748 = vmatprep.subr.mxu0 0.0
    %3749 = vmatpush1.msra.mxu0 0.0
    %3750 = vmatprep.subr.mxu0 0.0
    %3751 = vmatpush1.msra.mxu0 0.0
    %3752 = vmatprep.subr.mxu0 0.0
    %3753 = vmatpush1.msra.mxu0 0.0
    %3754 = vmatprep.subr.mxu0 0.0
    %3755 = vmatpush1.msra.mxu0 0.0
    %3756 = vmatprep.subr.mxu0 0.0
    %3757 = vmatpush1.msra.mxu0 0.0
    %3758 = vmatprep.subr.mxu0 0.0
    %3759 = vmatpush1.msra.mxu0 0.0
    %3760 = vmatprep.subr.mxu0 0.0
    %3761 = vmatpush1.msra.mxu0 0.0
    %3762 = vmatprep.subr.mxu0 0.0
    %3763 = vmatpush1.msra.mxu0 0.0
    %3764 = vmatprep.subr.mxu0 0.0
    %3765 = vmatpush1.msra.mxu0 0.0
    %3766 = vmatprep.subr.mxu0 0.0
    %3767 = vmatpush1.msra.mxu0 0.0
    %3768 = vmatprep.subr.mxu0 0.0
    %3769 = vmatpush1.msra.mxu0 0.0
    %3770 = vmatprep.subr.mxu0 0.0
    %3771 = vmatpush1.msra.mxu0 0.0
    %3772 = vmatprep.subr.mxu0 0.0
    %3773 = vmatpush1.msra.mxu0 0.0
    %3774 = vmatprep.subr.mxu0 0.0
    %3775 = vmatpush1.msra.mxu0 0.0
    %3776 = vmatprep.subr.mxu0 0.0
    %3777 = vmatpush1.msra.mxu0 0.0
    %3778 = vmatprep.subr.mxu0 0.0
    %3779 = vmatpush1.msra.mxu0 0.0
    %3780 = vmatprep.subr.mxu0 0.0
    %3781 = vmatpush1.msra.mxu0 0.0
    %3782 = vmatprep.subr.mxu0 0.0
    %3783 = vmatpush1.msra.mxu0 0.0
    %3784 = vmatprep.mubr.f32.mxu0 0.0
    %3785 = vmatmul.mubr.f32.gmra.mrb[0].mxu0 %v3718
    %v3786 = vpop.f32.mrb[0].mxu0
    %v3787 = vadd.f32 0.0, %v3786
    %v3788 = vpop.f32.mrb[0].mxu0
    %v3789 = vadd.f32 0.0, %v3788
    %3790 = vdwg.mxu0
    %3791 = vmatprep.subr.mxu0 %v3789
    %3792 = vmatpush1.msra.mxu0 %v3787
    %3793 = vmatprep.subr.mxu0 0.0
    %3794 = vmatpush1.msra.mxu0 0.0
    %3795 = vmatprep.subr.mxu0 0.0
    %3796 = vmatpush1.msra.mxu0 0.0
    %3797 = vmatprep.subr.mxu0 0.0
    %3798 = vmatpush1.msra.mxu0 0.0
    %3799 = vmatprep.subr.mxu0 0.0
    %3800 = vmatpush1.msra.mxu0 0.0
    %3801 = vmatprep.subr.mxu0 0.0
    %3802 = vmatpush1.msra.mxu0 0.0
    %3803 = vmatprep.subr.mxu0 0.0
    %3804 = vmatpush1.msra.mxu0 0.0
    %3805 = vmatprep.subr.mxu0 0.0
    %3806 = vmatpush1.msra.mxu0 0.0
    %3807 = vmatprep.subr.mxu0 0.0
    %3808 = vmatpush1.msra.mxu0 0.0
    %3809 = vmatprep.subr.mxu0 0.0
    %3810 = vmatpush1.msra.mxu0 0.0
    %3811 = vmatprep.subr.mxu0 0.0
    %3812 = vmatpush1.msra.mxu0 0.0
    %3813 = vmatprep.subr.mxu0 0.0
    %3814 = vmatpush1.msra.mxu0 0.0
    %3815 = vmatprep.subr.mxu0 0.0
    %3816 = vmatpush1.msra.mxu0 0.0
    %3817 = vmatprep.subr.mxu0 0.0
    %3818 = vmatpush1.msra.mxu0 0.0
    %3819 = vmatprep.subr.mxu0 0.0
    %3820 = vmatpush1.msra.mxu0 0.0
    %3821 = vmatprep.subr.mxu0 0.0
    %3822 = vmatpush1.msra.mxu0 0.0
    %3823 = vmatprep.subr.mxu0 0.0
    %3824 = vmatpush1.msra.mxu0 0.0
    %3825 = vmatprep.subr.mxu0 0.0
    %3826 = vmatpush1.msra.mxu0 0.0
    %3827 = vmatprep.subr.mxu0 0.0
    %3828 = vmatpush1.msra.mxu0 0.0
    %3829 = vmatprep.subr.mxu0 0.0
    %3830 = vmatpush1.msra.mxu0 0.0
    %3831 = vmatprep.subr.mxu0 0.0
    %3832 = vmatpush1.msra.mxu0 0.0
    %3833 = vmatprep.subr.mxu0 0.0
    %3834 = vmatpush1.msra.mxu0 0.0
    %3835 = vmatprep.subr.mxu0 0.0
    %3836 = vmatpush1.msra.mxu0 0.0
    %3837 = vmatprep.subr.mxu0 0.0
    %3838 = vmatpush1.msra.mxu0 0.0
    %3839 = vmatprep.subr.mxu0 0.0
    %3840 = vmatpush1.msra.mxu0 0.0
    %3841 = vmatprep.subr.mxu0 0.0
    %3842 = vmatpush1.msra.mxu0 0.0
    %3843 = vmatprep.subr.mxu0 0.0
    %3844 = vmatpush1.msra.mxu0 0.0
    %3845 = vmatprep.subr.mxu0 0.0
    %3846 = vmatpush1.msra.mxu0 0.0
    %3847 = vmatprep.subr.mxu0 0.0
    %3848 = vmatpush1.msra.mxu0 0.0
    %3849 = vmatprep.subr.mxu0 0.0
    %3850 = vmatpush1.msra.mxu0 0.0
    %3851 = vmatprep.subr.mxu0 0.0
    %3852 = vmatpush1.msra.mxu0 0.0
    %3853 = vmatprep.subr.mxu0 0.0
    %3854 = vmatpush1.msra.mxu0 0.0
    %3855 = vmatprep.mubr.f32.mxu0 0.0
    %3856 = vmatmul.mubr.f32.gmra.mrb[0].mxu0 %v308
    %v3857 = vpop.f32.mrb[0].mxu0
    %v3858 = vadd.f32 0.0, %v3857
    %v3859 = vpop.f32.mrb[0].mxu0
    %v3860 = vadd.f32 0.0, %v3859
    %3861 = vdwg.mxu0
    %v3862 = vmul.f32 %v3787, %v3787
    %v3863 = vmul.f32 %v3789, %v3789
    %3864 = vmatprep.subr.mxu0 %v3863
    %3865 = vmatpush1.msra.mxu0 %v3862
    %3866 = vmatprep.subr.mxu0 0.0
    %3867 = vmatpush1.msra.mxu0 0.0
    %3868 = vmatprep.subr.mxu0 0.0
    %3869 = vmatpush1.msra.mxu0 0.0
    %3870 = vmatprep.subr.mxu0 0.0
    %3871 = vmatpush1.msra.mxu0 0.0
    %3872 = vmatprep.subr.mxu0 0.0
    %3873 = vmatpush1.msra.mxu0 0.0
    %3874 = vmatprep.subr.mxu0 0.0
    %3875 = vmatpush1.msra.mxu0 0.0
    %3876 = vmatprep.subr.mxu0 0.0
    %3877 = vmatpush1.msra.mxu0 0.0
    %3878 = vmatprep.subr.mxu0 0.0
    %3879 = vmatpush1.msra.mxu0 0.0
    %3880 = vmatprep.subr.mxu0 0.0
    %3881 = vmatpush1.msra.mxu0 0.0
    %3882 = vmatprep.subr.mxu0 0.0
    %3883 = vmatpush1.msra.mxu0 0.0
    %3884 = vmatprep.subr.mxu0 0.0
    %3885 = vmatpush1.msra.mxu0 0.0
    %3886 = vmatprep.subr.mxu0 0.0
    %3887 = vmatpush1.msra.mxu0 0.0
    %3888 = vmatprep.subr.mxu0 0.0
    %3889 = vmatpush1.msra.mxu0 0.0
    %3890 = vmatprep.subr.mxu0 0.0
    %3891 = vmatpush1.msra.mxu0 0.0
    %3892 = vmatprep.subr.mxu0 0.0
    %3893 = vmatpush1.msra.mxu0 0.0
    %3894 = vmatprep.subr.mxu0 0.0
    %3895 = vmatpush1.msra.mxu0 0.0
    %3896 = vmatprep.subr.mxu0 0.0
    %3897 = vmatpush1.msra.mxu0 0.0
    %3898 = vmatprep.subr.mxu0 0.0
    %3899 = vmatpush1.msra.mxu0 0.0
    %3900 = vmatprep.subr.mxu0 0.0
    %3901 = vmatpush1.msra.mxu0 0.0
    %3902 = vmatprep.subr.mxu0 0.0
    %3903 = vmatpush1.msra.mxu0 0.0
    %3904 = vmatprep.subr.mxu0 0.0
    %3905 = vmatpush1.msra.mxu0 0.0
    %3906 = vmatprep.subr.mxu0 0.0
    %3907 = vmatpush1.msra.mxu0 0.0
    %3908 = vmatprep.subr.mxu0 0.0
    %3909 = vmatpush1.msra.mxu0 0.0
    %3910 = vmatprep.subr.mxu0 0.0
    %3911 = vmatpush1.msra.mxu0 0.0
    %3912 = vmatprep.subr.mxu0 0.0
    %3913 = vmatpush1.msra.mxu0 0.0
    %3914 = vmatprep.subr.mxu0 0.0
    %3915 = vmatpush1.msra.mxu0 0.0
    %3916 = vmatprep.subr.mxu0 0.0
    %3917 = vmatpush1.msra.mxu0 0.0
    %3918 = vmatprep.subr.mxu0 0.0
    %3919 = vmatpush1.msra.mxu0 0.0
    %3920 = vmatprep.subr.mxu0 0.0
    %3921 = vmatpush1.msra.mxu0 0.0
    %3922 = vmatprep.subr.mxu0 0.0
    %3923 = vmatpush1.msra.mxu0 0.0
    %3924 = vmatprep.subr.mxu0 0.0
    %3925 = vmatpush1.msra.mxu0 0.0
    %3926 = vmatprep.subr.mxu0 0.0
    %3927 = vmatpush1.msra.mxu0 0.0
    %3928 = vmatprep.mubr.f32.mxu0 0.0
    %3929 = vmatmul.mubr.f32.gmra.mrb[0].mxu0 %v308
    %v3930 = vpop.f32.mrb[0].mxu0
    %v3931 = vadd.f32 0.0, %v3930
    %v3932 = vpop.f32.mrb[0].mxu0
    %v3933 = vadd.f32 0.0, %v3932
    %3934 = vdwg.mxu0
    %v3935 = vadd.f32 %v3858, %v3860
    %3936 = vadd.xlane.f32.xlu0 %v3935
    %v3937 = vpop.xlane.xlu0 %3936
    %v3938 = vmul.f32 %v3937, 0.001953125
    %v3939 = vadd.f32 %v3931, %v3933
    %3940 = vadd.xlane.f32.xlu0 %v3939
    %v3941 = vpop.xlane.xlu0 %3940
    %v3942 = vmul.f32 %v3941, 0.001953125
    %v3943 = vmul.f32 %v3938, %v3938
    %v3944 = vsub.f32 %v3942, %v3943
    %v3945 = vsub.f32 %v3787, %v3938
    %v3946 = vsub.f32 %v3789, %v3938
    %v3947 = vadd.f32 %v3944, 1e-05
    %v3948 = vrsqrt.pop %v3947
    %v3949 = vmul.f32 %v3945, %v3948
    %v3950 = vmul.f32 %v3946, %v3948
    %v3951 = vstv %s3207
    %v3952 = vmul.f32 %v3951, %v3949
    %v3953 = vmul.f32 %v3951, %v3950
    %v3954 = vadd.f32 %v3205, %v3952
    %v3955 = vadd.f32 %v3206, %v3953
    %3956 = vst [vmem:[%s16] sm:$0xff] %v3954
    %3957 = vst [vmem:[%s16 + $0x8] sm:$0xff] %v3955
    // Predicated region
    $region70: #{mixed_op_forward.1} parent=1 // pred_check
      _
    $region71: #{mixed_op_forward.1} parent=1 // pred_check_branch
      %3959 = sbr.rel (0) target = $region73
    $region72: #{mixed_op_forward.1} parent=1 // pred_region
      _
    $region73: #{mixed_op_forward.1} parent=1 // pred_fallthru
      _
    // Predicated region
    $region74: #{mixed_op_forward.1} parent=1 // pred_check
      _
    $region75: #{mixed_op_forward.1} parent=1 // pred_check_branch
      %3961 = sbr.rel (0) target = $region77
    $region76: #{mixed_op_forward.1} parent=1 // pred_region
      _
    $region77: #{mixed_op_forward.1} parent=1 // pred_fallthru
      _
    %3962 = vsyncpa [#allocation6], 1

</llo_original>
